<compile_context>
chip_gen: v6e
topology: v6e:2x2x1
jax: 0.10.0
libtpu: 0.0.40
codegen_flags: <defaults>
</compile_context>

<pallas_src>
import math
import functools

import jax
import jax.numpy as jnp
from jax.experimental import pallas as pl
from jax.experimental.pallas import tpu as pltpu


MAX_PE_LEN = 100  # matches PositionalEncoding(max_len=100)


def _layernorm(x, gamma, beta, eps=1e-5):
    mu = jnp.mean(x, axis=-1, keepdims=True)
    d = x - mu
    var = jnp.mean(d * d, axis=-1, keepdims=True)
    return d * jax.lax.rsqrt(var + eps) * gamma + beta


# ----------------------------------------------------------------------------
# Fused forward kernel: one grid program == one chunk of Bc batch elements.
# All activations stay VMEM/vreg resident; sequence layout is time-major
# (row index = t*Bc + b).
# ----------------------------------------------------------------------------
def fused_forward_kernel(x_ref, pe_ref, mask_ref, emb_w_ref, emb_b_ref,
                         wih_ref, whh_ref, lstm_b_ref, *rest,
                         num_heads, num_blocks):
    n_blk = num_blocks * 12
    blk_refs = rest[:n_blk]
    out_w_ref, out_b_ref = rest[n_blk], rest[n_blk + 1]
    out_ref = rest[n_blk + 2]
    gates_ref, seq_ref = rest[n_blk + 3], rest[n_blk + 4]

    S, Bc, state_size = x_ref.shape
    H = emb_w_ref.shape[1]
    A = out_w_ref.shape[1]
    hd = H // num_heads
    R = S * Bc                                   # total rows in this chunk
    scale = 1.0 / math.sqrt(hd)
    f32, bf16 = jnp.float32, jnp.bfloat16

    # ---- embedding + hoisted LSTM input projection over all Bc*S rows at once ----
    x_flat = x_ref[...].reshape(R, state_size).astype(bf16)          # time-major rows
    emb = (jnp.dot(x_flat, emb_w_ref[...], preferred_element_type=f32)
           + emb_b_ref[...])                                         # (R, H) f32
    # stash gates in a VMEM scratch so the whole (R, 4H) block is not held live
    gates_ref[...] = (jnp.dot(emb.astype(bf16), wih_ref[...],
                              preferred_element_type=f32) + lstm_b_ref[...])

    # ---- LSTM recurrence, vectorized over the Bc batch rows -----------------
    whh = whh_ref[...]                                               # bf16 (H, 4H)
    h = jnp.zeros((Bc, H), f32)
    c = jnp.zeros((Bc, H), f32)
    for t in range(S):                                               # S is small & static
        g = (gates_ref[t * Bc:(t + 1) * Bc, :]
             + jnp.dot(h.astype(bf16), whh, preferred_element_type=f32))
        i_g = jax.nn.sigmoid(g[:, 0:H])
        f_g = jax.nn.sigmoid(g[:, H:2 * H])
        g_g = jnp.tanh(g[:, 2 * H:3 * H])
        o_g = jax.nn.sigmoid(g[:, 3 * H:4 * H])
        c = f_g * c + i_g * g_g
        h = o_g * jnp.tanh(c)
        # rows land directly in their final time-major layout, PE add fused in
        seq_ref[t * Bc:(t + 1) * Bc, :] = h + pe_ref[t:t + 1, :]

    batch_mask = mask_ref[...]                                       # (R, R), -1e9 cross-batch
    t_seq = seq_ref[...]                                             # (R, H) f32

    # ---- transformer blocks: flat 2D per-head attention + FFN + residual/LN --
    for blk in range(num_blocks):
        (wqkv_ref, bqkv_ref, wo_ref, bo_ref, g1_ref, be1_ref,
         w1_ref, b1_ref, w2_ref, b2_ref, g2_ref, be2_ref) = blk_refs[blk * 12:(blk + 1) * 12]

        xin = t_seq
        qkv = (jnp.dot(xin.astype(bf16), wqkv_ref[...],
                       preferred_element_type=f32) + bqkv_ref[...])  # (R, 3H)
        q = (qkv[:, 0:H] * scale).astype(bf16)
        k = qkv[:, H:2 * H].astype(bf16)
        v = qkv[:, 2 * H:3 * H].astype(bf16)

        attn_out = None
        for hh in range(num_heads):
            lo, hi = hh * hd, (hh + 1) * hd
            # scores: (R, hd) x (R, hd)^T -> (R, R), plain 2D dot_general (no stacking)
            s = jax.lax.dot_general(q[:, lo:hi], k[:, lo:hi],
                                    (((1,), (1,)), ((), ())),
                                    preferred_element_type=f32)
            s = s + batch_mask                                       # block cross-batch attn
            s = s - jnp.max(s, axis=-1, keepdims=True)
            p = jnp.exp(s)
            p = p * pl.reciprocal(jnp.sum(p, axis=-1, keepdims=True), approx=True)
            ctx = jnp.dot(p.astype(bf16), v[:, lo:hi],
                          preferred_element_type=f32)                # (R, hd)
            head_out = jnp.dot(ctx.astype(bf16), wo_ref[lo:hi, :],
                               preferred_element_type=f32)           # (R, H)
            attn_out = head_out if attn_out is None else attn_out + head_out
        attn_out = attn_out + bo_ref[...]

        y = _layernorm(xin + attn_out, g1_ref[...], be1_ref[...])
        ff = (jnp.dot(y.astype(bf16), w1_ref[...],
                      preferred_element_type=f32) + b1_ref[...])
        ff = jnp.maximum(ff, 0.0)
        ff = (jnp.dot(ff.astype(bf16), w2_ref[...],
                      preferred_element_type=f32) + b2_ref[...])
        t_seq = _layernorm(y + ff, g2_ref[...], be2_ref[...])

    # ---- last timestep + output head, packed into one lane-dense slab -------
    # TODO(synk): dropout is a no-op here (inference/eval-mode semantics).
    last = t_seq[(S - 1) * Bc:, :]                                   # (Bc, H) contiguous rows
    q_vals = (jnp.dot(last.astype(bf16), out_w_ref[...],
                      preferred_element_type=f32) + out_b_ref[...])  # (Bc, A)

    pad_w = out_ref.shape[-1] - (A + 2 * H)
    parts = [q_vals, h, c]
    if pad_w > 0:
        parts.append(jnp.zeros((Bc, pad_w), f32))
    out_ref[...] = jnp.concatenate(parts, axis=1)                    # single unmasked store


# ----------------------------------------------------------------------------
# Parameter init (deterministic, synthetic), positional encoding, full forward
# ----------------------------------------------------------------------------
def init_params(key, state_size, action_size, hidden_size, num_blocks):
    keys = iter(jax.random.split(key, 64))
    s = 0.05

    def rnd(shape):
        return jax.random.normal(next(keys), shape, jnp.float32) * s

    p = {}
    p["emb_w"] = rnd((state_size, hidden_size))
    p["emb_b"] = rnd((1, hidden_size))
    p["lstm_wih"] = rnd((hidden_size, 4 * hidden_size))
    p["lstm_whh"] = rnd((hidden_size, 4 * hidden_size))
    # combined bias b_ih + b_hh (PyTorch has two; the gate sees their sum)
    p["lstm_b"] = rnd((1, 4 * hidden_size))
    p["blocks"] = []
    for _ in range(num_blocks):
        blk = (
            rnd((hidden_size, 3 * hidden_size)),           # in_proj weight (transposed)
            rnd((1, 3 * hidden_size)),                     # in_proj bias
            rnd((hidden_size, hidden_size)),               # out_proj weight (transposed)
            rnd((1, hidden_size)),                         # out_proj bias
            jnp.ones((1, hidden_size), jnp.float32),       # ln1 gamma
            jnp.zeros((1, hidden_size), jnp.float32),      # ln1 beta
            rnd((hidden_size, 4 * hidden_size)),           # ff w1
            rnd((1, 4 * hidden_size)),                     # ff b1
            rnd((4 * hidden_size, hidden_size)),           # ff w2
            rnd((1, hidden_size)),                         # ff b2
            jnp.ones((1, hidden_size), jnp.float32),       # ln2 gamma
            jnp.zeros((1, hidden_size), jnp.float32),      # ln2 beta
        )
        p["blocks"].append(blk)
    p["out_w"] = rnd((hidden_size, action_size))
    p["out_b"] = rnd((1, action_size))
    return p


def positional_encoding(max_len, d_model):
    position = jnp.arange(max_len, dtype=jnp.float32)[:, None]
    div_term = jnp.exp(
        jnp.arange(0, d_model, 2, dtype=jnp.float32) * (-math.log(10000.0) / d_model)
    )
    pe = jnp.zeros((max_len, d_model), jnp.float32)
    pe = pe.at[:, 0::2].set(jnp.sin(position * div_term))
    pe = pe.at[:, 1::2].set(jnp.cos(position * div_term))
    return pe


def forward(params, x, num_heads=4):
    B, S, state_size = x.shape
    H = params["emb_w"].shape[1]
    A = params["out_w"].shape[1]
    num_blocks = len(params["blocks"])
    assert S <= MAX_PE_LEN, "sequence length exceeds positional-encoding table"
    assert H % num_heads == 0

    # ---- batch chunking: whole batch in one program for small B, 8-wide chunks else ----
    Bc = B if B <= 8 else 8
    n_chunks = -(-B // Bc)
    Bpad = n_chunks * Bc
    if Bpad != B:
        x = jnp.concatenate(
            [x, jnp.zeros((Bpad - B, S, state_size), x.dtype)], axis=0)
    # time-major layout (S, Bpad, state): per-timestep gate slices are contiguous rows
    x_tm = jnp.transpose(x.astype(jnp.float32), (1, 0, 2))

    pe = positional_encoding(MAX_PE_LEN, H)[:S]                      # constant-folded

    # additive mask blocking cross-batch attention inside a folded chunk
    R = S * Bc
    bid = jnp.arange(R, dtype=jnp.int32) % Bc                        # time-major batch id
    attn_mask = jnp.where(bid[:, None] == bid[None, :], 0.0, -1e9).astype(jnp.float32)

    # matmul weights in bf16 (MXU-native, halves weight DMA bytes); biases/LN stay f32
    bf = lambda a: a.astype(jnp.bfloat16)
    blk_flat = []
    for (wqkv, bqkv, wo, bo, g1, be1, w1, b1, w2, b2, g2, be2) in params["blocks"]:
        blk_flat += [bf(wqkv), bqkv, bf(wo), bo, g1, be1,
                     bf(w1), b1, bf(w2), b2, g2, be2]
    operands = [x_tm, pe, attn_mask, bf(params["emb_w"]), params["emb_b"],
                bf(params["lstm_wih"]), bf(params["lstm_whh"]), params["lstm_b"],
                *blk_flat, bf(params["out_w"]), params["out_b"]]

    def full_spec(a):
        nd = a.ndim
        return pl.BlockSpec(a.shape, lambda i, nd=nd: (0,) * nd)

    in_specs = [pl.BlockSpec((S, Bc, state_size), lambda i: (0, i, 0))]
    in_specs += [full_spec(a) for a in operands[1:]]

    # single lane-padded output slab: [q_values | h_n | c_n | zero-pad]
    slab_w = max(128, -(-(A + 2 * H) // 128) * 128)
    out_shape = jax.ShapeDtypeStruct((Bpad, slab_w), jnp.float32)
    out_specs = pl.BlockSpec((Bc, slab_w), lambda i: (i, 0))

    # TODO(synk): if hidden_size is scaled up, set vmem_limit_bytes and single-buffer
    # the grid-invariant weight specs (pipeline_mode=pl.Buffered(1)), esp. on v7x (64 MiB).
    slab = pl.pallas_call(
        functools.partial(fused_forward_kernel,
                          num_heads=num_heads, num_blocks=num_blocks),
        out_shape=out_shape,
        grid=(n_chunks,),
        in_specs=in_specs,
        out_specs=out_specs,
        scratch_shapes=[pltpu.VMEM((R, 4 * H), jnp.float32),   # LSTM input-gate projections
                        pltpu.VMEM((R, H), jnp.float32)],      # LSTM outputs + PE (time-major)
        compiler_params=pltpu.CompilerParams(
            dimension_semantics=("parallel",)),                # chunks shard across TCs (v7x)
    )(*operands)

    q_values = slab[:B, 0:A]
    h_n = slab[:B, A:A + H][None, ...]                         # (num_layers=1, B, H)
    c_n = slab[:B, A + H:A + 2 * H][None, ...]
    return q_values, (h_n, c_n)


if __name__ == "__main__":
    B, S = 2, 8
    state_size, action_size, hidden_size = 16, 4, 32
    num_heads, transformer_layers = 4, 2

    key = jax.random.PRNGKey(0)
    k_param, k_x = jax.random.split(key)
    params = init_params(k_param, state_size, action_size, hidden_size, transformer_layers)
    x = jax.random.normal(k_x, (B, S, state_size), jnp.float32)

    fwd = jax.jit(forward, static_argnames=("num_heads",))
    q_values, (h_n, c_n) = fwd(params, x, num_heads=num_heads)
    jax.block_until_ready(q_values)
    jax.block_until_ready(h_n)
    jax.block_until_ready(c_n)

    assert q_values.shape == (B, action_size)
    assert h_n.shape == (1, B, hidden_size) and c_n.shape == (1, B, hidden_size)
    assert bool(jnp.all(jnp.isfinite(q_values)))
    print("KERNEL_OK")
</pallas_src>

<mosaic_0001>
module attributes {stable_mosaic.version = 11 : i64} {
  func.func @fused_forward_kernel(%arg0: i32, %arg1: memref<8x2x16xf32, #tpu.memory_space<vmem>>, %arg2: memref<8x32xf32, #tpu.memory_space<vmem>>, %arg3: memref<16x16xf32, #tpu.memory_space<vmem>>, %arg4: memref<16x32xbf16, #tpu.memory_space<vmem>>, %arg5: memref<1x32xf32, #tpu.memory_space<vmem>>, %arg6: memref<32x128xbf16, #tpu.memory_space<vmem>>, %arg7: memref<32x128xbf16, #tpu.memory_space<vmem>>, %arg8: memref<1x128xf32, #tpu.memory_space<vmem>>, %arg9: memref<32x96xbf16, #tpu.memory_space<vmem>>, %arg10: memref<1x96xf32, #tpu.memory_space<vmem>>, %arg11: memref<32x32xbf16, #tpu.memory_space<vmem>>, %arg12: memref<1x32xf32, #tpu.memory_space<vmem>>, %arg13: memref<1x32xf32, #tpu.memory_space<vmem>>, %arg14: memref<1x32xf32, #tpu.memory_space<vmem>>, %arg15: memref<32x128xbf16, #tpu.memory_space<vmem>>, %arg16: memref<1x128xf32, #tpu.memory_space<vmem>>, %arg17: memref<128x32xbf16, #tpu.memory_space<vmem>>, %arg18: memref<1x32xf32, #tpu.memory_space<vmem>>, %arg19: memref<1x32xf32, #tpu.memory_space<vmem>>, %arg20: memref<1x32xf32, #tpu.memory_space<vmem>>, %arg21: memref<32x96xbf16, #tpu.memory_space<vmem>>, %arg22: memref<1x96xf32, #tpu.memory_space<vmem>>, %arg23: memref<32x32xbf16, #tpu.memory_space<vmem>>, %arg24: memref<1x32xf32, #tpu.memory_space<vmem>>, %arg25: memref<1x32xf32, #tpu.memory_space<vmem>>, %arg26: memref<1x32xf32, #tpu.memory_space<vmem>>, %arg27: memref<32x128xbf16, #tpu.memory_space<vmem>>, %arg28: memref<1x128xf32, #tpu.memory_space<vmem>>, %arg29: memref<128x32xbf16, #tpu.memory_space<vmem>>, %arg30: memref<1x32xf32, #tpu.memory_space<vmem>>, %arg31: memref<1x32xf32, #tpu.memory_space<vmem>>, %arg32: memref<1x32xf32, #tpu.memory_space<vmem>>, %arg33: memref<32x4xbf16, #tpu.memory_space<vmem>>, %arg34: memref<1x4xf32, #tpu.memory_space<vmem>>, %arg35: memref<2x128xf32, #tpu.memory_space<vmem>>, %arg36: memref<16x128xf32, #tpu.memory_space<vmem>>, %arg37: memref<16x32xf32, #tpu.memory_space<vmem>>) attributes {dimension_semantics = [#tpu.dimension_semantics<parallel>], iteration_bounds = array<i64: 1>, scalar_prefetch = 0 : i64, scratch_operands = 2 : i64, tpu.core_type = #tpu.core_type<tc>, window_params = [{transform_indices = @transform_0, window_bounds = array<i64: 8, 2, 16>}, {pipeline_mode = #tpu.pipeline_mode<synchronous>, transform_indices = @transform_1, window_bounds = array<i64: 8, 32>}, {pipeline_mode = #tpu.pipeline_mode<synchronous>, transform_indices = @transform_2, window_bounds = array<i64: 16, 16>}, {pipeline_mode = #tpu.pipeline_mode<synchronous>, transform_indices = @transform_3, window_bounds = array<i64: 16, 32>}, {pipeline_mode = #tpu.pipeline_mode<synchronous>, transform_indices = @transform_4, window_bounds = array<i64: 1, 32>}, {pipeline_mode = #tpu.pipeline_mode<synchronous>, transform_indices = @transform_5, window_bounds = array<i64: 32, 128>}, {pipeline_mode = #tpu.pipeline_mode<synchronous>, transform_indices = @transform_6, window_bounds = array<i64: 32, 128>}, {pipeline_mode = #tpu.pipeline_mode<synchronous>, transform_indices = @transform_7, window_bounds = array<i64: 1, 128>}, {pipeline_mode = #tpu.pipeline_mode<synchronous>, transform_indices = @transform_8, window_bounds = array<i64: 32, 96>}, {pipeline_mode = #tpu.pipeline_mode<synchronous>, transform_indices = @transform_9, window_bounds = array<i64: 1, 96>}, {pipeline_mode = #tpu.pipeline_mode<synchronous>, transform_indices = @transform_10, window_bounds = array<i64: 32, 32>}, {pipeline_mode = #tpu.pipeline_mode<synchronous>, transform_indices = @transform_11, window_bounds = array<i64: 1, 32>}, {pipeline_mode = #tpu.pipeline_mode<synchronous>, transform_indices = @transform_12, window_bounds = array<i64: 1, 32>}, {pipeline_mode = #tpu.pipeline_mode<synchronous>, transform_indices = @transform_13, window_bounds = array<i64: 1, 32>}, {pipeline_mode = #tpu.pipeline_mode<synchronous>, transform_indices = @transform_14, window_bounds = array<i64: 32, 128>}, {pipeline_mode = #tpu.pipeline_mode<synchronous>, transform_indices = @transform_15, window_bounds = array<i64: 1, 128>}, {pipeline_mode = #tpu.pipeline_mode<synchronous>, transform_indices = @transform_16, window_bounds = array<i64: 128, 32>}, {pipeline_mode = #tpu.pipeline_mode<synchronous>, transform_indices = @transform_17, window_bounds = array<i64: 1, 32>}, {pipeline_mode = #tpu.pipeline_mode<synchronous>, transform_indices = @transform_18, window_bounds = array<i64: 1, 32>}, {pipeline_mode = #tpu.pipeline_mode<synchronous>, transform_indices = @transform_19, window_bounds = array<i64: 1, 32>}, {pipeline_mode = #tpu.pipeline_mode<synchronous>, transform_indices = @transform_20, window_bounds = array<i64: 32, 96>}, {pipeline_mode = #tpu.pipeline_mode<synchronous>, transform_indices = @transform_21, window_bounds = array<i64: 1, 96>}, {pipeline_mode = #tpu.pipeline_mode<synchronous>, transform_indices = @transform_22, window_bounds = array<i64: 32, 32>}, {pipeline_mode = #tpu.pipeline_mode<synchronous>, transform_indices = @transform_23, window_bounds = array<i64: 1, 32>}, {pipeline_mode = #tpu.pipeline_mode<synchronous>, transform_indices = @transform_24, window_bounds = array<i64: 1, 32>}, {pipeline_mode = #tpu.pipeline_mode<synchronous>, transform_indices = @transform_25, window_bounds = array<i64: 1, 32>}, {pipeline_mode = #tpu.pipeline_mode<synchronous>, transform_indices = @transform_26, window_bounds = array<i64: 32, 128>}, {pipeline_mode = #tpu.pipeline_mode<synchronous>, transform_indices = @transform_27, window_bounds = array<i64: 1, 128>}, {pipeline_mode = #tpu.pipeline_mode<synchronous>, transform_indices = @transform_28, window_bounds = array<i64: 128, 32>}, {pipeline_mode = #tpu.pipeline_mode<synchronous>, transform_indices = @transform_29, window_bounds = array<i64: 1, 32>}, {pipeline_mode = #tpu.pipeline_mode<synchronous>, transform_indices = @transform_30, window_bounds = array<i64: 1, 32>}, {pipeline_mode = #tpu.pipeline_mode<synchronous>, transform_indices = @transform_31, window_bounds = array<i64: 1, 32>}, {pipeline_mode = #tpu.pipeline_mode<synchronous>, transform_indices = @transform_32, window_bounds = array<i64: 32, 4>}, {pipeline_mode = #tpu.pipeline_mode<synchronous>, transform_indices = @transform_33, window_bounds = array<i64: 1, 4>}, {transform_indices = @transform_34, window_bounds = array<i64: 2, 128>}]} {
    %c0 = arith.constant 0 : index
    %c0_0 = arith.constant 0 : index
    %c0_1 = arith.constant 0 : index
    %0 = vector.load %arg1[%c0, %c0_0, %c0_1] : memref<8x2x16xf32, #tpu.memory_space<vmem>>, vector<8x2x16xf32>
    %1 = vector.shape_cast %0 : vector<8x2x16xf32> to vector<16x16xf32>
    %2 = arith.truncf %1 : vector<16x16xf32> to vector<16x16xbf16>
    %c0_2 = arith.constant 0 : index
    %c0_3 = arith.constant 0 : index
    %3 = vector.load %arg4[%c0_2, %c0_3] : memref<16x32xbf16, #tpu.memory_space<vmem>>, vector<16x32xbf16>
    %cst = arith.constant dense<0.000000e+00> : vector<16x32xf32>
    %4 = tpu.matmul %2, %3, %cst {dimension_numbers = #tpu.dot_dimension_numbers<[1], [0], [0], [1], [0, 0, 1, 1], [], []>} : vector<16x16xbf16>, vector<16x32xbf16>, vector<16x32xf32> -> vector<16x32xf32>
    %c0_4 = arith.constant 0 : index
    %c0_5 = arith.constant 0 : index
    %5 = vector.load %arg5[%c0_4, %c0_5] : memref<1x32xf32, #tpu.memory_space<vmem>>, vector<1x32xf32>
    %6 = vector.broadcast %5 : vector<1x32xf32> to vector<16x32xf32>
    %7 = arith.addf %4, %6 : vector<16x32xf32>
    %8 = arith.truncf %7 : vector<16x32xf32> to vector<16x32xbf16>
    %c0_6 = arith.constant 0 : index
    %c0_7 = arith.constant 0 : index
    %9 = vector.load %arg6[%c0_6, %c0_7] : memref<32x128xbf16, #tpu.memory_space<vmem>>, vector<32x128xbf16>
    %cst_8 = arith.constant dense<0.000000e+00> : vector<16x128xf32>
    %10 = tpu.matmul %8, %9, %cst_8 {dimension_numbers = #tpu.dot_dimension_numbers<[1], [0], [0], [1], [0, 0, 1, 1], [], []>} : vector<16x32xbf16>, vector<32x128xbf16>, vector<16x128xf32> -> vector<16x128xf32>
    %c0_9 = arith.constant 0 : index
    %c0_10 = arith.constant 0 : index
    %11 = vector.load %arg8[%c0_9, %c0_10] : memref<1x128xf32, #tpu.memory_space<vmem>>, vector<1x128xf32>
    %12 = vector.broadcast %11 : vector<1x128xf32> to vector<16x128xf32>
    %13 = arith.addf %10, %12 : vector<16x128xf32>
    %c0_11 = arith.constant 0 : index
    %c0_12 = arith.constant 0 : index
    %14 = vector.load %arg36[%c0_11, %c0_12] : memref<16x128xf32, #tpu.memory_space<vmem>>, vector<16x128xf32>
    tpu.vector_store %arg36[%c0_11, %c0_12], %13 {strides = array<i32>} : memref<16x128xf32, #tpu.memory_space<vmem>>, vector<16x128xf32>,
    %c0_13 = arith.constant 0 : index
    %c0_14 = arith.constant 0 : index
    %15 = vector.load %arg7[%c0_13, %c0_14] : memref<32x128xbf16, #tpu.memory_space<vmem>>, vector<32x128xbf16>
    %cst_15 = arith.constant 0.000000e+00 : f32
    %16 = vector.broadcast %cst_15 : f32 to vector<2x32xf32>
    %cst_16 = arith.constant 0.000000e+00 : f32
    %17 = vector.broadcast %cst_16 : f32 to vector<2x32xf32>
    %c0_17 = arith.constant 0 : index
    %c0_18 = arith.constant 0 : index
    %18 = vector.load %arg36[%c0_17, %c0_18] : memref<16x128xf32, #tpu.memory_space<vmem>>, vector<2x128xf32>
    %19 = arith.truncf %16 : vector<2x32xf32> to vector<2x32xbf16>
    %cst_19 = arith.constant dense<0.000000e+00> : vector<2x128xf32>
    %20 = tpu.matmul %19, %15, %cst_19 {dimension_numbers = #tpu.dot_dimension_numbers<[1], [0], [0], [1], [0, 0, 1, 1], [], []>} : vector<2x32xbf16>, vector<32x128xbf16>, vector<2x128xf32> -> vector<2x128xf32>
    %21 = arith.addf %18, %20 : vector<2x128xf32>
    %22 = vector.extract_strided_slice %21 {offsets = [0, 0], sizes = [2, 32], strides = [1, 1]} : vector<2x128xf32> to vector<2x32xf32>
    %23 = arith.negf %22 : vector<2x32xf32>
    %24 = math.exp %23 : vector<2x32xf32>
    %cst_20 = arith.constant 1.000000e+00 : f32
    %25 = vector.broadcast %cst_20 : f32 to vector<2x32xf32>
    %26 = arith.addf %25, %24 : vector<2x32xf32>
    %27 = arith.divf %25, %26 : vector<2x32xf32>
    %28 = vector.extract_strided_slice %21 {offsets = [0, 32], sizes = [2, 32], strides = [1, 1]} : vector<2x128xf32> to vector<2x32xf32>
    %29 = arith.negf %28 : vector<2x32xf32>
    %30 = math.exp %29 : vector<2x32xf32>
    %cst_21 = arith.constant 1.000000e+00 : f32
    %31 = vector.broadcast %cst_21 : f32 to vector<2x32xf32>
    %32 = arith.addf %31, %30 : vector<2x32xf32>
    %33 = arith.divf %31, %32 : vector<2x32xf32>
    %34 = vector.extract_strided_slice %21 {offsets = [0, 64], sizes = [2, 32], strides = [1, 1]} : vector<2x128xf32> to vector<2x32xf32>
    %35 = math.tanh %34 : vector<2x32xf32>
    %36 = vector.extract_strided_slice %21 {offsets = [0, 96], sizes = [2, 32], strides = [1, 1]} : vector<2x128xf32> to vector<2x32xf32>
    %37 = arith.negf %36 : vector<2x32xf32>
    %38 = math.exp %37 : vector<2x32xf32>
    %cst_22 = arith.constant 1.000000e+00 : f32
    %39 = vector.broadcast %cst_22 : f32 to vector<2x32xf32>
    %40 = arith.addf %39, %38 : vector<2x32xf32>
    %41 = arith.divf %39, %40 : vector<2x32xf32>
    %42 = arith.mulf %33, %17 : vector<2x32xf32>
    %43 = arith.mulf %27, %35 : vector<2x32xf32>
    %44 = arith.addf %42, %43 : vector<2x32xf32>
    %45 = math.tanh %44 : vector<2x32xf32>
    %46 = arith.mulf %41, %45 : vector<2x32xf32>
    %c0_23 = arith.constant 0 : index
    %c0_24 = arith.constant 0 : index
    %47 = vector.load %arg2[%c0_23, %c0_24] : memref<8x32xf32, #tpu.memory_space<vmem>>, vector<1x32xf32>
    %48 = vector.broadcast %47 : vector<1x32xf32> to vector<2x32xf32>
    %49 = arith.addf %46, %48 : vector<2x32xf32>
    %c0_25 = arith.constant 0 : index
    %c0_26 = arith.constant 0 : index
    %50 = vector.load %arg37[%c0_25, %c0_26] : memref<16x32xf32, #tpu.memory_space<vmem>>, vector<2x32xf32>
    tpu.vector_store %arg37[%c0_25, %c0_26], %49 {strides = array<i32>} : memref<16x32xf32, #tpu.memory_space<vmem>>, vector<2x32xf32>,
    %c2 = arith.constant 2 : index
    %c0_27 = arith.constant 0 : index
    %51 = vector.load %arg36[%c2, %c0_27] : memref<16x128xf32, #tpu.memory_space<vmem>>, vector<2x128xf32>
    %52 = arith.truncf %46 : vector<2x32xf32> to vector<2x32xbf16>
    %cst_28 = arith.constant dense<0.000000e+00> : vector<2x128xf32>
    %53 = tpu.matmul %52, %15, %cst_28 {dimension_numbers = #tpu.dot_dimension_numbers<[1], [0], [0], [1], [0, 0, 1, 1], [], []>} : vector<2x32xbf16>, vector<32x128xbf16>, vector<2x128xf32> -> vector<2x128xf32>
    %54 = arith.addf %51, %53 : vector<2x128xf32>
    %55 = vector.extract_strided_slice %54 {offsets = [0, 0], sizes = [2, 32], strides = [1, 1]} : vector<2x128xf32> to vector<2x32xf32>
    %56 = arith.negf %55 : vector<2x32xf32>
    %57 = math.exp %56 : vector<2x32xf32>
    %cst_29 = arith.constant 1.000000e+00 : f32
    %58 = vector.broadcast %cst_29 : f32 to vector<2x32xf32>
    %59 = arith.addf %58, %57 : vector<2x32xf32>
    %60 = arith.divf %58, %59 : vector<2x32xf32>
    %61 = vector.extract_strided_slice %54 {offsets = [0, 32], sizes = [2, 32], strides = [1, 1]} : vector<2x128xf32> to vector<2x32xf32>
    %62 = arith.negf %61 : vector<2x32xf32>
    %63 = math.exp %62 : vector<2x32xf32>
    %cst_30 = arith.constant 1.000000e+00 : f32
    %64 = vector.broadcast %cst_30 : f32 to vector<2x32xf32>
    %65 = arith.addf %64, %63 : vector<2x32xf32>
    %66 = arith.divf %64, %65 : vector<2x32xf32>
    %67 = vector.extract_strided_slice %54 {offsets = [0, 64], sizes = [2, 32], strides = [1, 1]} : vector<2x128xf32> to vector<2x32xf32>
    %68 = math.tanh %67 : vector<2x32xf32>
    %69 = vector.extract_strided_slice %54 {offsets = [0, 96], sizes = [2, 32], strides = [1, 1]} : vector<2x128xf32> to vector<2x32xf32>
    %70 = arith.negf %69 : vector<2x32xf32>
    %71 = math.exp %70 : vector<2x32xf32>
    %cst_31 = arith.constant 1.000000e+00 : f32
    %72 = vector.broadcast %cst_31 : f32 to vector<2x32xf32>
    %73 = arith.addf %72, %71 : vector<2x32xf32>
    %74 = arith.divf %72, %73 : vector<2x32xf32>
    %75 = arith.mulf %66, %44 : vector<2x32xf32>
    %76 = arith.mulf %60, %68 : vector<2x32xf32>
    %77 = arith.addf %75, %76 : vector<2x32xf32>
    %78 = math.tanh %77 : vector<2x32xf32>
    %79 = arith.mulf %74, %78 : vector<2x32xf32>
    %c1 = arith.constant 1 : index
    %c0_32 = arith.constant 0 : index
    %80 = vector.load %arg2[%c1, %c0_32] : memref<8x32xf32, #tpu.memory_space<vmem>>, vector<1x32xf32>
    %81 = vector.broadcast %80 : vector<1x32xf32> to vector<2x32xf32>
    %82 = arith.addf %79, %81 : vector<2x32xf32>
    %c2_33 = arith.constant 2 : index
    %c0_34 = arith.constant 0 : index
    %83 = vector.load %arg37[%c2_33, %c0_34] : memref<16x32xf32, #tpu.memory_space<vmem>>, vector<2x32xf32>
    tpu.vector_store %arg37[%c2_33, %c0_34], %82 {strides = array<i32>} : memref<16x32xf32, #tpu.memory_space<vmem>>, vector<2x32xf32>,
    %c4 = arith.constant 4 : index
    %c0_35 = arith.constant 0 : index
    %84 = vector.load %arg36[%c4, %c0_35] : memref<16x128xf32, #tpu.memory_space<vmem>>, vector<2x128xf32>
    %85 = arith.truncf %79 : vector<2x32xf32> to vector<2x32xbf16>
    %cst_36 = arith.constant dense<0.000000e+00> : vector<2x128xf32>
    %86 = tpu.matmul %85, %15, %cst_36 {dimension_numbers = #tpu.dot_dimension_numbers<[1], [0], [0], [1], [0, 0, 1, 1], [], []>} : vector<2x32xbf16>, vector<32x128xbf16>, vector<2x128xf32> -> vector<2x128xf32>
    %87 = arith.addf %84, %86 : vector<2x128xf32>
    %88 = vector.extract_strided_slice %87 {offsets = [0, 0], sizes = [2, 32], strides = [1, 1]} : vector<2x128xf32> to vector<2x32xf32>
    %89 = arith.negf %88 : vector<2x32xf32>
    %90 = math.exp %89 : vector<2x32xf32>
    %cst_37 = arith.constant 1.000000e+00 : f32
    %91 = vector.broadcast %cst_37 : f32 to vector<2x32xf32>
    %92 = arith.addf %91, %90 : vector<2x32xf32>
    %93 = arith.divf %91, %92 : vector<2x32xf32>
    %94 = vector.extract_strided_slice %87 {offsets = [0, 32], sizes = [2, 32], strides = [1, 1]} : vector<2x128xf32> to vector<2x32xf32>
    %95 = arith.negf %94 : vector<2x32xf32>
    %96 = math.exp %95 : vector<2x32xf32>
    %cst_38 = arith.constant 1.000000e+00 : f32
    %97 = vector.broadcast %cst_38 : f32 to vector<2x32xf32>
    %98 = arith.addf %97, %96 : vector<2x32xf32>
    %99 = arith.divf %97, %98 : vector<2x32xf32>
    %100 = vector.extract_strided_slice %87 {offsets = [0, 64], sizes = [2, 32], strides = [1, 1]} : vector<2x128xf32> to vector<2x32xf32>
    %101 = math.tanh %100 : vector<2x32xf32>
    %102 = vector.extract_strided_slice %87 {offsets = [0, 96], sizes = [2, 32], strides = [1, 1]} : vector<2x128xf32> to vector<2x32xf32>
    %103 = arith.negf %102 : vector<2x32xf32>
    %104 = math.exp %103 : vector<2x32xf32>
    %cst_39 = arith.constant 1.000000e+00 : f32
    %105 = vector.broadcast %cst_39 : f32 to vector<2x32xf32>
    %106 = arith.addf %105, %104 : vector<2x32xf32>
    %107 = arith.divf %105, %106 : vector<2x32xf32>
    %108 = arith.mulf %99, %77 : vector<2x32xf32>
    %109 = arith.mulf %93, %101 : vector<2x32xf32>
    %110 = arith.addf %108, %109 : vector<2x32xf32>
    %111 = math.tanh %110 : vector<2x32xf32>
    %112 = arith.mulf %107, %111 : vector<2x32xf32>
    %c2_40 = arith.constant 2 : index
    %c0_41 = arith.constant 0 : index
    %113 = vector.load %arg2[%c2_40, %c0_41] : memref<8x32xf32, #tpu.memory_space<vmem>>, vector<1x32xf32>
    %114 = vector.broadcast %113 : vector<1x32xf32> to vector<2x32xf32>
    %115 = arith.addf %112, %114 : vector<2x32xf32>
    %c4_42 = arith.constant 4 : index
    %c0_43 = arith.constant 0 : index
    %116 = vector.load %arg37[%c4_42, %c0_43] : memref<16x32xf32, #tpu.memory_space<vmem>>, vector<2x32xf32>
    tpu.vector_store %arg37[%c4_42, %c0_43], %115 {strides = array<i32>} : memref<16x32xf32, #tpu.memory_space<vmem>>, vector<2x32xf32>,
    %c6 = arith.constant 6 : index
    %c0_44 = arith.constant 0 : index
    %117 = vector.load %arg36[%c6, %c0_44] : memref<16x128xf32, #tpu.memory_space<vmem>>, vector<2x128xf32>
    %118 = arith.truncf %112 : vector<2x32xf32> to vector<2x32xbf16>
    %cst_45 = arith.constant dense<0.000000e+00> : vector<2x128xf32>
    %119 = tpu.matmul %118, %15, %cst_45 {dimension_numbers = #tpu.dot_dimension_numbers<[1], [0], [0], [1], [0, 0, 1, 1], [], []>} : vector<2x32xbf16>, vector<32x128xbf16>, vector<2x128xf32> -> vector<2x128xf32>
    %120 = arith.addf %117, %119 : vector<2x128xf32>
    %121 = vector.extract_strided_slice %120 {offsets = [0, 0], sizes = [2, 32], strides = [1, 1]} : vector<2x128xf32> to vector<2x32xf32>
    %122 = arith.negf %121 : vector<2x32xf32>
    %123 = math.exp %122 : vector<2x32xf32>
    %cst_46 = arith.constant 1.000000e+00 : f32
    %124 = vector.broadcast %cst_46 : f32 to vector<2x32xf32>
    %125 = arith.addf %124, %123 : vector<2x32xf32>
    %126 = arith.divf %124, %125 : vector<2x32xf32>
    %127 = vector.extract_strided_slice %120 {offsets = [0, 32], sizes = [2, 32], strides = [1, 1]} : vector<2x128xf32> to vector<2x32xf32>
    %128 = arith.negf %127 : vector<2x32xf32>
    %129 = math.exp %128 : vector<2x32xf32>
    %cst_47 = arith.constant 1.000000e+00 : f32
    %130 = vector.broadcast %cst_47 : f32 to vector<2x32xf32>
    %131 = arith.addf %130, %129 : vector<2x32xf32>
    %132 = arith.divf %130, %131 : vector<2x32xf32>
    %133 = vector.extract_strided_slice %120 {offsets = [0, 64], sizes = [2, 32], strides = [1, 1]} : vector<2x128xf32> to vector<2x32xf32>
    %134 = math.tanh %133 : vector<2x32xf32>
    %135 = vector.extract_strided_slice %120 {offsets = [0, 96], sizes = [2, 32], strides = [1, 1]} : vector<2x128xf32> to vector<2x32xf32>
    %136 = arith.negf %135 : vector<2x32xf32>
    %137 = math.exp %136 : vector<2x32xf32>
    %cst_48 = arith.constant 1.000000e+00 : f32
    %138 = vector.broadcast %cst_48 : f32 to vector<2x32xf32>
    %139 = arith.addf %138, %137 : vector<2x32xf32>
    %140 = arith.divf %138, %139 : vector<2x32xf32>
    %141 = arith.mulf %132, %110 : vector<2x32xf32>
    %142 = arith.mulf %126, %134 : vector<2x32xf32>
    %143 = arith.addf %141, %142 : vector<2x32xf32>
    %144 = math.tanh %143 : vector<2x32xf32>
    %145 = arith.mulf %140, %144 : vector<2x32xf32>
    %c3 = arith.constant 3 : index
    %c0_49 = arith.constant 0 : index
    %146 = vector.load %arg2[%c3, %c0_49] : memref<8x32xf32, #tpu.memory_space<vmem>>, vector<1x32xf32>
    %147 = vector.broadcast %146 : vector<1x32xf32> to vector<2x32xf32>
    %148 = arith.addf %145, %147 : vector<2x32xf32>
    %c6_50 = arith.constant 6 : index
    %c0_51 = arith.constant 0 : index
    %149 = vector.load %arg37[%c6_50, %c0_51] : memref<16x32xf32, #tpu.memory_space<vmem>>, vector<2x32xf32>
    tpu.vector_store %arg37[%c6_50, %c0_51], %148 {strides = array<i32>} : memref<16x32xf32, #tpu.memory_space<vmem>>, vector<2x32xf32>,
    %c8 = arith.constant 8 : index
    %c0_52 = arith.constant 0 : index
    %150 = vector.load %arg36[%c8, %c0_52] : memref<16x128xf32, #tpu.memory_space<vmem>>, vector<2x128xf32>
    %151 = arith.truncf %145 : vector<2x32xf32> to vector<2x32xbf16>
    %cst_53 = arith.constant dense<0.000000e+00> : vector<2x128xf32>
    %152 = tpu.matmul %151, %15, %cst_53 {dimension_numbers = #tpu.dot_dimension_numbers<[1], [0], [0], [1], [0, 0, 1, 1], [], []>} : vector<2x32xbf16>, vector<32x128xbf16>, vector<2x128xf32> -> vector<2x128xf32>
    %153 = arith.addf %150, %152 : vector<2x128xf32>
    %154 = vector.extract_strided_slice %153 {offsets = [0, 0], sizes = [2, 32], strides = [1, 1]} : vector<2x128xf32> to vector<2x32xf32>
    %155 = arith.negf %154 : vector<2x32xf32>
    %156 = math.exp %155 : vector<2x32xf32>
    %cst_54 = arith.constant 1.000000e+00 : f32
    %157 = vector.broadcast %cst_54 : f32 to vector<2x32xf32>
    %158 = arith.addf %157, %156 : vector<2x32xf32>
    %159 = arith.divf %157, %158 : vector<2x32xf32>
    %160 = vector.extract_strided_slice %153 {offsets = [0, 32], sizes = [2, 32], strides = [1, 1]} : vector<2x128xf32> to vector<2x32xf32>
    %161 = arith.negf %160 : vector<2x32xf32>
    %162 = math.exp %161 : vector<2x32xf32>
    %cst_55 = arith.constant 1.000000e+00 : f32
    %163 = vector.broadcast %cst_55 : f32 to vector<2x32xf32>
    %164 = arith.addf %163, %162 : vector<2x32xf32>
    %165 = arith.divf %163, %164 : vector<2x32xf32>
    %166 = vector.extract_strided_slice %153 {offsets = [0, 64], sizes = [2, 32], strides = [1, 1]} : vector<2x128xf32> to vector<2x32xf32>
    %167 = math.tanh %166 : vector<2x32xf32>
    %168 = vector.extract_strided_slice %153 {offsets = [0, 96], sizes = [2, 32], strides = [1, 1]} : vector<2x128xf32> to vector<2x32xf32>
    %169 = arith.negf %168 : vector<2x32xf32>
    %170 = math.exp %169 : vector<2x32xf32>
    %cst_56 = arith.constant 1.000000e+00 : f32
    %171 = vector.broadcast %cst_56 : f32 to vector<2x32xf32>
    %172 = arith.addf %171, %170 : vector<2x32xf32>
    %173 = arith.divf %171, %172 : vector<2x32xf32>
    %174 = arith.mulf %165, %143 : vector<2x32xf32>
    %175 = arith.mulf %159, %167 : vector<2x32xf32>
    %176 = arith.addf %174, %175 : vector<2x32xf32>
    %177 = math.tanh %176 : vector<2x32xf32>
    %178 = arith.mulf %173, %177 : vector<2x32xf32>
    %c4_57 = arith.constant 4 : index
    %c0_58 = arith.constant 0 : index
    %179 = vector.load %arg2[%c4_57, %c0_58] : memref<8x32xf32, #tpu.memory_space<vmem>>, vector<1x32xf32>
    %180 = vector.broadcast %179 : vector<1x32xf32> to vector<2x32xf32>
    %181 = arith.addf %178, %180 : vector<2x32xf32>
    %c8_59 = arith.constant 8 : index
    %c0_60 = arith.constant 0 : index
    %182 = vector.load %arg37[%c8_59, %c0_60] : memref<16x32xf32, #tpu.memory_space<vmem>>, vector<2x32xf32>
    tpu.vector_store %arg37[%c8_59, %c0_60], %181 {strides = array<i32>} : memref<16x32xf32, #tpu.memory_space<vmem>>, vector<2x32xf32>,
    %c10 = arith.constant 10 : index
    %c0_61 = arith.constant 0 : index
    %183 = vector.load %arg36[%c10, %c0_61] : memref<16x128xf32, #tpu.memory_space<vmem>>, vector<2x128xf32>
    %184 = arith.truncf %178 : vector<2x32xf32> to vector<2x32xbf16>
    %cst_62 = arith.constant dense<0.000000e+00> : vector<2x128xf32>
    %185 = tpu.matmul %184, %15, %cst_62 {dimension_numbers = #tpu.dot_dimension_numbers<[1], [0], [0], [1], [0, 0, 1, 1], [], []>} : vector<2x32xbf16>, vector<32x128xbf16>, vector<2x128xf32> -> vector<2x128xf32>
    %186 = arith.addf %183, %185 : vector<2x128xf32>
    %187 = vector.extract_strided_slice %186 {offsets = [0, 0], sizes = [2, 32], strides = [1, 1]} : vector<2x128xf32> to vector<2x32xf32>
    %188 = arith.negf %187 : vector<2x32xf32>
    %189 = math.exp %188 : vector<2x32xf32>
    %cst_63 = arith.constant 1.000000e+00 : f32
    %190 = vector.broadcast %cst_63 : f32 to vector<2x32xf32>
    %191 = arith.addf %190, %189 : vector<2x32xf32>
    %192 = arith.divf %190, %191 : vector<2x32xf32>
    %193 = vector.extract_strided_slice %186 {offsets = [0, 32], sizes = [2, 32], strides = [1, 1]} : vector<2x128xf32> to vector<2x32xf32>
    %194 = arith.negf %193 : vector<2x32xf32>
    %195 = math.exp %194 : vector<2x32xf32>
    %cst_64 = arith.constant 1.000000e+00 : f32
    %196 = vector.broadcast %cst_64 : f32 to vector<2x32xf32>
    %197 = arith.addf %196, %195 : vector<2x32xf32>
    %198 = arith.divf %196, %197 : vector<2x32xf32>
    %199 = vector.extract_strided_slice %186 {offsets = [0, 64], sizes = [2, 32], strides = [1, 1]} : vector<2x128xf32> to vector<2x32xf32>
    %200 = math.tanh %199 : vector<2x32xf32>
    %201 = vector.extract_strided_slice %186 {offsets = [0, 96], sizes = [2, 32], strides = [1, 1]} : vector<2x128xf32> to vector<2x32xf32>
    %202 = arith.negf %201 : vector<2x32xf32>
    %203 = math.exp %202 : vector<2x32xf32>
    %cst_65 = arith.constant 1.000000e+00 : f32
    %204 = vector.broadcast %cst_65 : f32 to vector<2x32xf32>
    %205 = arith.addf %204, %203 : vector<2x32xf32>
    %206 = arith.divf %204, %205 : vector<2x32xf32>
    %207 = arith.mulf %198, %176 : vector<2x32xf32>
    %208 = arith.mulf %192, %200 : vector<2x32xf32>
    %209 = arith.addf %207, %208 : vector<2x32xf32>
    %210 = math.tanh %209 : vector<2x32xf32>
    %211 = arith.mulf %206, %210 : vector<2x32xf32>
    %c5 = arith.constant 5 : index
    %c0_66 = arith.constant 0 : index
    %212 = vector.load %arg2[%c5, %c0_66] : memref<8x32xf32, #tpu.memory_space<vmem>>, vector<1x32xf32>
    %213 = vector.broadcast %212 : vector<1x32xf32> to vector<2x32xf32>
    %214 = arith.addf %211, %213 : vector<2x32xf32>
    %c10_67 = arith.constant 10 : index
    %c0_68 = arith.constant 0 : index
    %215 = vector.load %arg37[%c10_67, %c0_68] : memref<16x32xf32, #tpu.memory_space<vmem>>, vector<2x32xf32>
    tpu.vector_store %arg37[%c10_67, %c0_68], %214 {strides = array<i32>} : memref<16x32xf32, #tpu.memory_space<vmem>>, vector<2x32xf32>,
    %c12 = arith.constant 12 : index
    %c0_69 = arith.constant 0 : index
    %216 = vector.load %arg36[%c12, %c0_69] : memref<16x128xf32, #tpu.memory_space<vmem>>, vector<2x128xf32>
    %217 = arith.truncf %211 : vector<2x32xf32> to vector<2x32xbf16>
    %cst_70 = arith.constant dense<0.000000e+00> : vector<2x128xf32>
    %218 = tpu.matmul %217, %15, %cst_70 {dimension_numbers = #tpu.dot_dimension_numbers<[1], [0], [0], [1], [0, 0, 1, 1], [], []>} : vector<2x32xbf16>, vector<32x128xbf16>, vector<2x128xf32> -> vector<2x128xf32>
    %219 = arith.addf %216, %218 : vector<2x128xf32>
    %220 = vector.extract_strided_slice %219 {offsets = [0, 0], sizes = [2, 32], strides = [1, 1]} : vector<2x128xf32> to vector<2x32xf32>
    %221 = arith.negf %220 : vector<2x32xf32>
    %222 = math.exp %221 : vector<2x32xf32>
    %cst_71 = arith.constant 1.000000e+00 : f32
    %223 = vector.broadcast %cst_71 : f32 to vector<2x32xf32>
    %224 = arith.addf %223, %222 : vector<2x32xf32>
    %225 = arith.divf %223, %224 : vector<2x32xf32>
    %226 = vector.extract_strided_slice %219 {offsets = [0, 32], sizes = [2, 32], strides = [1, 1]} : vector<2x128xf32> to vector<2x32xf32>
    %227 = arith.negf %226 : vector<2x32xf32>
    %228 = math.exp %227 : vector<2x32xf32>
    %cst_72 = arith.constant 1.000000e+00 : f32
    %229 = vector.broadcast %cst_72 : f32 to vector<2x32xf32>
    %230 = arith.addf %229, %228 : vector<2x32xf32>
    %231 = arith.divf %229, %230 : vector<2x32xf32>
    %232 = vector.extract_strided_slice %219 {offsets = [0, 64], sizes = [2, 32], strides = [1, 1]} : vector<2x128xf32> to vector<2x32xf32>
    %233 = math.tanh %232 : vector<2x32xf32>
    %234 = vector.extract_strided_slice %219 {offsets = [0, 96], sizes = [2, 32], strides = [1, 1]} : vector<2x128xf32> to vector<2x32xf32>
    %235 = arith.negf %234 : vector<2x32xf32>
    %236 = math.exp %235 : vector<2x32xf32>
    %cst_73 = arith.constant 1.000000e+00 : f32
    %237 = vector.broadcast %cst_73 : f32 to vector<2x32xf32>
    %238 = arith.addf %237, %236 : vector<2x32xf32>
    %239 = arith.divf %237, %238 : vector<2x32xf32>
    %240 = arith.mulf %231, %209 : vector<2x32xf32>
    %241 = arith.mulf %225, %233 : vector<2x32xf32>
    %242 = arith.addf %240, %241 : vector<2x32xf32>
    %243 = math.tanh %242 : vector<2x32xf32>
    %244 = arith.mulf %239, %243 : vector<2x32xf32>
    %c6_74 = arith.constant 6 : index
    %c0_75 = arith.constant 0 : index
    %245 = vector.load %arg2[%c6_74, %c0_75] : memref<8x32xf32, #tpu.memory_space<vmem>>, vector<1x32xf32>
    %246 = vector.broadcast %245 : vector<1x32xf32> to vector<2x32xf32>
    %247 = arith.addf %244, %246 : vector<2x32xf32>
    %c12_76 = arith.constant 12 : index
    %c0_77 = arith.constant 0 : index
    %248 = vector.load %arg37[%c12_76, %c0_77] : memref<16x32xf32, #tpu.memory_space<vmem>>, vector<2x32xf32>
    tpu.vector_store %arg37[%c12_76, %c0_77], %247 {strides = array<i32>} : memref<16x32xf32, #tpu.memory_space<vmem>>, vector<2x32xf32>,
    %c14 = arith.constant 14 : index
    %c0_78 = arith.constant 0 : index
    %249 = vector.load %arg36[%c14, %c0_78] : memref<16x128xf32, #tpu.memory_space<vmem>>, vector<2x128xf32>
    %250 = arith.truncf %244 : vector<2x32xf32> to vector<2x32xbf16>
    %cst_79 = arith.constant dense<0.000000e+00> : vector<2x128xf32>
    %251 = tpu.matmul %250, %15, %cst_79 {dimension_numbers = #tpu.dot_dimension_numbers<[1], [0], [0], [1], [0, 0, 1, 1], [], []>} : vector<2x32xbf16>, vector<32x128xbf16>, vector<2x128xf32> -> vector<2x128xf32>
    %252 = arith.addf %249, %251 : vector<2x128xf32>
    %253 = vector.extract_strided_slice %252 {offsets = [0, 0], sizes = [2, 32], strides = [1, 1]} : vector<2x128xf32> to vector<2x32xf32>
    %254 = arith.negf %253 : vector<2x32xf32>
    %255 = math.exp %254 : vector<2x32xf32>
    %cst_80 = arith.constant 1.000000e+00 : f32
    %256 = vector.broadcast %cst_80 : f32 to vector<2x32xf32>
    %257 = arith.addf %256, %255 : vector<2x32xf32>
    %258 = arith.divf %256, %257 : vector<2x32xf32>
    %259 = vector.extract_strided_slice %252 {offsets = [0, 32], sizes = [2, 32], strides = [1, 1]} : vector<2x128xf32> to vector<2x32xf32>
    %260 = arith.negf %259 : vector<2x32xf32>
    %261 = math.exp %260 : vector<2x32xf32>
    %cst_81 = arith.constant 1.000000e+00 : f32
    %262 = vector.broadcast %cst_81 : f32 to vector<2x32xf32>
    %263 = arith.addf %262, %261 : vector<2x32xf32>
    %264 = arith.divf %262, %263 : vector<2x32xf32>
    %265 = vector.extract_strided_slice %252 {offsets = [0, 64], sizes = [2, 32], strides = [1, 1]} : vector<2x128xf32> to vector<2x32xf32>
    %266 = math.tanh %265 : vector<2x32xf32>
    %267 = vector.extract_strided_slice %252 {offsets = [0, 96], sizes = [2, 32], strides = [1, 1]} : vector<2x128xf32> to vector<2x32xf32>
    %268 = arith.negf %267 : vector<2x32xf32>
    %269 = math.exp %268 : vector<2x32xf32>
    %cst_82 = arith.constant 1.000000e+00 : f32
    %270 = vector.broadcast %cst_82 : f32 to vector<2x32xf32>
    %271 = arith.addf %270, %269 : vector<2x32xf32>
    %272 = arith.divf %270, %271 : vector<2x32xf32>
    %273 = arith.mulf %264, %242 : vector<2x32xf32>
    %274 = arith.mulf %258, %266 : vector<2x32xf32>
    %275 = arith.addf %273, %274 : vector<2x32xf32>
    %276 = math.tanh %275 : vector<2x32xf32>
    %277 = arith.mulf %272, %276 : vector<2x32xf32>
    %c7 = arith.constant 7 : index
    %c0_83 = arith.constant 0 : index
    %278 = vector.load %arg2[%c7, %c0_83] : memref<8x32xf32, #tpu.memory_space<vmem>>, vector<1x32xf32>
    %279 = vector.broadcast %278 : vector<1x32xf32> to vector<2x32xf32>
    %280 = arith.addf %277, %279 : vector<2x32xf32>
    %c14_84 = arith.constant 14 : index
    %c0_85 = arith.constant 0 : index
    %281 = vector.load %arg37[%c14_84, %c0_85] : memref<16x32xf32, #tpu.memory_space<vmem>>, vector<2x32xf32>
    tpu.vector_store %arg37[%c14_84, %c0_85], %280 {strides = array<i32>} : memref<16x32xf32, #tpu.memory_space<vmem>>, vector<2x32xf32>,
    %c0_86 = arith.constant 0 : index
    %c0_87 = arith.constant 0 : index
    %282 = vector.load %arg3[%c0_86, %c0_87] : memref<16x16xf32, #tpu.memory_space<vmem>>, vector<16x16xf32>
    %c0_88 = arith.constant 0 : index
    %c0_89 = arith.constant 0 : index
    %283 = vector.load %arg37[%c0_88, %c0_89] : memref<16x32xf32, #tpu.memory_space<vmem>>, vector<16x32xf32>
    %284 = arith.truncf %283 : vector<16x32xf32> to vector<16x32xbf16>
    %c0_90 = arith.constant 0 : index
    %c0_91 = arith.constant 0 : index
    %285 = vector.load %arg9[%c0_90, %c0_91] : memref<32x96xbf16, #tpu.memory_space<vmem>>, vector<32x96xbf16>
    %cst_92 = arith.constant dense<0.000000e+00> : vector<16x96xf32>
    %286 = tpu.matmul %284, %285, %cst_92 {dimension_numbers = #tpu.dot_dimension_numbers<[1], [0], [0], [1], [0, 0, 1, 1], [], []>} : vector<16x32xbf16>, vector<32x96xbf16>, vector<16x96xf32> -> vector<16x96xf32>
    %c0_93 = arith.constant 0 : index
    %c0_94 = arith.constant 0 : index
    %287 = vector.load %arg10[%c0_93, %c0_94] : memref<1x96xf32, #tpu.memory_space<vmem>>, vector<1x96xf32>
    %288 = vector.broadcast %287 : vector<1x96xf32> to vector<16x96xf32>
    %289 = arith.addf %286, %288 : vector<16x96xf32>
    %290 = vector.extract_strided_slice %289 {offsets = [0, 0], sizes = [16, 32], strides = [1, 1]} : vector<16x96xf32> to vector<16x32xf32>
    %cst_95 = arith.constant 0.353553385 : f32
    %291 = vector.broadcast %cst_95 : f32 to vector<16x32xf32>
    %292 = arith.mulf %290, %291 : vector<16x32xf32>
    %293 = arith.truncf %292 : vector<16x32xf32> to vector<16x32xbf16>
    %294 = vector.extract_strided_slice %289 {offsets = [0, 32], sizes = [16, 32], strides = [1, 1]} : vector<16x96xf32> to vector<16x32xf32>
    %295 = arith.truncf %294 : vector<16x32xf32> to vector<16x32xbf16>
    %296 = vector.extract_strided_slice %289 {offsets = [0, 64], sizes = [16, 32], strides = [1, 1]} : vector<16x96xf32> to vector<16x32xf32>
    %297 = arith.truncf %296 : vector<16x32xf32> to vector<16x32xbf16>
    %298 = vector.extract_strided_slice %293 {offsets = [0, 0], sizes = [16, 8], strides = [1, 1]} : vector<16x32xbf16> to vector<16x8xbf16>
    %299 = vector.extract_strided_slice %295 {offsets = [0, 0], sizes = [16, 8], strides = [1, 1]} : vector<16x32xbf16> to vector<16x8xbf16>
    %cst_96 = arith.constant dense<0.000000e+00> : vector<16x16xf32>
    %300 = tpu.matmul %298, %299, %cst_96 {dimension_numbers = #tpu.dot_dimension_numbers<[1], [1], [0], [0], [0, 0, 1, 0], [], []>} : vector<16x8xbf16>, vector<16x8xbf16>, vector<16x16xf32> -> vector<16x16xf32>
    %301 = arith.addf %300, %282 : vector<16x16xf32>
    %cst_97 = arith.constant dense<0xFF800000> : vector<16xf32>
    %302 = vector.multi_reduction <maximumf>, %301, %cst_97 [1] : vector<16x16xf32> to vector<16xf32>
    %303 = vector.shape_cast %302 : vector<16xf32> to vector<16x1xf32>
    %304 = vector.broadcast %303 : vector<16x1xf32> to vector<16x16xf32>
    %305 = arith.subf %301, %304 : vector<16x16xf32>
    %306 = math.exp %305 : vector<16x16xf32>
    %cst_98 = arith.constant dense<0.000000e+00> : vector<16xf32>
    %307 = vector.multi_reduction <add>, %306, %cst_98 [1] : vector<16x16xf32> to vector<16xf32>
    %308 = vector.shape_cast %307 : vector<16xf32> to vector<16x1xf32>
    %309 = tpu.reciprocal %308 {approx = true} : vector<16x1xf32> -> vector<16x1xf32>
    %310 = vector.broadcast %309 : vector<16x1xf32> to vector<16x16xf32>
    %311 = arith.mulf %306, %310 : vector<16x16xf32>
    %312 = arith.truncf %311 : vector<16x16xf32> to vector<16x16xbf16>
    %313 = vector.extract_strided_slice %297 {offsets = [0, 0], sizes = [16, 8], strides = [1, 1]} : vector<16x32xbf16> to vector<16x8xbf16>
    %cst_99 = arith.constant dense<0.000000e+00> : vector<16x8xf32>
    %314 = tpu.matmul %312, %313, %cst_99 {dimension_numbers = #tpu.dot_dimension_numbers<[1], [0], [0], [1], [0, 0, 1, 1], [], []>} : vector<16x16xbf16>, vector<16x8xbf16>, vector<16x8xf32> -> vector<16x8xf32>
    %315 = arith.truncf %314 : vector<16x8xf32> to vector<16x8xbf16>
    %c0_100 = arith.constant 0 : index
    %c0_101 = arith.constant 0 : index
    %316 = vector.load %arg11[%c0_100, %c0_101] : memref<32x32xbf16, #tpu.memory_space<vmem>>, vector<8x32xbf16>
    %cst_102 = arith.constant dense<0.000000e+00> : vector<16x32xf32>
    %317 = tpu.matmul %315, %316, %cst_102 {dimension_numbers = #tpu.dot_dimension_numbers<[1], [0], [0], [1], [0, 0, 1, 1], [], []>} : vector<16x8xbf16>, vector<8x32xbf16>, vector<16x32xf32> -> vector<16x32xf32>
    %318 = vector.extract_strided_slice %293 {offsets = [0, 8], sizes = [16, 8], strides = [1, 1]} : vector<16x32xbf16> to vector<16x8xbf16>
    %319 = vector.extract_strided_slice %295 {offsets = [0, 8], sizes = [16, 8], strides = [1, 1]} : vector<16x32xbf16> to vector<16x8xbf16>
    %cst_103 = arith.constant dense<0.000000e+00> : vector<16x16xf32>
    %320 = tpu.matmul %318, %319, %cst_103 {dimension_numbers = #tpu.dot_dimension_numbers<[1], [1], [0], [0], [0, 0, 1, 0], [], []>} : vector<16x8xbf16>, vector<16x8xbf16>, vector<16x16xf32> -> vector<16x16xf32>
    %321 = arith.addf %320, %282 : vector<16x16xf32>
    %cst_104 = arith.constant dense<0xFF800000> : vector<16xf32>
    %322 = vector.multi_reduction <maximumf>, %321, %cst_104 [1] : vector<16x16xf32> to vector<16xf32>
    %323 = vector.shape_cast %322 : vector<16xf32> to vector<16x1xf32>
    %324 = vector.broadcast %323 : vector<16x1xf32> to vector<16x16xf32>
    %325 = arith.subf %321, %324 : vector<16x16xf32>
    %326 = math.exp %325 : vector<16x16xf32>
    %cst_105 = arith.constant dense<0.000000e+00> : vector<16xf32>
    %327 = vector.multi_reduction <add>, %326, %cst_105 [1] : vector<16x16xf32> to vector<16xf32>
    %328 = vector.shape_cast %327 : vector<16xf32> to vector<16x1xf32>
    %329 = tpu.reciprocal %328 {approx = true} : vector<16x1xf32> -> vector<16x1xf32>
    %330 = vector.broadcast %329 : vector<16x1xf32> to vector<16x16xf32>
    %331 = arith.mulf %326, %330 : vector<16x16xf32>
    %332 = arith.truncf %331 : vector<16x16xf32> to vector<16x16xbf16>
    %333 = vector.extract_strided_slice %297 {offsets = [0, 8], sizes = [16, 8], strides = [1, 1]} : vector<16x32xbf16> to vector<16x8xbf16>
    %cst_106 = arith.constant dense<0.000000e+00> : vector<16x8xf32>
    %334 = tpu.matmul %332, %333, %cst_106 {dimension_numbers = #tpu.dot_dimension_numbers<[1], [0], [0], [1], [0, 0, 1, 1], [], []>} : vector<16x16xbf16>, vector<16x8xbf16>, vector<16x8xf32> -> vector<16x8xf32>
    %335 = arith.truncf %334 : vector<16x8xf32> to vector<16x8xbf16>
    %c8_107 = arith.constant 8 : index
    %c0_108 = arith.constant 0 : index
    %336 = vector.load %arg11[%c8_107, %c0_108] : memref<32x32xbf16, #tpu.memory_space<vmem>>, vector<8x32xbf16>
    %cst_109 = arith.constant dense<0.000000e+00> : vector<16x32xf32>
    %337 = tpu.matmul %335, %336, %cst_109 {dimension_numbers = #tpu.dot_dimension_numbers<[1], [0], [0], [1], [0, 0, 1, 1], [], []>} : vector<16x8xbf16>, vector<8x32xbf16>, vector<16x32xf32> -> vector<16x32xf32>
    %338 = arith.addf %317, %337 : vector<16x32xf32>
    %339 = vector.extract_strided_slice %293 {offsets = [0, 16], sizes = [16, 8], strides = [1, 1]} : vector<16x32xbf16> to vector<16x8xbf16>
    %340 = vector.extract_strided_slice %295 {offsets = [0, 16], sizes = [16, 8], strides = [1, 1]} : vector<16x32xbf16> to vector<16x8xbf16>
    %cst_110 = arith.constant dense<0.000000e+00> : vector<16x16xf32>
    %341 = tpu.matmul %339, %340, %cst_110 {dimension_numbers = #tpu.dot_dimension_numbers<[1], [1], [0], [0], [0, 0, 1, 0], [], []>} : vector<16x8xbf16>, vector<16x8xbf16>, vector<16x16xf32> -> vector<16x16xf32>
    %342 = arith.addf %341, %282 : vector<16x16xf32>
    %cst_111 = arith.constant dense<0xFF800000> : vector<16xf32>
    %343 = vector.multi_reduction <maximumf>, %342, %cst_111 [1] : vector<16x16xf32> to vector<16xf32>
    %344 = vector.shape_cast %343 : vector<16xf32> to vector<16x1xf32>
    %345 = vector.broadcast %344 : vector<16x1xf32> to vector<16x16xf32>
    %346 = arith.subf %342, %345 : vector<16x16xf32>
    %347 = math.exp %346 : vector<16x16xf32>
    %cst_112 = arith.constant dense<0.000000e+00> : vector<16xf32>
    %348 = vector.multi_reduction <add>, %347, %cst_112 [1] : vector<16x16xf32> to vector<16xf32>
    %349 = vector.shape_cast %348 : vector<16xf32> to vector<16x1xf32>
    %350 = tpu.reciprocal %349 {approx = true} : vector<16x1xf32> -> vector<16x1xf32>
    %351 = vector.broadcast %350 : vector<16x1xf32> to vector<16x16xf32>
    %352 = arith.mulf %347, %351 : vector<16x16xf32>
    %353 = arith.truncf %352 : vector<16x16xf32> to vector<16x16xbf16>
    %354 = vector.extract_strided_slice %297 {offsets = [0, 16], sizes = [16, 8], strides = [1, 1]} : vector<16x32xbf16> to vector<16x8xbf16>
    %cst_113 = arith.constant dense<0.000000e+00> : vector<16x8xf32>
    %355 = tpu.matmul %353, %354, %cst_113 {dimension_numbers = #tpu.dot_dimension_numbers<[1], [0], [0], [1], [0, 0, 1, 1], [], []>} : vector<16x16xbf16>, vector<16x8xbf16>, vector<16x8xf32> -> vector<16x8xf32>
    %356 = arith.truncf %355 : vector<16x8xf32> to vector<16x8xbf16>
    %c16 = arith.constant 16 : index
    %c0_114 = arith.constant 0 : index
    %357 = vector.load %arg11[%c16, %c0_114] : memref<32x32xbf16, #tpu.memory_space<vmem>>, vector<8x32xbf16>
    %cst_115 = arith.constant dense<0.000000e+00> : vector<16x32xf32>
    %358 = tpu.matmul %356, %357, %cst_115 {dimension_numbers = #tpu.dot_dimension_numbers<[1], [0], [0], [1], [0, 0, 1, 1], [], []>} : vector<16x8xbf16>, vector<8x32xbf16>, vector<16x32xf32> -> vector<16x32xf32>
    %359 = arith.addf %338, %358 : vector<16x32xf32>
    %360 = vector.extract_strided_slice %293 {offsets = [0, 24], sizes = [16, 8], strides = [1, 1]} : vector<16x32xbf16> to vector<16x8xbf16>
    %361 = vector.extract_strided_slice %295 {offsets = [0, 24], sizes = [16, 8], strides = [1, 1]} : vector<16x32xbf16> to vector<16x8xbf16>
    %cst_116 = arith.constant dense<0.000000e+00> : vector<16x16xf32>
    %362 = tpu.matmul %360, %361, %cst_116 {dimension_numbers = #tpu.dot_dimension_numbers<[1], [1], [0], [0], [0, 0, 1, 0], [], []>} : vector<16x8xbf16>, vector<16x8xbf16>, vector<16x16xf32> -> vector<16x16xf32>
    %363 = arith.addf %362, %282 : vector<16x16xf32>
    %cst_117 = arith.constant dense<0xFF800000> : vector<16xf32>
    %364 = vector.multi_reduction <maximumf>, %363, %cst_117 [1] : vector<16x16xf32> to vector<16xf32>
    %365 = vector.shape_cast %364 : vector<16xf32> to vector<16x1xf32>
    %366 = vector.broadcast %365 : vector<16x1xf32> to vector<16x16xf32>
    %367 = arith.subf %363, %366 : vector<16x16xf32>
    %368 = math.exp %367 : vector<16x16xf32>
    %cst_118 = arith.constant dense<0.000000e+00> : vector<16xf32>
    %369 = vector.multi_reduction <add>, %368, %cst_118 [1] : vector<16x16xf32> to vector<16xf32>
    %370 = vector.shape_cast %369 : vector<16xf32> to vector<16x1xf32>
    %371 = tpu.reciprocal %370 {approx = true} : vector<16x1xf32> -> vector<16x1xf32>
    %372 = vector.broadcast %371 : vector<16x1xf32> to vector<16x16xf32>
    %373 = arith.mulf %368, %372 : vector<16x16xf32>
    %374 = arith.truncf %373 : vector<16x16xf32> to vector<16x16xbf16>
    %375 = vector.extract_strided_slice %297 {offsets = [0, 24], sizes = [16, 8], strides = [1, 1]} : vector<16x32xbf16> to vector<16x8xbf16>
    %cst_119 = arith.constant dense<0.000000e+00> : vector<16x8xf32>
    %376 = tpu.matmul %374, %375, %cst_119 {dimension_numbers = #tpu.dot_dimension_numbers<[1], [0], [0], [1], [0, 0, 1, 1], [], []>} : vector<16x16xbf16>, vector<16x8xbf16>, vector<16x8xf32> -> vector<16x8xf32>
    %377 = arith.truncf %376 : vector<16x8xf32> to vector<16x8xbf16>
    %c24 = arith.constant 24 : index
    %c0_120 = arith.constant 0 : index
    %378 = vector.load %arg11[%c24, %c0_120] : memref<32x32xbf16, #tpu.memory_space<vmem>>, vector<8x32xbf16>
    %cst_121 = arith.constant dense<0.000000e+00> : vector<16x32xf32>
    %379 = tpu.matmul %377, %378, %cst_121 {dimension_numbers = #tpu.dot_dimension_numbers<[1], [0], [0], [1], [0, 0, 1, 1], [], []>} : vector<16x8xbf16>, vector<8x32xbf16>, vector<16x32xf32> -> vector<16x32xf32>
    %380 = arith.addf %359, %379 : vector<16x32xf32>
    %c0_122 = arith.constant 0 : index
    %c0_123 = arith.constant 0 : index
    %381 = vector.load %arg12[%c0_122, %c0_123] : memref<1x32xf32, #tpu.memory_space<vmem>>, vector<1x32xf32>
    %382 = vector.broadcast %381 : vector<1x32xf32> to vector<16x32xf32>
    %383 = arith.addf %380, %382 : vector<16x32xf32>
    %384 = arith.addf %283, %383 : vector<16x32xf32>
    %c0_124 = arith.constant 0 : index
    %c0_125 = arith.constant 0 : index
    %385 = vector.load %arg13[%c0_124, %c0_125] : memref<1x32xf32, #tpu.memory_space<vmem>>, vector<1x32xf32>
    %c0_126 = arith.constant 0 : index
    %c0_127 = arith.constant 0 : index
    %386 = vector.load %arg14[%c0_126, %c0_127] : memref<1x32xf32, #tpu.memory_space<vmem>>, vector<1x32xf32>
    %cst_128 = arith.constant dense<0.000000e+00> : vector<16xf32>
    %387 = vector.multi_reduction <add>, %384, %cst_128 [1] : vector<16x32xf32> to vector<16xf32>
    %388 = vector.shape_cast %387 : vector<16xf32> to vector<16x1xf32>
    %cst_129 = arith.constant 3.200000e+01 : f32
    %389 = vector.broadcast %cst_129 : f32 to vector<16x1xf32>
    %390 = arith.divf %388, %389 : vector<16x1xf32>
    %391 = vector.broadcast %390 : vector<16x1xf32> to vector<16x32xf32>
    %392 = arith.subf %384, %391 : vector<16x32xf32>
    %393 = arith.mulf %392, %392 : vector<16x32xf32>
    %cst_130 = arith.constant dense<0.000000e+00> : vector<16xf32>
    %394 = vector.multi_reduction <add>, %393, %cst_130 [1] : vector<16x32xf32> to vector<16xf32>
    %395 = vector.shape_cast %394 : vector<16xf32> to vector<16x1xf32>
    %cst_131 = arith.constant 3.200000e+01 : f32
    %396 = vector.broadcast %cst_131 : f32 to vector<16x1xf32>
    %397 = arith.divf %395, %396 : vector<16x1xf32>
    %cst_132 = arith.constant 9.99999974E-6 : f32
    %398 = vector.broadcast %cst_132 : f32 to vector<16x1xf32>
    %399 = arith.addf %397, %398 : vector<16x1xf32>
    %400 = math.rsqrt %399 : vector<16x1xf32>
    %401 = vector.broadcast %400 : vector<16x1xf32> to vector<16x32xf32>
    %402 = arith.mulf %392, %401 : vector<16x32xf32>
    %403 = vector.broadcast %385 : vector<1x32xf32> to vector<16x32xf32>
    %404 = arith.mulf %402, %403 : vector<16x32xf32>
    %405 = vector.broadcast %386 : vector<1x32xf32> to vector<16x32xf32>
    %406 = arith.addf %404, %405 : vector<16x32xf32>
    %407 = arith.truncf %406 : vector<16x32xf32> to vector<16x32xbf16>
    %c0_133 = arith.constant 0 : index
    %c0_134 = arith.constant 0 : index
    %408 = vector.load %arg15[%c0_133, %c0_134] : memref<32x128xbf16, #tpu.memory_space<vmem>>, vector<32x128xbf16>
    %cst_135 = arith.constant dense<0.000000e+00> : vector<16x128xf32>
    %409 = tpu.matmul %407, %408, %cst_135 {dimension_numbers = #tpu.dot_dimension_numbers<[1], [0], [0], [1], [0, 0, 1, 1], [], []>} : vector<16x32xbf16>, vector<32x128xbf16>, vector<16x128xf32> -> vector<16x128xf32>
    %c0_136 = arith.constant 0 : index
    %c0_137 = arith.constant 0 : index
    %410 = vector.load %arg16[%c0_136, %c0_137] : memref<1x128xf32, #tpu.memory_space<vmem>>, vector<1x128xf32>
    %411 = vector.broadcast %410 : vector<1x128xf32> to vector<16x128xf32>
    %412 = arith.addf %409, %411 : vector<16x128xf32>
    %cst_138 = arith.constant 0.000000e+00 : f32
    %413 = vector.broadcast %cst_138 : f32 to vector<16x128xf32>
    %414 = arith.maximumf %412, %413 : vector<16x128xf32>
    %415 = arith.truncf %414 : vector<16x128xf32> to vector<16x128xbf16>
    %c0_139 = arith.constant 0 : index
    %c0_140 = arith.constant 0 : index
    %416 = vector.load %arg17[%c0_139, %c0_140] : memref<128x32xbf16, #tpu.memory_space<vmem>>, vector<128x32xbf16>
    %cst_141 = arith.constant dense<0.000000e+00> : vector<16x32xf32>
    %417 = tpu.matmul %415, %416, %cst_141 {dimension_numbers = #tpu.dot_dimension_numbers<[1], [0], [0], [1], [0, 0, 1, 1], [], []>} : vector<16x128xbf16>, vector<128x32xbf16>, vector<16x32xf32> -> vector<16x32xf32>
    %c0_142 = arith.constant 0 : index
    %c0_143 = arith.constant 0 : index
    %418 = vector.load %arg18[%c0_142, %c0_143] : memref<1x32xf32, #tpu.memory_space<vmem>>, vector<1x32xf32>
    %419 = vector.broadcast %418 : vector<1x32xf32> to vector<16x32xf32>
    %420 = arith.addf %417, %419 : vector<16x32xf32>
    %421 = arith.addf %406, %420 : vector<16x32xf32>
    %c0_144 = arith.constant 0 : index
    %c0_145 = arith.constant 0 : index
    %422 = vector.load %arg19[%c0_144, %c0_145] : memref<1x32xf32, #tpu.memory_space<vmem>>, vector<1x32xf32>
    %c0_146 = arith.constant 0 : index
    %c0_147 = arith.constant 0 : index
    %423 = vector.load %arg20[%c0_146, %c0_147] : memref<1x32xf32, #tpu.memory_space<vmem>>, vector<1x32xf32>
    %cst_148 = arith.constant dense<0.000000e+00> : vector<16xf32>
    %424 = vector.multi_reduction <add>, %421, %cst_148 [1] : vector<16x32xf32> to vector<16xf32>
    %425 = vector.shape_cast %424 : vector<16xf32> to vector<16x1xf32>
    %cst_149 = arith.constant 3.200000e+01 : f32
    %426 = vector.broadcast %cst_149 : f32 to vector<16x1xf32>
    %427 = arith.divf %425, %426 : vector<16x1xf32>
    %428 = vector.broadcast %427 : vector<16x1xf32> to vector<16x32xf32>
    %429 = arith.subf %421, %428 : vector<16x32xf32>
    %430 = arith.mulf %429, %429 : vector<16x32xf32>
    %cst_150 = arith.constant dense<0.000000e+00> : vector<16xf32>
    %431 = vector.multi_reduction <add>, %430, %cst_150 [1] : vector<16x32xf32> to vector<16xf32>
    %432 = vector.shape_cast %431 : vector<16xf32> to vector<16x1xf32>
    %cst_151 = arith.constant 3.200000e+01 : f32
    %433 = vector.broadcast %cst_151 : f32 to vector<16x1xf32>
    %434 = arith.divf %432, %433 : vector<16x1xf32>
    %cst_152 = arith.constant 9.99999974E-6 : f32
    %435 = vector.broadcast %cst_152 : f32 to vector<16x1xf32>
    %436 = arith.addf %434, %435 : vector<16x1xf32>
    %437 = math.rsqrt %436 : vector<16x1xf32>
    %438 = vector.broadcast %437 : vector<16x1xf32> to vector<16x32xf32>
    %439 = arith.mulf %429, %438 : vector<16x32xf32>
    %440 = vector.broadcast %422 : vector<1x32xf32> to vector<16x32xf32>
    %441 = arith.mulf %439, %440 : vector<16x32xf32>
    %442 = vector.broadcast %423 : vector<1x32xf32> to vector<16x32xf32>
    %443 = arith.addf %441, %442 : vector<16x32xf32>
    %444 = arith.truncf %443 : vector<16x32xf32> to vector<16x32xbf16>
    %c0_153 = arith.constant 0 : index
    %c0_154 = arith.constant 0 : index
    %445 = vector.load %arg21[%c0_153, %c0_154] : memref<32x96xbf16, #tpu.memory_space<vmem>>, vector<32x96xbf16>
    %cst_155 = arith.constant dense<0.000000e+00> : vector<16x96xf32>
    %446 = tpu.matmul %444, %445, %cst_155 {dimension_numbers = #tpu.dot_dimension_numbers<[1], [0], [0], [1], [0, 0, 1, 1], [], []>} : vector<16x32xbf16>, vector<32x96xbf16>, vector<16x96xf32> -> vector<16x96xf32>
    %c0_156 = arith.constant 0 : index
    %c0_157 = arith.constant 0 : index
    %447 = vector.load %arg22[%c0_156, %c0_157] : memref<1x96xf32, #tpu.memory_space<vmem>>, vector<1x96xf32>
    %448 = vector.broadcast %447 : vector<1x96xf32> to vector<16x96xf32>
    %449 = arith.addf %446, %448 : vector<16x96xf32>
    %450 = vector.extract_strided_slice %449 {offsets = [0, 0], sizes = [16, 32], strides = [1, 1]} : vector<16x96xf32> to vector<16x32xf32>
    %cst_158 = arith.constant 0.353553385 : f32
    %451 = vector.broadcast %cst_158 : f32 to vector<16x32xf32>
    %452 = arith.mulf %450, %451 : vector<16x32xf32>
    %453 = arith.truncf %452 : vector<16x32xf32> to vector<16x32xbf16>
    %454 = vector.extract_strided_slice %449 {offsets = [0, 32], sizes = [16, 32], strides = [1, 1]} : vector<16x96xf32> to vector<16x32xf32>
    %455 = arith.truncf %454 : vector<16x32xf32> to vector<16x32xbf16>
    %456 = vector.extract_strided_slice %449 {offsets = [0, 64], sizes = [16, 32], strides = [1, 1]} : vector<16x96xf32> to vector<16x32xf32>
    %457 = arith.truncf %456 : vector<16x32xf32> to vector<16x32xbf16>
    %458 = vector.extract_strided_slice %453 {offsets = [0, 0], sizes = [16, 8], strides = [1, 1]} : vector<16x32xbf16> to vector<16x8xbf16>
    %459 = vector.extract_strided_slice %455 {offsets = [0, 0], sizes = [16, 8], strides = [1, 1]} : vector<16x32xbf16> to vector<16x8xbf16>
    %cst_159 = arith.constant dense<0.000000e+00> : vector<16x16xf32>
    %460 = tpu.matmul %458, %459, %cst_159 {dimension_numbers = #tpu.dot_dimension_numbers<[1], [1], [0], [0], [0, 0, 1, 0], [], []>} : vector<16x8xbf16>, vector<16x8xbf16>, vector<16x16xf32> -> vector<16x16xf32>
    %461 = arith.addf %460, %282 : vector<16x16xf32>
    %cst_160 = arith.constant dense<0xFF800000> : vector<16xf32>
    %462 = vector.multi_reduction <maximumf>, %461, %cst_160 [1] : vector<16x16xf32> to vector<16xf32>
    %463 = vector.shape_cast %462 : vector<16xf32> to vector<16x1xf32>
    %464 = vector.broadcast %463 : vector<16x1xf32> to vector<16x16xf32>
    %465 = arith.subf %461, %464 : vector<16x16xf32>
    %466 = math.exp %465 : vector<16x16xf32>
    %cst_161 = arith.constant dense<0.000000e+00> : vector<16xf32>
    %467 = vector.multi_reduction <add>, %466, %cst_161 [1] : vector<16x16xf32> to vector<16xf32>
    %468 = vector.shape_cast %467 : vector<16xf32> to vector<16x1xf32>
    %469 = tpu.reciprocal %468 {approx = true} : vector<16x1xf32> -> vector<16x1xf32>
    %470 = vector.broadcast %469 : vector<16x1xf32> to vector<16x16xf32>
    %471 = arith.mulf %466, %470 : vector<16x16xf32>
    %472 = arith.truncf %471 : vector<16x16xf32> to vector<16x16xbf16>
    %473 = vector.extract_strided_slice %457 {offsets = [0, 0], sizes = [16, 8], strides = [1, 1]} : vector<16x32xbf16> to vector<16x8xbf16>
    %cst_162 = arith.constant dense<0.000000e+00> : vector<16x8xf32>
    %474 = tpu.matmul %472, %473, %cst_162 {dimension_numbers = #tpu.dot_dimension_numbers<[1], [0], [0], [1], [0, 0, 1, 1], [], []>} : vector<16x16xbf16>, vector<16x8xbf16>, vector<16x8xf32> -> vector<16x8xf32>
    %475 = arith.truncf %474 : vector<16x8xf32> to vector<16x8xbf16>
    %c0_163 = arith.constant 0 : index
    %c0_164 = arith.constant 0 : index
    %476 = vector.load %arg23[%c0_163, %c0_164] : memref<32x32xbf16, #tpu.memory_space<vmem>>, vector<8x32xbf16>
    %cst_165 = arith.constant dense<0.000000e+00> : vector<16x32xf32>
    %477 = tpu.matmul %475, %476, %cst_165 {dimension_numbers = #tpu.dot_dimension_numbers<[1], [0], [0], [1], [0, 0, 1, 1], [], []>} : vector<16x8xbf16>, vector<8x32xbf16>, vector<16x32xf32> -> vector<16x32xf32>
    %478 = vector.extract_strided_slice %453 {offsets = [0, 8], sizes = [16, 8], strides = [1, 1]} : vector<16x32xbf16> to vector<16x8xbf16>
    %479 = vector.extract_strided_slice %455 {offsets = [0, 8], sizes = [16, 8], strides = [1, 1]} : vector<16x32xbf16> to vector<16x8xbf16>
    %cst_166 = arith.constant dense<0.000000e+00> : vector<16x16xf32>
    %480 = tpu.matmul %478, %479, %cst_166 {dimension_numbers = #tpu.dot_dimension_numbers<[1], [1], [0], [0], [0, 0, 1, 0], [], []>} : vector<16x8xbf16>, vector<16x8xbf16>, vector<16x16xf32> -> vector<16x16xf32>
    %481 = arith.addf %480, %282 : vector<16x16xf32>
    %cst_167 = arith.constant dense<0xFF800000> : vector<16xf32>
    %482 = vector.multi_reduction <maximumf>, %481, %cst_167 [1] : vector<16x16xf32> to vector<16xf32>
    %483 = vector.shape_cast %482 : vector<16xf32> to vector<16x1xf32>
    %484 = vector.broadcast %483 : vector<16x1xf32> to vector<16x16xf32>
    %485 = arith.subf %481, %484 : vector<16x16xf32>
    %486 = math.exp %485 : vector<16x16xf32>
    %cst_168 = arith.constant dense<0.000000e+00> : vector<16xf32>
    %487 = vector.multi_reduction <add>, %486, %cst_168 [1] : vector<16x16xf32> to vector<16xf32>
    %488 = vector.shape_cast %487 : vector<16xf32> to vector<16x1xf32>
    %489 = tpu.reciprocal %488 {approx = true} : vector<16x1xf32> -> vector<16x1xf32>
    %490 = vector.broadcast %489 : vector<16x1xf32> to vector<16x16xf32>
    %491 = arith.mulf %486, %490 : vector<16x16xf32>
    %492 = arith.truncf %491 : vector<16x16xf32> to vector<16x16xbf16>
    %493 = vector.extract_strided_slice %457 {offsets = [0, 8], sizes = [16, 8], strides = [1, 1]} : vector<16x32xbf16> to vector<16x8xbf16>
    %cst_169 = arith.constant dense<0.000000e+00> : vector<16x8xf32>
    %494 = tpu.matmul %492, %493, %cst_169 {dimension_numbers = #tpu.dot_dimension_numbers<[1], [0], [0], [1], [0, 0, 1, 1], [], []>} : vector<16x16xbf16>, vector<16x8xbf16>, vector<16x8xf32> -> vector<16x8xf32>
    %495 = arith.truncf %494 : vector<16x8xf32> to vector<16x8xbf16>
    %c8_170 = arith.constant 8 : index
    %c0_171 = arith.constant 0 : index
    %496 = vector.load %arg23[%c8_170, %c0_171] : memref<32x32xbf16, #tpu.memory_space<vmem>>, vector<8x32xbf16>
    %cst_172 = arith.constant dense<0.000000e+00> : vector<16x32xf32>
    %497 = tpu.matmul %495, %496, %cst_172 {dimension_numbers = #tpu.dot_dimension_numbers<[1], [0], [0], [1], [0, 0, 1, 1], [], []>} : vector<16x8xbf16>, vector<8x32xbf16>, vector<16x32xf32> -> vector<16x32xf32>
    %498 = arith.addf %477, %497 : vector<16x32xf32>
    %499 = vector.extract_strided_slice %453 {offsets = [0, 16], sizes = [16, 8], strides = [1, 1]} : vector<16x32xbf16> to vector<16x8xbf16>
    %500 = vector.extract_strided_slice %455 {offsets = [0, 16], sizes = [16, 8], strides = [1, 1]} : vector<16x32xbf16> to vector<16x8xbf16>
    %cst_173 = arith.constant dense<0.000000e+00> : vector<16x16xf32>
    %501 = tpu.matmul %499, %500, %cst_173 {dimension_numbers = #tpu.dot_dimension_numbers<[1], [1], [0], [0], [0, 0, 1, 0], [], []>} : vector<16x8xbf16>, vector<16x8xbf16>, vector<16x16xf32> -> vector<16x16xf32>
    %502 = arith.addf %501, %282 : vector<16x16xf32>
    %cst_174 = arith.constant dense<0xFF800000> : vector<16xf32>
    %503 = vector.multi_reduction <maximumf>, %502, %cst_174 [1] : vector<16x16xf32> to vector<16xf32>
    %504 = vector.shape_cast %503 : vector<16xf32> to vector<16x1xf32>
    %505 = vector.broadcast %504 : vector<16x1xf32> to vector<16x16xf32>
    %506 = arith.subf %502, %505 : vector<16x16xf32>
    %507 = math.exp %506 : vector<16x16xf32>
    %cst_175 = arith.constant dense<0.000000e+00> : vector<16xf32>
    %508 = vector.multi_reduction <add>, %507, %cst_175 [1] : vector<16x16xf32> to vector<16xf32>
    %509 = vector.shape_cast %508 : vector<16xf32> to vector<16x1xf32>
    %510 = tpu.reciprocal %509 {approx = true} : vector<16x1xf32> -> vector<16x1xf32>
    %511 = vector.broadcast %510 : vector<16x1xf32> to vector<16x16xf32>
    %512 = arith.mulf %507, %511 : vector<16x16xf32>
    %513 = arith.truncf %512 : vector<16x16xf32> to vector<16x16xbf16>
    %514 = vector.extract_strided_slice %457 {offsets = [0, 16], sizes = [16, 8], strides = [1, 1]} : vector<16x32xbf16> to vector<16x8xbf16>
    %cst_176 = arith.constant dense<0.000000e+00> : vector<16x8xf32>
    %515 = tpu.matmul %513, %514, %cst_176 {dimension_numbers = #tpu.dot_dimension_numbers<[1], [0], [0], [1], [0, 0, 1, 1], [], []>} : vector<16x16xbf16>, vector<16x8xbf16>, vector<16x8xf32> -> vector<16x8xf32>
    %516 = arith.truncf %515 : vector<16x8xf32> to vector<16x8xbf16>
    %c16_177 = arith.constant 16 : index
    %c0_178 = arith.constant 0 : index
    %517 = vector.load %arg23[%c16_177, %c0_178] : memref<32x32xbf16, #tpu.memory_space<vmem>>, vector<8x32xbf16>
    %cst_179 = arith.constant dense<0.000000e+00> : vector<16x32xf32>
    %518 = tpu.matmul %516, %517, %cst_179 {dimension_numbers = #tpu.dot_dimension_numbers<[1], [0], [0], [1], [0, 0, 1, 1], [], []>} : vector<16x8xbf16>, vector<8x32xbf16>, vector<16x32xf32> -> vector<16x32xf32>
    %519 = arith.addf %498, %518 : vector<16x32xf32>
    %520 = vector.extract_strided_slice %453 {offsets = [0, 24], sizes = [16, 8], strides = [1, 1]} : vector<16x32xbf16> to vector<16x8xbf16>
    %521 = vector.extract_strided_slice %455 {offsets = [0, 24], sizes = [16, 8], strides = [1, 1]} : vector<16x32xbf16> to vector<16x8xbf16>
    %cst_180 = arith.constant dense<0.000000e+00> : vector<16x16xf32>
    %522 = tpu.matmul %520, %521, %cst_180 {dimension_numbers = #tpu.dot_dimension_numbers<[1], [1], [0], [0], [0, 0, 1, 0], [], []>} : vector<16x8xbf16>, vector<16x8xbf16>, vector<16x16xf32> -> vector<16x16xf32>
    %523 = arith.addf %522, %282 : vector<16x16xf32>
    %cst_181 = arith.constant dense<0xFF800000> : vector<16xf32>
    %524 = vector.multi_reduction <maximumf>, %523, %cst_181 [1] : vector<16x16xf32> to vector<16xf32>
    %525 = vector.shape_cast %524 : vector<16xf32> to vector<16x1xf32>
    %526 = vector.broadcast %525 : vector<16x1xf32> to vector<16x16xf32>
    %527 = arith.subf %523, %526 : vector<16x16xf32>
    %528 = math.exp %527 : vector<16x16xf32>
    %cst_182 = arith.constant dense<0.000000e+00> : vector<16xf32>
    %529 = vector.multi_reduction <add>, %528, %cst_182 [1] : vector<16x16xf32> to vector<16xf32>
    %530 = vector.shape_cast %529 : vector<16xf32> to vector<16x1xf32>
    %531 = tpu.reciprocal %530 {approx = true} : vector<16x1xf32> -> vector<16x1xf32>
    %532 = vector.broadcast %531 : vector<16x1xf32> to vector<16x16xf32>
    %533 = arith.mulf %528, %532 : vector<16x16xf32>
    %534 = arith.truncf %533 : vector<16x16xf32> to vector<16x16xbf16>
    %535 = vector.extract_strided_slice %457 {offsets = [0, 24], sizes = [16, 8], strides = [1, 1]} : vector<16x32xbf16> to vector<16x8xbf16>
    %cst_183 = arith.constant dense<0.000000e+00> : vector<16x8xf32>
    %536 = tpu.matmul %534, %535, %cst_183 {dimension_numbers = #tpu.dot_dimension_numbers<[1], [0], [0], [1], [0, 0, 1, 1], [], []>} : vector<16x16xbf16>, vector<16x8xbf16>, vector<16x8xf32> -> vector<16x8xf32>
    %537 = arith.truncf %536 : vector<16x8xf32> to vector<16x8xbf16>
    %c24_184 = arith.constant 24 : index
    %c0_185 = arith.constant 0 : index
    %538 = vector.load %arg23[%c24_184, %c0_185] : memref<32x32xbf16, #tpu.memory_space<vmem>>, vector<8x32xbf16>
    %cst_186 = arith.constant dense<0.000000e+00> : vector<16x32xf32>
    %539 = tpu.matmul %537, %538, %cst_186 {dimension_numbers = #tpu.dot_dimension_numbers<[1], [0], [0], [1], [0, 0, 1, 1], [], []>} : vector<16x8xbf16>, vector<8x32xbf16>, vector<16x32xf32> -> vector<16x32xf32>
    %540 = arith.addf %519, %539 : vector<16x32xf32>
    %c0_187 = arith.constant 0 : index
    %c0_188 = arith.constant 0 : index
    %541 = vector.load %arg24[%c0_187, %c0_188] : memref<1x32xf32, #tpu.memory_space<vmem>>, vector<1x32xf32>
    %542 = vector.broadcast %541 : vector<1x32xf32> to vector<16x32xf32>
    %543 = arith.addf %540, %542 : vector<16x32xf32>
    %544 = arith.addf %443, %543 : vector<16x32xf32>
    %c0_189 = arith.constant 0 : index
    %c0_190 = arith.constant 0 : index
    %545 = vector.load %arg25[%c0_189, %c0_190] : memref<1x32xf32, #tpu.memory_space<vmem>>, vector<1x32xf32>
    %c0_191 = arith.constant 0 : index
    %c0_192 = arith.constant 0 : index
    %546 = vector.load %arg26[%c0_191, %c0_192] : memref<1x32xf32, #tpu.memory_space<vmem>>, vector<1x32xf32>
    %cst_193 = arith.constant dense<0.000000e+00> : vector<16xf32>
    %547 = vector.multi_reduction <add>, %544, %cst_193 [1] : vector<16x32xf32> to vector<16xf32>
    %548 = vector.shape_cast %547 : vector<16xf32> to vector<16x1xf32>
    %cst_194 = arith.constant 3.200000e+01 : f32
    %549 = vector.broadcast %cst_194 : f32 to vector<16x1xf32>
    %550 = arith.divf %548, %549 : vector<16x1xf32>
    %551 = vector.broadcast %550 : vector<16x1xf32> to vector<16x32xf32>
    %552 = arith.subf %544, %551 : vector<16x32xf32>
    %553 = arith.mulf %552, %552 : vector<16x32xf32>
    %cst_195 = arith.constant dense<0.000000e+00> : vector<16xf32>
    %554 = vector.multi_reduction <add>, %553, %cst_195 [1] : vector<16x32xf32> to vector<16xf32>
    %555 = vector.shape_cast %554 : vector<16xf32> to vector<16x1xf32>
    %cst_196 = arith.constant 3.200000e+01 : f32
    %556 = vector.broadcast %cst_196 : f32 to vector<16x1xf32>
    %557 = arith.divf %555, %556 : vector<16x1xf32>
    %cst_197 = arith.constant 9.99999974E-6 : f32
    %558 = vector.broadcast %cst_197 : f32 to vector<16x1xf32>
    %559 = arith.addf %557, %558 : vector<16x1xf32>
    %560 = math.rsqrt %559 : vector<16x1xf32>
    %561 = vector.broadcast %560 : vector<16x1xf32> to vector<16x32xf32>
    %562 = arith.mulf %552, %561 : vector<16x32xf32>
    %563 = vector.broadcast %545 : vector<1x32xf32> to vector<16x32xf32>
    %564 = arith.mulf %562, %563 : vector<16x32xf32>
    %565 = vector.broadcast %546 : vector<1x32xf32> to vector<16x32xf32>
    %566 = arith.addf %564, %565 : vector<16x32xf32>
    %567 = arith.truncf %566 : vector<16x32xf32> to vector<16x32xbf16>
    %c0_198 = arith.constant 0 : index
    %c0_199 = arith.constant 0 : index
    %568 = vector.load %arg27[%c0_198, %c0_199] : memref<32x128xbf16, #tpu.memory_space<vmem>>, vector<32x128xbf16>
    %cst_200 = arith.constant dense<0.000000e+00> : vector<16x128xf32>
    %569 = tpu.matmul %567, %568, %cst_200 {dimension_numbers = #tpu.dot_dimension_numbers<[1], [0], [0], [1], [0, 0, 1, 1], [], []>} : vector<16x32xbf16>, vector<32x128xbf16>, vector<16x128xf32> -> vector<16x128xf32>
    %c0_201 = arith.constant 0 : index
    %c0_202 = arith.constant 0 : index
    %570 = vector.load %arg28[%c0_201, %c0_202] : memref<1x128xf32, #tpu.memory_space<vmem>>, vector<1x128xf32>
    %571 = vector.broadcast %570 : vector<1x128xf32> to vector<16x128xf32>
    %572 = arith.addf %569, %571 : vector<16x128xf32>
    %cst_203 = arith.constant 0.000000e+00 : f32
    %573 = vector.broadcast %cst_203 : f32 to vector<16x128xf32>
    %574 = arith.maximumf %572, %573 : vector<16x128xf32>
    %575 = arith.truncf %574 : vector<16x128xf32> to vector<16x128xbf16>
    %c0_204 = arith.constant 0 : index
    %c0_205 = arith.constant 0 : index
    %576 = vector.load %arg29[%c0_204, %c0_205] : memref<128x32xbf16, #tpu.memory_space<vmem>>, vector<128x32xbf16>
    %cst_206 = arith.constant dense<0.000000e+00> : vector<16x32xf32>
    %577 = tpu.matmul %575, %576, %cst_206 {dimension_numbers = #tpu.dot_dimension_numbers<[1], [0], [0], [1], [0, 0, 1, 1], [], []>} : vector<16x128xbf16>, vector<128x32xbf16>, vector<16x32xf32> -> vector<16x32xf32>
    %c0_207 = arith.constant 0 : index
    %c0_208 = arith.constant 0 : index
    %578 = vector.load %arg30[%c0_207, %c0_208] : memref<1x32xf32, #tpu.memory_space<vmem>>, vector<1x32xf32>
    %579 = vector.broadcast %578 : vector<1x32xf32> to vector<16x32xf32>
    %580 = arith.addf %577, %579 : vector<16x32xf32>
    %581 = arith.addf %566, %580 : vector<16x32xf32>
    %c0_209 = arith.constant 0 : index
    %c0_210 = arith.constant 0 : index
    %582 = vector.load %arg31[%c0_209, %c0_210] : memref<1x32xf32, #tpu.memory_space<vmem>>, vector<1x32xf32>
    %c0_211 = arith.constant 0 : index
    %c0_212 = arith.constant 0 : index
    %583 = vector.load %arg32[%c0_211, %c0_212] : memref<1x32xf32, #tpu.memory_space<vmem>>, vector<1x32xf32>
    %cst_213 = arith.constant dense<0.000000e+00> : vector<16xf32>
    %584 = vector.multi_reduction <add>, %581, %cst_213 [1] : vector<16x32xf32> to vector<16xf32>
    %585 = vector.shape_cast %584 : vector<16xf32> to vector<16x1xf32>
    %cst_214 = arith.constant 3.200000e+01 : f32
    %586 = vector.broadcast %cst_214 : f32 to vector<16x1xf32>
    %587 = arith.divf %585, %586 : vector<16x1xf32>
    %588 = vector.broadcast %587 : vector<16x1xf32> to vector<16x32xf32>
    %589 = arith.subf %581, %588 : vector<16x32xf32>
    %590 = arith.mulf %589, %589 : vector<16x32xf32>
    %cst_215 = arith.constant dense<0.000000e+00> : vector<16xf32>
    %591 = vector.multi_reduction <add>, %590, %cst_215 [1] : vector<16x32xf32> to vector<16xf32>
    %592 = vector.shape_cast %591 : vector<16xf32> to vector<16x1xf32>
    %cst_216 = arith.constant 3.200000e+01 : f32
    %593 = vector.broadcast %cst_216 : f32 to vector<16x1xf32>
    %594 = arith.divf %592, %593 : vector<16x1xf32>
    %cst_217 = arith.constant 9.99999974E-6 : f32
    %595 = vector.broadcast %cst_217 : f32 to vector<16x1xf32>
    %596 = arith.addf %594, %595 : vector<16x1xf32>
    %597 = math.rsqrt %596 : vector<16x1xf32>
    %598 = vector.broadcast %597 : vector<16x1xf32> to vector<16x32xf32>
    %599 = arith.mulf %589, %598 : vector<16x32xf32>
    %600 = vector.broadcast %582 : vector<1x32xf32> to vector<16x32xf32>
    %601 = arith.mulf %599, %600 : vector<16x32xf32>
    %602 = vector.broadcast %583 : vector<1x32xf32> to vector<16x32xf32>
    %603 = arith.addf %601, %602 : vector<16x32xf32>
    %604 = vector.extract_strided_slice %603 {offsets = [14, 0], sizes = [2, 32], strides = [1, 1]} : vector<16x32xf32> to vector<2x32xf32>
    %605 = arith.truncf %604 : vector<2x32xf32> to vector<2x32xbf16>
    %c0_218 = arith.constant 0 : index
    %c0_219 = arith.constant 0 : index
    %606 = vector.load %arg33[%c0_218, %c0_219] : memref<32x4xbf16, #tpu.memory_space<vmem>>, vector<32x4xbf16>
    %cst_220 = arith.constant dense<0.000000e+00> : vector<2x4xf32>
    %607 = tpu.matmul %605, %606, %cst_220 {dimension_numbers = #tpu.dot_dimension_numbers<[1], [0], [0], [1], [0, 0, 1, 1], [], []>} : vector<2x32xbf16>, vector<32x4xbf16>, vector<2x4xf32> -> vector<2x4xf32>
    %c0_221 = arith.constant 0 : index
    %c0_222 = arith.constant 0 : index
    %608 = vector.load %arg34[%c0_221, %c0_222] : memref<1x4xf32, #tpu.memory_space<vmem>>, vector<1x4xf32>
    %609 = vector.broadcast %608 : vector<1x4xf32> to vector<2x4xf32>
    %610 = arith.addf %607, %609 : vector<2x4xf32>
    %cst_223 = arith.constant 0.000000e+00 : f32
    %611 = vector.broadcast %cst_223 : f32 to vector<2x60xf32>
    %612 = tpu.concatenate %610, %277, %275, %611 in 1 : vector<2x4xf32>, vector<2x32xf32>, vector<2x32xf32>, vector<2x60xf32> -> vector<2x128xf32>
    %c0_224 = arith.constant 0 : index
    %c0_225 = arith.constant 0 : index
    %613 = vector.load %arg35[%c0_224, %c0_225] : memref<2x128xf32, #tpu.memory_space<vmem>>, vector<2x128xf32>
    tpu.vector_store %arg35[%c0_224, %c0_225], %612 {strides = array<i32>} : memref<2x128xf32, #tpu.memory_space<vmem>>, vector<2x128xf32>,
    return
  }
  func.func @transform_0(%arg0: i32) -> (i32, i32, i32) {
    %c0_i32 = arith.constant 0 : i32
    %c0_i32_0 = arith.constant 0 : i32
    %c0_i32_1 = arith.constant 0 : i32
    return %c0_i32, %arg0, %c0_i32_0 : i32, i32, i32
  }
  func.func @transform_1(%arg0: i32) -> (i32, i32) {
    %c0_i32 = arith.constant 0 : i32
    %c0_i32_0 = arith.constant 0 : i32
    %c0_i32_1 = arith.constant 0 : i32
    return %c0_i32, %c0_i32_0 : i32, i32
  }
  func.func @transform_2(%arg0: i32) -> (i32, i32) {
    %c0_i32 = arith.constant 0 : i32
    %c0_i32_0 = arith.constant 0 : i32
    %c0_i32_1 = arith.constant 0 : i32
    return %c0_i32, %c0_i32_0 : i32, i32
  }
  func.func @transform_3(%arg0: i32) -> (i32, i32) {
    %c0_i32 = arith.constant 0 : i32
    %c0_i32_0 = arith.constant 0 : i32
    %c0_i32_1 = arith.constant 0 : i32
    return %c0_i32, %c0_i32_0 : i32, i32
  }
  func.func @transform_4(%arg0: i32) -> (i32, i32) {
    %c0_i32 = arith.constant 0 : i32
    %c0_i32_0 = arith.constant 0 : i32
    %c0_i32_1 = arith.constant 0 : i32
    return %c0_i32, %c0_i32_0 : i32, i32
  }
  func.func @transform_5(%arg0: i32) -> (i32, i32) {
    %c0_i32 = arith.constant 0 : i32
    %c0_i32_0 = arith.constant 0 : i32
    %c0_i32_1 = arith.constant 0 : i32
    return %c0_i32, %c0_i32_0 : i32, i32
  }
  func.func @transform_6(%arg0: i32) -> (i32, i32) {
    %c0_i32 = arith.constant 0 : i32
    %c0_i32_0 = arith.constant 0 : i32
    %c0_i32_1 = arith.constant 0 : i32
    return %c0_i32, %c0_i32_0 : i32, i32
  }
  func.func @transform_7(%arg0: i32) -> (i32, i32) {
    %c0_i32 = arith.constant 0 : i32
    %c0_i32_0 = arith.constant 0 : i32
    %c0_i32_1 = arith.constant 0 : i32
    return %c0_i32, %c0_i32_0 : i32, i32
  }
  func.func @transform_8(%arg0: i32) -> (i32, i32) {
    %c0_i32 = arith.constant 0 : i32
    %c0_i32_0 = arith.constant 0 : i32
    %c0_i32_1 = arith.constant 0 : i32
    return %c0_i32, %c0_i32_0 : i32, i32
  }
  func.func @transform_9(%arg0: i32) -> (i32, i32) {
    %c0_i32 = arith.constant 0 : i32
    %c0_i32_0 = arith.constant 0 : i32
    %c0_i32_1 = arith.constant 0 : i32
    return %c0_i32, %c0_i32_0 : i32, i32
  }
  func.func @transform_10(%arg0: i32) -> (i32, i32) {
    %c0_i32 = arith.constant 0 : i32
    %c0_i32_0 = arith.constant 0 : i32
    %c0_i32_1 = arith.constant 0 : i32
    return %c0_i32, %c0_i32_0 : i32, i32
  }
  func.func @transform_11(%arg0: i32) -> (i32, i32) {
    %c0_i32 = arith.constant 0 : i32
    %c0_i32_0 = arith.constant 0 : i32
    %c0_i32_1 = arith.constant 0 : i32
    return %c0_i32, %c0_i32_0 : i32, i32
  }
  func.func @transform_12(%arg0: i32) -> (i32, i32) {
    %c0_i32 = arith.constant 0 : i32
    %c0_i32_0 = arith.constant 0 : i32
    %c0_i32_1 = arith.constant 0 : i32
    return %c0_i32, %c0_i32_0 : i32, i32
  }
  func.func @transform_13(%arg0: i32) -> (i32, i32) {
    %c0_i32 = arith.constant 0 : i32
    %c0_i32_0 = arith.constant 0 : i32
    %c0_i32_1 = arith.constant 0 : i32
    return %c0_i32, %c0_i32_0 : i32, i32
  }
  func.func @transform_14(%arg0: i32) -> (i32, i32) {
    %c0_i32 = arith.constant 0 : i32
    %c0_i32_0 = arith.constant 0 : i32
    %c0_i32_1 = arith.constant 0 : i32
    return %c0_i32, %c0_i32_0 : i32, i32
  }
  func.func @transform_15(%arg0: i32) -> (i32, i32) {
    %c0_i32 = arith.constant 0 : i32
    %c0_i32_0 = arith.constant 0 : i32
    %c0_i32_1 = arith.constant 0 : i32
    return %c0_i32, %c0_i32_0 : i32, i32
  }
  func.func @transform_16(%arg0: i32) -> (i32, i32) {
    %c0_i32 = arith.constant 0 : i32
    %c0_i32_0 = arith.constant 0 : i32
    %c0_i32_1 = arith.constant 0 : i32
    return %c0_i32, %c0_i32_0 : i32, i32
  }
  func.func @transform_17(%arg0: i32) -> (i32, i32) {
    %c0_i32 = arith.constant 0 : i32
    %c0_i32_0 = arith.constant 0 : i32
    %c0_i32_1 = arith.constant 0 : i32
    return %c0_i32, %c0_i32_0 : i32, i32
  }
  func.func @transform_18(%arg0: i32) -> (i32, i32) {
    %c0_i32 = arith.constant 0 : i32
    %c0_i32_0 = arith.constant 0 : i32
    %c0_i32_1 = arith.constant 0 : i32
    return %c0_i32, %c0_i32_0 : i32, i32
  }
  func.func @transform_19(%arg0: i32) -> (i32, i32) {
    %c0_i32 = arith.constant 0 : i32
    %c0_i32_0 = arith.constant 0 : i32
    %c0_i32_1 = arith.constant 0 : i32
    return %c0_i32, %c0_i32_0 : i32, i32
  }
  func.func @transform_20(%arg0: i32) -> (i32, i32) {
    %c0_i32 = arith.constant 0 : i32
    %c0_i32_0 = arith.constant 0 : i32
    %c0_i32_1 = arith.constant 0 : i32
    return %c0_i32, %c0_i32_0 : i32, i32
  }
  func.func @transform_21(%arg0: i32) -> (i32, i32) {
    %c0_i32 = arith.constant 0 : i32
    %c0_i32_0 = arith.constant 0 : i32
    %c0_i32_1 = arith.constant 0 : i32
    return %c0_i32, %c0_i32_0 : i32, i32
  }
  func.func @transform_22(%arg0: i32) -> (i32, i32) {
    %c0_i32 = arith.constant 0 : i32
    %c0_i32_0 = arith.constant 0 : i32
    %c0_i32_1 = arith.constant 0 : i32
    return %c0_i32, %c0_i32_0 : i32, i32
  }
  func.func @transform_23(%arg0: i32) -> (i32, i32) {
    %c0_i32 = arith.constant 0 : i32
    %c0_i32_0 = arith.constant 0 : i32
    %c0_i32_1 = arith.constant 0 : i32
    return %c0_i32, %c0_i32_0 : i32, i32
  }
  func.func @transform_24(%arg0: i32) -> (i32, i32) {
    %c0_i32 = arith.constant 0 : i32
    %c0_i32_0 = arith.constant 0 : i32
    %c0_i32_1 = arith.constant 0 : i32
    return %c0_i32, %c0_i32_0 : i32, i32
  }
  func.func @transform_25(%arg0: i32) -> (i32, i32) {
    %c0_i32 = arith.constant 0 : i32
    %c0_i32_0 = arith.constant 0 : i32
    %c0_i32_1 = arith.constant 0 : i32
    return %c0_i32, %c0_i32_0 : i32, i32
  }
  func.func @transform_26(%arg0: i32) -> (i32, i32) {
    %c0_i32 = arith.constant 0 : i32
    %c0_i32_0 = arith.constant 0 : i32
    %c0_i32_1 = arith.constant 0 : i32
    return %c0_i32, %c0_i32_0 : i32, i32
  }
  func.func @transform_27(%arg0: i32) -> (i32, i32) {
    %c0_i32 = arith.constant 0 : i32
    %c0_i32_0 = arith.constant 0 : i32
    %c0_i32_1 = arith.constant 0 : i32
    return %c0_i32, %c0_i32_0 : i32, i32
  }
  func.func @transform_28(%arg0: i32) -> (i32, i32) {
    %c0_i32 = arith.constant 0 : i32
    %c0_i32_0 = arith.constant 0 : i32
    %c0_i32_1 = arith.constant 0 : i32
    return %c0_i32, %c0_i32_0 : i32, i32
  }
  func.func @transform_29(%arg0: i32) -> (i32, i32) {
    %c0_i32 = arith.constant 0 : i32
    %c0_i32_0 = arith.constant 0 : i32
    %c0_i32_1 = arith.constant 0 : i32
    return %c0_i32, %c0_i32_0 : i32, i32
  }
  func.func @transform_30(%arg0: i32) -> (i32, i32) {
    %c0_i32 = arith.constant 0 : i32
    %c0_i32_0 = arith.constant 0 : i32
    %c0_i32_1 = arith.constant 0 : i32
    return %c0_i32, %c0_i32_0 : i32, i32
  }
  func.func @transform_31(%arg0: i32) -> (i32, i32) {
    %c0_i32 = arith.constant 0 : i32
    %c0_i32_0 = arith.constant 0 : i32
    %c0_i32_1 = arith.constant 0 : i32
    return %c0_i32, %c0_i32_0 : i32, i32
  }
  func.func @transform_32(%arg0: i32) -> (i32, i32) {
    %c0_i32 = arith.constant 0 : i32
    %c0_i32_0 = arith.constant 0 : i32
    %c0_i32_1 = arith.constant 0 : i32
    return %c0_i32, %c0_i32_0 : i32, i32
  }
  func.func @transform_33(%arg0: i32) -> (i32, i32) {
    %c0_i32 = arith.constant 0 : i32
    %c0_i32_0 = arith.constant 0 : i32
    %c0_i32_1 = arith.constant 0 : i32
    return %c0_i32, %c0_i32_0 : i32, i32
  }
  func.func @transform_34(%arg0: i32) -> (i32, i32) {
    %c0_i32 = arith.constant 0 : i32
    %c0_i32_0 = arith.constant 0 : i32
    return %arg0, %c0_i32 : i32, i32
  }
}

</mosaic_0001>

<llo_original>
// kernel: forward.1
$region0: #{forward.1}
  #allocation0 [shape = 'u32[]', space=smem, size = 0x4, offset = 0x4, fixed_abs, tag = 'smem constant byte address 0x4 - core index']
  #allocation1 [shape = 'u32[144,128]{1,0:T(1,128)}', space=vmem, size = 0x12000, scoped, tag = 'internal scratch']
  #allocation2 [shape = 'f32[16,128]{1,0:T(8,128)}', space=vmem, size = 0x2000, scoped, tag = 'scratch operand']
  #allocation3 [shape = 'f32[16,32]{1,0:T(8,128)}', space=vmem, size = 0x2000, scoped, tag = 'scratch operand']
  %s0 = inlined_call_operand.smem [shape: u32[35], index: -1, kind: input, shape index: {}]
  %s1 = sld [smem:[%s0]]
  %s2 = scalar_lea.smem %s0, 1
  %s3 = sld [smem:[%s2]]
  %s4 = scalar_lea.smem %s0, 2
  %s5 = sld [smem:[%s4]]
  %s6 = scalar_lea.smem %s0, 3
  %s7 = sld [smem:[%s6]]
  %s8 = scalar_lea.smem %s0, 4
  %s9 = sld [smem:[%s8]]
  %s10 = scalar_lea.smem %s0, 5
  %s11 = sld [smem:[%s10]]
  %s12 = scalar_lea.smem %s0, 6
  %s13 = sld [smem:[%s12]]
  %s14 = scalar_lea.smem %s0, 7
  %s15 = sld [smem:[%s14]]
  %s16 = scalar_lea.smem %s0, 8
  %s17 = sld [smem:[%s16]]
  %s18 = scalar_lea.smem %s0, 9
  %s19 = sld [smem:[%s18]]
  %s20 = scalar_lea.smem %s0, 10
  %s21 = sld [smem:[%s20]]
  %s22 = scalar_lea.smem %s0, 11
  %s23 = sld [smem:[%s22]]
  %s24 = scalar_lea.smem %s0, 12
  %s25 = sld [smem:[%s24]]
  %s26 = scalar_lea.smem %s0, 13
  %s27 = sld [smem:[%s26]]
  %s28 = scalar_lea.smem %s0, 14
  %s29 = sld [smem:[%s28]]
  %s30 = scalar_lea.smem %s0, 15
  %s31 = sld [smem:[%s30]]
  %s32 = scalar_lea.smem %s0, 16
  %s33 = sld [smem:[%s32]]
  %s34 = scalar_lea.smem %s0, 17
  %s35 = sld [smem:[%s34]]
  %s36 = scalar_lea.smem %s0, 18
  %s37 = sld [smem:[%s36]]
  %s38 = scalar_lea.smem %s0, 19
  %s39 = sld [smem:[%s38]]
  %s40 = scalar_lea.smem %s0, 20
  %s41 = sld [smem:[%s40]]
  %s42 = scalar_lea.smem %s0, 21
  %s43 = sld [smem:[%s42]]
  %s44 = scalar_lea.smem %s0, 22
  %s45 = sld [smem:[%s44]]
  %s46 = scalar_lea.smem %s0, 23
  %s47 = sld [smem:[%s46]]
  %s48 = scalar_lea.smem %s0, 24
  %s49 = sld [smem:[%s48]]
  %s50 = scalar_lea.smem %s0, 25
  %s51 = sld [smem:[%s50]]
  %s52 = scalar_lea.smem %s0, 26
  %s53 = sld [smem:[%s52]]
  %s54 = scalar_lea.smem %s0, 27
  %s55 = sld [smem:[%s54]]
  %s56 = scalar_lea.smem %s0, 28
  %s57 = sld [smem:[%s56]]
  %s58 = scalar_lea.smem %s0, 29
  %s59 = sld [smem:[%s58]]
  %s60 = scalar_lea.smem %s0, 30
  %s61 = sld [smem:[%s60]]
  %s62 = scalar_lea.smem %s0, 31
  %s63 = sld [smem:[%s62]]
  %s64 = scalar_lea.smem %s0, 32
  %s65 = sld [smem:[%s64]]
  %s66 = scalar_lea.smem %s0, 33
  %s67 = sld [smem:[%s66]]
  %s68 = scalar_lea.smem %s0, 34
  %s69 = sld [smem:[%s68]]
  %s70 = sld [smem:[#allocation0]]
  $region146: #{forward.1} parent=0
    _
  %s72 = ssub.s32 1, %s70
  %s73 = scalar_select 0, %s72, %s70
  // Predicated region
  $region2: #{forward.1} parent=0 // pred_check
    _
  $region3: #{forward.1} parent=0 // pred_check_branch
    %75 = sbr.rel (0) target = $region5
  $region4: #{forward.1} parent=0 // pred_region
    _
  $region5: #{forward.1} parent=0 // pred_fallthru
    _
  // Predicated region
  $region6: #{forward.1} parent=0 // pred_check
    _
  $region7: #{forward.1} parent=0 // pred_check_branch
    %77 = sbr.rel (0) target = $region9
  $region8: #{forward.1} parent=0 // pred_region
    _
  $region9: #{forward.1} parent=0 // pred_fallthru
    _
  // Predicated region
  $region10: #{forward.1} parent=0 // pred_check
    _
  $region11: #{forward.1} parent=0 // pred_check_branch
    %79 = sbr.rel (0) target = $region13
  $region12: #{forward.1} parent=0 // pred_region
    _
  $region13: #{forward.1} parent=0 // pred_fallthru
    _
  // Predicated region
  $region14: #{forward.1} parent=0 // pred_check
    _
  $region15: #{forward.1} parent=0 // pred_check_branch
    %81 = sbr.rel (0) target = $region17
  $region16: #{forward.1} parent=0 // pred_region
    _
  $region17: #{forward.1} parent=0 // pred_fallthru
    _
  // Predicated region
  $region18: #{forward.1} parent=0 // pred_check
    _
  $region19: #{forward.1} parent=0 // pred_check_branch
    %83 = sbr.rel (0) target = $region21
  $region20: #{forward.1} parent=0 // pred_region
    _
  $region21: #{forward.1} parent=0 // pred_fallthru
    _
  // Predicated region
  $region22: #{forward.1} parent=0 // pred_check
    _
  $region23: #{forward.1} parent=0 // pred_check_branch
    %85 = sbr.rel (0) target = $region25
  $region24: #{forward.1} parent=0 // pred_region
    _
  $region25: #{forward.1} parent=0 // pred_fallthru
    _
  // Predicated region
  $region26: #{forward.1} parent=0 // pred_check
    _
  $region27: #{forward.1} parent=0 // pred_check_branch
    %87 = sbr.rel (0) target = $region29
  $region28: #{forward.1} parent=0 // pred_region
    _
  $region29: #{forward.1} parent=0 // pred_fallthru
    _
  // Predicated region
  $region30: #{forward.1} parent=0 // pred_check
    _
  $region31: #{forward.1} parent=0 // pred_check_branch
    %89 = sbr.rel (0) target = $region33
  $region32: #{forward.1} parent=0 // pred_region
    _
  $region33: #{forward.1} parent=0 // pred_fallthru
    _
  // Predicated region
  $region34: #{forward.1} parent=0 // pred_check
    _
  $region35: #{forward.1} parent=0 // pred_check_branch
    %91 = sbr.rel (0) target = $region37
  $region36: #{forward.1} parent=0 // pred_region
    _
  $region37: #{forward.1} parent=0 // pred_fallthru
    _
  // Predicated region
  $region38: #{forward.1} parent=0 // pred_check
    _
  $region39: #{forward.1} parent=0 // pred_check_branch
    %93 = sbr.rel (0) target = $region41
  $region40: #{forward.1} parent=0 // pred_region
    _
  $region41: #{forward.1} parent=0 // pred_fallthru
    _
  // Predicated region
  $region42: #{forward.1} parent=0 // pred_check
    _
  $region43: #{forward.1} parent=0 // pred_check_branch
    %95 = sbr.rel (0) target = $region45
  $region44: #{forward.1} parent=0 // pred_region
    _
  $region45: #{forward.1} parent=0 // pred_fallthru
    _
  // Predicated region
  $region46: #{forward.1} parent=0 // pred_check
    _
  $region47: #{forward.1} parent=0 // pred_check_branch
    %97 = sbr.rel (0) target = $region49
  $region48: #{forward.1} parent=0 // pred_region
    _
  $region49: #{forward.1} parent=0 // pred_fallthru
    _
  // Predicated region
  $region50: #{forward.1} parent=0 // pred_check
    _
  $region51: #{forward.1} parent=0 // pred_check_branch
    %99 = sbr.rel (0) target = $region53
  $region52: #{forward.1} parent=0 // pred_region
    _
  $region53: #{forward.1} parent=0 // pred_fallthru
    _
  // Predicated region
  $region54: #{forward.1} parent=0 // pred_check
    _
  $region55: #{forward.1} parent=0 // pred_check_branch
    %101 = sbr.rel (0) target = $region57
  $region56: #{forward.1} parent=0 // pred_region
    _
  $region57: #{forward.1} parent=0 // pred_fallthru
    _
  // Predicated region
  $region58: #{forward.1} parent=0 // pred_check
    _
  $region59: #{forward.1} parent=0 // pred_check_branch
    %103 = sbr.rel (0) target = $region61
  $region60: #{forward.1} parent=0 // pred_region
    _
  $region61: #{forward.1} parent=0 // pred_fallthru
    _
  // Predicated region
  $region62: #{forward.1} parent=0 // pred_check
    _
  $region63: #{forward.1} parent=0 // pred_check_branch
    %105 = sbr.rel (0) target = $region65
  $region64: #{forward.1} parent=0 // pred_region
    _
  $region65: #{forward.1} parent=0 // pred_fallthru
    _
  // Predicated region
  $region66: #{forward.1} parent=0 // pred_check
    _
  $region67: #{forward.1} parent=0 // pred_check_branch
    %107 = sbr.rel (0) target = $region69
  $region68: #{forward.1} parent=0 // pred_region
    _
  $region69: #{forward.1} parent=0 // pred_fallthru
    _
  // Predicated region
  $region70: #{forward.1} parent=0 // pred_check
    _
  $region71: #{forward.1} parent=0 // pred_check_branch
    %109 = sbr.rel (0) target = $region73
  $region72: #{forward.1} parent=0 // pred_region
    _
  $region73: #{forward.1} parent=0 // pred_fallthru
    _
  // Predicated region
  $region74: #{forward.1} parent=0 // pred_check
    _
  $region75: #{forward.1} parent=0 // pred_check_branch
    %111 = sbr.rel (0) target = $region77
  $region76: #{forward.1} parent=0 // pred_region
    _
  $region77: #{forward.1} parent=0 // pred_fallthru
    _
  // Predicated region
  $region78: #{forward.1} parent=0 // pred_check
    _
  $region79: #{forward.1} parent=0 // pred_check_branch
    %113 = sbr.rel (0) target = $region81
  $region80: #{forward.1} parent=0 // pred_region
    _
  $region81: #{forward.1} parent=0 // pred_fallthru
    _
  // Predicated region
  $region82: #{forward.1} parent=0 // pred_check
    _
  $region83: #{forward.1} parent=0 // pred_check_branch
    %115 = sbr.rel (0) target = $region85
  $region84: #{forward.1} parent=0 // pred_region
    _
  $region85: #{forward.1} parent=0 // pred_fallthru
    _
  // Predicated region
  $region86: #{forward.1} parent=0 // pred_check
    _
  $region87: #{forward.1} parent=0 // pred_check_branch
    %117 = sbr.rel (0) target = $region89
  $region88: #{forward.1} parent=0 // pred_region
    _
  $region89: #{forward.1} parent=0 // pred_fallthru
    _
  // Predicated region
  $region90: #{forward.1} parent=0 // pred_check
    _
  $region91: #{forward.1} parent=0 // pred_check_branch
    %119 = sbr.rel (0) target = $region93
  $region92: #{forward.1} parent=0 // pred_region
    _
  $region93: #{forward.1} parent=0 // pred_fallthru
    _
  // Predicated region
  $region94: #{forward.1} parent=0 // pred_check
    _
  $region95: #{forward.1} parent=0 // pred_check_branch
    %121 = sbr.rel (0) target = $region97
  $region96: #{forward.1} parent=0 // pred_region
    _
  $region97: #{forward.1} parent=0 // pred_fallthru
    _
  // Predicated region
  $region98: #{forward.1} parent=0 // pred_check
    _
  $region99: #{forward.1} parent=0 // pred_check_branch
    %123 = sbr.rel (0) target = $region101
  $region100: #{forward.1} parent=0 // pred_region
    _
  $region101: #{forward.1} parent=0 // pred_fallthru
    _
  // Predicated region
  $region102: #{forward.1} parent=0 // pred_check
    _
  $region103: #{forward.1} parent=0 // pred_check_branch
    %125 = sbr.rel (0) target = $region105
  $region104: #{forward.1} parent=0 // pred_region
    _
  $region105: #{forward.1} parent=0 // pred_fallthru
    _
  // Predicated region
  $region106: #{forward.1} parent=0 // pred_check
    _
  $region107: #{forward.1} parent=0 // pred_check_branch
    %127 = sbr.rel (0) target = $region109
  $region108: #{forward.1} parent=0 // pred_region
    _
  $region109: #{forward.1} parent=0 // pred_fallthru
    _
  // Predicated region
  $region110: #{forward.1} parent=0 // pred_check
    _
  $region111: #{forward.1} parent=0 // pred_check_branch
    %129 = sbr.rel (0) target = $region113
  $region112: #{forward.1} parent=0 // pred_region
    _
  $region113: #{forward.1} parent=0 // pred_fallthru
    _
  // Predicated region
  $region114: #{forward.1} parent=0 // pred_check
    _
  $region115: #{forward.1} parent=0 // pred_check_branch
    %131 = sbr.rel (0) target = $region117
  $region116: #{forward.1} parent=0 // pred_region
    _
  $region117: #{forward.1} parent=0 // pred_fallthru
    _
  // Predicated region
  $region118: #{forward.1} parent=0 // pred_check
    _
  $region119: #{forward.1} parent=0 // pred_check_branch
    %133 = sbr.rel (0) target = $region121
  $region120: #{forward.1} parent=0 // pred_region
    _
  $region121: #{forward.1} parent=0 // pred_fallthru
    _
  // Predicated region
  $region122: #{forward.1} parent=0 // pred_check
    _
  $region123: #{forward.1} parent=0 // pred_check_branch
    %135 = sbr.rel (0) target = $region125
  $region124: #{forward.1} parent=0 // pred_region
    _
  $region125: #{forward.1} parent=0 // pred_fallthru
    _
  // Predicated region
  $region126: #{forward.1} parent=0 // pred_check
    _
  $region127: #{forward.1} parent=0 // pred_check_branch
    %137 = sbr.rel (0) target = $region129
  $region128: #{forward.1} parent=0 // pred_region
    _
  $region129: #{forward.1} parent=0 // pred_fallthru
    _
  // Predicated region
  $region130: #{forward.1} parent=0 // pred_check
    _
  $region131: #{forward.1} parent=0 // pred_check_branch
    %139 = sbr.rel (0) target = $region133
  $region132: #{forward.1} parent=0 // pred_region
    _
  $region133: #{forward.1} parent=0 // pred_fallthru
    _
  // Predicated region
  $region134: #{forward.1} parent=0 // pred_check
    _
  $region135: #{forward.1} parent=0 // pred_check_branch
    %141 = sbr.rel (0) target = $region137
  $region136: #{forward.1} parent=0 // pred_region
    _
  $region137: #{forward.1} parent=0 // pred_fallthru
    _
  %v143 = vld [vmem:[%s1] sm:$0x3]
  %v144 = vld [vmem:[%s1 + $0x2] sm:$0x3]
  %v145 = vld [vmem:[%s1 + $0x4] sm:$0x3]
  %v146 = vld [vmem:[%s1 + $0x6] sm:$0x3]
  %v147 = vld [vmem:[%s1 + $0x8] sm:$0x3]
  %v148 = vld [vmem:[%s1 + $0xa] sm:$0x3]
  %v149 = vld [vmem:[%s1 + $0xc] sm:$0x3]
  %v150 = vld [vmem:[%s1 + $0xe] sm:$0x3]
  %v159 = vcombine.low %v143, %v144
  %v160 = vcombine.low %v145, %v146
  %v162 = vunpack.c.l.s4 1983009808
  %v163 = vunpack.c.0.s8 %v162
  %v164 = vlaneseq
  %v165 = vshrl.u32 %v164, 7
  %v166 = vsub.s32 %v163, %v165
  %v167 = vrot.slane %v159, %v166
  %v169 = vunpack.c.l.s4 1983009808
  %v170 = vunpack.c.0.s8 %v169
  %v171 = vlaneseq
  %v172 = vshrl.u32 %v171, 7
  %v173 = vsub.s32 %v170, %v172
  %v174 = vrot.slane %v160, %v173
  %v175 = vcombine.low %v167, %v174
  %v176 = vcombine.low %v147, %v148
  %v177 = vcombine.low %v149, %v150
  %v179 = vunpack.c.l.s4 1983009808
  %v180 = vunpack.c.0.s8 %v179
  %v181 = vlaneseq
  %v182 = vshrl.u32 %v181, 7
  %v183 = vsub.s32 %v180, %v182
  %v184 = vrot.slane %v176, %v183
  %v186 = vunpack.c.l.s4 1983009808
  %v187 = vunpack.c.0.s8 %v186
  %v188 = vlaneseq
  %v189 = vshrl.u32 %v188, 7
  %v190 = vsub.s32 %v187, %v189
  %v191 = vrot.slane %v177, %v190
  %v192 = vcombine.low %v184, %v191
  %v195 = vpack.c.bf16 %v192, %v175
  %v196 = vld [vmem:[%s7] sm:$0xf]
  %v197 = vld [vmem:[%s7 + $0x4] sm:$0xf]
  %v198 = vld [vmem:[%s9] sm:$0x1]
  %v200 = vlaneseq
  %v201 = vshrl.u32 %v200, 7
  %v202 = vsub.s32 0, %v201
  %v203 = vrot.slane %v198, %v202
  %v207 = vunpack.c.l.b16 %v196
  %v208 = vunpack.c.l.b16 %v197
  %v209 = vpack.c.b16 %v208, %v207
  %vm211 = vcmask 130048
  %v213 = vsel %vm211, %v195, 0
  %215 = vmatprep.subr.bf16.mxu0 0
  %216 = vmatpush1.bf16.msra.mxu0 0
  %217 = vmatprep.subr.bf16.mxu0 0
  %218 = vmatpush1.bf16.msra.mxu0 0
  %219 = vmatprep.subr.bf16.mxu0 0
  %220 = vmatpush1.bf16.msra.mxu0 0
  %221 = vmatprep.subr.bf16.mxu0 0
  %222 = vmatpush1.bf16.msra.mxu0 0
  %223 = vmatprep.subr.bf16.mxu0 0
  %224 = vmatpush1.bf16.msra.mxu0 0
  %225 = vmatprep.subr.bf16.mxu0 0
  %226 = vmatpush1.bf16.msra.mxu0 0
  %227 = vmatprep.subr.bf16.mxu0 0
  %228 = vmatpush1.bf16.msra.mxu0 0
  %229 = vmatprep.subr.bf16.mxu0 0
  %230 = vmatpush1.bf16.msra.mxu0 %v209
  %231 = vmatprep.subr.bf16.mxu0 0
  %232 = vmatpush2.bf16.msra.mxu0 0
  %233 = vmatprep.subr.bf16.mxu0 0
  %234 = vmatpush2.bf16.msra.mxu0 0
  %235 = vmatprep.subr.bf16.mxu0 0
  %236 = vmatpush2.bf16.msra.mxu0 0
  %237 = vmatprep.subr.bf16.mxu0 0
  %238 = vmatpush2.bf16.msra.mxu0 0
  %239 = vmatprep.subr.bf16.mxu0 0
  %240 = vmatpush2.bf16.msra.mxu0 0
  %241 = vmatprep.subr.bf16.mxu0 0
  %242 = vmatpush2.bf16.msra.mxu0 0
  %243 = vmatprep.subr.bf16.mxu0 0
  %244 = vmatpush2.bf16.msra.mxu0 0
  %245 = vmatprep.subr.bf16.mxu0 0
  %246 = vmatpush2.bf16.msra.mxu0 0
  %247 = vmatprep.mubr.bf16.mxu0 0
  %248 = vmatmul.mubr.bf16.gmra.mxu0 %v213
  %v249 = vpop.f32.mrf.mxu0
  %v250 = vadd.f32 %v203, %v249
  %v251 = vpop.f32.mrf.mxu0
  %v252 = vpop.f32.mrf.mxu0
  %v253 = vadd.f32 %v203, %v252
  %v254 = vpop.f32.mrf.mxu0
  %255 = vdwg.mxu0
  %v256 = vpack.c.bf16 %v253, %v250
  %v257 = vld [vmem:[%s11] sm:$0xf]
  %v258 = vld [vmem:[%s11 + $0x4] sm:$0xf]
  %v259 = vld [vmem:[%s11 + $0x8] sm:$0xf]
  %v260 = vld [vmem:[%s11 + $0xc] sm:$0xf]
  %v261 = vld [vmem:[%s15] sm:$0x1]
  %v263 = vlaneseq
  %v264 = vshrl.u32 %v263, 7
  %v265 = vsub.s32 0, %v264
  %v266 = vrot.slane %v261, %v265
  %v272 = vunpack.c.l.b16 %v257
  %v273 = vunpack.c.l.b16 %v258
  %v274 = vunpack.c.l.b16 %v259
  %v275 = vunpack.c.l.b16 %v260
  %v276 = vpack.c.b16 %v273, %v272
  %v277 = vpack.c.b16 %v275, %v274
  %vm280 = vcmask 261120
  %v282 = vsel %vm280, %v256, 0
  %284 = vmatprep.subr.bf16.mxu0 0
  %285 = vmatpush1.bf16.msra.mxu0 0
  %286 = vmatprep.subr.bf16.mxu0 0
  %287 = vmatpush1.bf16.msra.mxu0 0
  %288 = vmatprep.subr.bf16.mxu0 0
  %289 = vmatpush1.bf16.msra.mxu0 0
  %290 = vmatprep.subr.bf16.mxu0 0
  %291 = vmatpush1.bf16.msra.mxu0 0
  %292 = vmatprep.subr.bf16.mxu0 0
  %293 = vmatpush1.bf16.msra.mxu0 0
  %294 = vmatprep.subr.bf16.mxu0 0
  %295 = vmatpush1.bf16.msra.mxu0 0
  %296 = vmatprep.subr.bf16.mxu0 0
  %297 = vmatpush1.bf16.msra.mxu0 %v277
  %298 = vmatprep.subr.bf16.mxu0 0
  %299 = vmatpush1.bf16.msra.mxu0 %v276
  %300 = vmatprep.subr.bf16.mxu0 0
  %301 = vmatpush2.bf16.msra.mxu0 0
  %302 = vmatprep.subr.bf16.mxu0 0
  %303 = vmatpush2.bf16.msra.mxu0 0
  %304 = vmatprep.subr.bf16.mxu0 0
  %305 = vmatpush2.bf16.msra.mxu0 0
  %306 = vmatprep.subr.bf16.mxu0 0
  %307 = vmatpush2.bf16.msra.mxu0 0
  %308 = vmatprep.subr.bf16.mxu0 0
  %309 = vmatpush2.bf16.msra.mxu0 0
  %310 = vmatprep.subr.bf16.mxu0 0
  %311 = vmatpush2.bf16.msra.mxu0 0
  %312 = vmatprep.subr.bf16.mxu0 0
  %313 = vmatpush2.bf16.msra.mxu0 0
  %314 = vmatprep.subr.bf16.mxu0 0
  %315 = vmatpush2.bf16.msra.mxu0 0
  %316 = vmatprep.mubr.bf16.mxu0 0
  %317 = vmatmul.mubr.bf16.gmra.mxu0 %v282
  %v318 = vpop.f32.mrf.mxu0
  %v319 = vadd.f32 %v266, %v318
  %v320 = vpop.f32.mrf.mxu0
  %v321 = vpop.f32.mrf.mxu0
  %v322 = vadd.f32 %v266, %v321
  %v323 = vpop.f32.mrf.mxu0
  %324 = vdwg.mxu0
  %325 = vst [vmem:[#allocation2] sm:$0xff] %v319
  %326 = vst [vmem:[#allocation2 + $0x8] sm:$0xff] %v322
  %v327 = vld [vmem:[%s13] sm:$0xf]
  %v328 = vld [vmem:[%s13 + $0x4] sm:$0xf]
  %v329 = vld [vmem:[%s13 + $0x8] sm:$0xf]
  %v330 = vld [vmem:[%s13 + $0xc] sm:$0xf]
  %v331 = vld [vmem:[#allocation2] sm:$0x3]
  %v336 = vunpack.c.l.b16 %v327
  %v337 = vunpack.c.l.b16 %v328
  %v338 = vunpack.c.l.b16 %v329
  %v339 = vunpack.c.l.b16 %v330
  %v340 = vpack.c.b16 %v337, %v336
  %v341 = vpack.c.b16 %v339, %v338
  %v345 = vsel %vm280, 0, 0
  %347 = vmatprep.subr.bf16.mxu0 0
  %348 = vmatpush1.bf16.msra.mxu0 0
  %349 = vmatprep.subr.bf16.mxu0 0
  %350 = vmatpush1.bf16.msra.mxu0 0
  %351 = vmatprep.subr.bf16.mxu0 0
  %352 = vmatpush1.bf16.msra.mxu0 0
  %353 = vmatprep.subr.bf16.mxu0 0
  %354 = vmatpush1.bf16.msra.mxu0 0
  %355 = vmatprep.subr.bf16.mxu0 0
  %356 = vmatpush1.bf16.msra.mxu0 0
  %357 = vmatprep.subr.bf16.mxu0 0
  %358 = vmatpush1.bf16.msra.mxu0 0
  %359 = vmatprep.subr.bf16.mxu0 0
  %360 = vmatpush1.bf16.msra.mxu0 %v341
  %361 = vmatprep.subr.bf16.mxu0 0
  %362 = vmatpush1.bf16.msra.mxu0 %v340
  %363 = vmatprep.subr.bf16.mxu0 0
  %364 = vmatpush2.bf16.msra.mxu0 0
  %365 = vmatprep.subr.bf16.mxu0 0
  %366 = vmatpush2.bf16.msra.mxu0 0
  %367 = vmatprep.subr.bf16.mxu0 0
  %368 = vmatpush2.bf16.msra.mxu0 0
  %369 = vmatprep.subr.bf16.mxu0 0
  %370 = vmatpush2.bf16.msra.mxu0 0
  %371 = vmatprep.subr.bf16.mxu0 0
  %372 = vmatpush2.bf16.msra.mxu0 0
  %373 = vmatprep.subr.bf16.mxu0 0
  %374 = vmatpush2.bf16.msra.mxu0 0
  %375 = vmatprep.subr.bf16.mxu0 0
  %376 = vmatpush2.bf16.msra.mxu0 0
  %377 = vmatprep.subr.bf16.mxu0 0
  %378 = vmatpush2.bf16.msra.mxu0 0
  %379 = vmatprep.mubr.bf16.mxu0 0
  %380 = vmatmul.mubr.bf16.gmra.mxu0 %v345
  %v381 = vpop.f32.mrf.mxu0
  %v382 = vadd.f32 0.0, %v381
  %v383 = vpop.f32.mrf.mxu0
  %v384 = vpop.f32.mrf.mxu0
  %v385 = vpop.f32.mrf.mxu0
  %386 = vdwg.mxu0
  %v387 = vadd.f32 %v331, %v382
  %v388 = vxor.u32 %v387, 2147483648
  %v389 = vmul.f32 %v388, 1.442695
  %v390 = vpow.pop %v389
  %v391 = vadd.f32 %v390, 1.0
  %v392 = vrcp.pop %v391
  %v393 = vmul.f32 1.0, %v392
  %v394 = vtanh.pop %v387
  %v395 = vmul.f32 %v393, 0.0
  %397 = vrot.lane.b32.xlu0 %v394, 64
  %v398 = vpop.permute.xlu0 %397
  %v400 = vmul.f32 %v393, %v398
  %402 = vrot.lane.b32.xlu0 %v400, 32
  %v403 = vpop.permute.xlu0 %402
  %v405 = vadd.f32 %v395, %v403
  %v406 = vtanh.pop %v405
  %408 = vrot.lane.b32.xlu0 %v406, 64
  %v409 = vpop.permute.xlu0 %408
  %v411 = vmul.f32 %v393, %v409
  %v412 = vld [vmem:[%s3] sm:$0x1]
  %v413 = vlaneseq
  %v414 = vshrl.u32 %v413, 7
  %v415 = vsub.s32 0, %v414
  %v416 = vrot.slane %v412, %v415
  %418 = vrot.lane.b32.xlu0 %v416, 96
  %v419 = vpop.permute.xlu0 %418
  %v421 = vadd.f32 %v411, %v419
  %423 = vrot.lane.b32.xlu0 %v421, 32
  %v424 = vpop.permute.xlu0 %423
  %vm426 = vcmask 254976
  %427 = vst.msk [vmem:[#allocation3] sm:$0x3] %vm426, %v424
  %v428 = vld [vmem:[#allocation2 + $0x2] sm:$0x3]
  %v429 = vpack.c.bf16 %v411, %v411
  %431 = vrot.lane.b32.xlu0 %v429, 32
  %v432 = vpop.permute.xlu0 %431
  %v434 = vsel %vm280, %v432, 0
  %436 = vmatprep.subr.bf16.mxu0 0
  %437 = vmatpush1.bf16.msra.mxu0 0
  %438 = vmatprep.subr.bf16.mxu0 0
  %439 = vmatpush1.bf16.msra.mxu0 0
  %440 = vmatprep.subr.bf16.mxu0 0
  %441 = vmatpush1.bf16.msra.mxu0 0
  %442 = vmatprep.subr.bf16.mxu0 0
  %443 = vmatpush1.bf16.msra.mxu0 0
  %444 = vmatprep.subr.bf16.mxu0 0
  %445 = vmatpush1.bf16.msra.mxu0 0
  %446 = vmatprep.subr.bf16.mxu0 0
  %447 = vmatpush1.bf16.msra.mxu0 0
  %448 = vmatprep.subr.bf16.mxu0 0
  %449 = vmatpush1.bf16.msra.mxu0 %v341
  %450 = vmatprep.subr.bf16.mxu0 0
  %451 = vmatpush1.bf16.msra.mxu0 %v340
  %452 = vmatprep.subr.bf16.mxu0 0
  %453 = vmatpush2.bf16.msra.mxu0 0
  %454 = vmatprep.subr.bf16.mxu0 0
  %455 = vmatpush2.bf16.msra.mxu0 0
  %456 = vmatprep.subr.bf16.mxu0 0
  %457 = vmatpush2.bf16.msra.mxu0 0
  %458 = vmatprep.subr.bf16.mxu0 0
  %459 = vmatpush2.bf16.msra.mxu0 0
  %460 = vmatprep.subr.bf16.mxu0 0
  %461 = vmatpush2.bf16.msra.mxu0 0
  %462 = vmatprep.subr.bf16.mxu0 0
  %463 = vmatpush2.bf16.msra.mxu0 0
  %464 = vmatprep.subr.bf16.mxu0 0
  %465 = vmatpush2.bf16.msra.mxu0 0
  %466 = vmatprep.subr.bf16.mxu0 0
  %467 = vmatpush2.bf16.msra.mxu0 0
  %468 = vmatprep.mubr.bf16.mxu0 0
  %469 = vmatmul.mubr.bf16.gmra.mxu0 %v434
  %v470 = vpop.f32.mrf.mxu0
  %v471 = vadd.f32 0.0, %v470
  %v472 = vpop.f32.mrf.mxu0
  %v473 = vpop.f32.mrf.mxu0
  %v474 = vpop.f32.mrf.mxu0
  %475 = vdwg.mxu0
  %v476 = vadd.f32 %v428, %v471
  %v477 = vxor.u32 %v476, 2147483648
  %v478 = vmul.f32 %v477, 1.442695
  %v479 = vpow.pop %v478
  %v480 = vadd.f32 %v479, 1.0
  %v481 = vrcp.pop %v480
  %v482 = vmul.f32 1.0, %v481
  %v483 = vtanh.pop %v476
  %v484 = vmul.f32 %v482, %v405
  %486 = vrot.lane.b32.xlu0 %v483, 64
  %v487 = vpop.permute.xlu0 %486
  %v489 = vmul.f32 %v482, %v487
  %491 = vrot.lane.b32.xlu0 %v489, 32
  %v492 = vpop.permute.xlu0 %491
  %v494 = vadd.f32 %v484, %v492
  %v495 = vtanh.pop %v494
  %497 = vrot.lane.b32.xlu0 %v495, 64
  %v498 = vpop.permute.xlu0 %497
  %v500 = vmul.f32 %v482, %v498
  %v501 = vld [vmem:[%s3 + $0x1] sm:$0x1]
  %v502 = vlaneseq
  %v503 = vshrl.u32 %v502, 7
  %v504 = vsub.s32 0, %v503
  %v505 = vrot.slane %v501, %v504
  %507 = vrot.lane.b32.xlu0 %v505, 96
  %v508 = vpop.permute.xlu0 %507
  %v510 = vadd.f32 %v500, %v508
  %512 = vrot.lane.b32.xlu0 %v510, 32
  %v513 = vpop.permute.xlu0 %512
  %515 = vst.msk [vmem:[#allocation3 + $0x2] sm:$0x3] %vm426, %v513
  %v516 = vld [vmem:[#allocation2 + $0x4] sm:$0x3]
  %v517 = vpack.c.bf16 %v500, %v500
  %519 = vrot.lane.b32.xlu0 %v517, 32
  %v520 = vpop.permute.xlu0 %519
  %v522 = vsel %vm280, %v520, 0
  %524 = vmatprep.subr.bf16.mxu0 0
  %525 = vmatpush1.bf16.msra.mxu0 0
  %526 = vmatprep.subr.bf16.mxu0 0
  %527 = vmatpush1.bf16.msra.mxu0 0
  %528 = vmatprep.subr.bf16.mxu0 0
  %529 = vmatpush1.bf16.msra.mxu0 0
  %530 = vmatprep.subr.bf16.mxu0 0
  %531 = vmatpush1.bf16.msra.mxu0 0
  %532 = vmatprep.subr.bf16.mxu0 0
  %533 = vmatpush1.bf16.msra.mxu0 0
  %534 = vmatprep.subr.bf16.mxu0 0
  %535 = vmatpush1.bf16.msra.mxu0 0
  %536 = vmatprep.subr.bf16.mxu0 0
  %537 = vmatpush1.bf16.msra.mxu0 %v341
  %538 = vmatprep.subr.bf16.mxu0 0
  %539 = vmatpush1.bf16.msra.mxu0 %v340
  %540 = vmatprep.subr.bf16.mxu0 0
  %541 = vmatpush2.bf16.msra.mxu0 0
  %542 = vmatprep.subr.bf16.mxu0 0
  %543 = vmatpush2.bf16.msra.mxu0 0
  %544 = vmatprep.subr.bf16.mxu0 0
  %545 = vmatpush2.bf16.msra.mxu0 0
  %546 = vmatprep.subr.bf16.mxu0 0
  %547 = vmatpush2.bf16.msra.mxu0 0
  %548 = vmatprep.subr.bf16.mxu0 0
  %549 = vmatpush2.bf16.msra.mxu0 0
  %550 = vmatprep.subr.bf16.mxu0 0
  %551 = vmatpush2.bf16.msra.mxu0 0
  %552 = vmatprep.subr.bf16.mxu0 0
  %553 = vmatpush2.bf16.msra.mxu0 0
  %554 = vmatprep.subr.bf16.mxu0 0
  %555 = vmatpush2.bf16.msra.mxu0 0
  %556 = vmatprep.mubr.bf16.mxu0 0
  %557 = vmatmul.mubr.bf16.gmra.mxu0 %v522
  %v558 = vpop.f32.mrf.mxu0
  %v559 = vadd.f32 0.0, %v558
  %v560 = vpop.f32.mrf.mxu0
  %v561 = vpop.f32.mrf.mxu0
  %v562 = vpop.f32.mrf.mxu0
  %563 = vdwg.mxu0
  %v564 = vadd.f32 %v516, %v559
  %v565 = vxor.u32 %v564, 2147483648
  %v566 = vmul.f32 %v565, 1.442695
  %v567 = vpow.pop %v566
  %v568 = vadd.f32 %v567, 1.0
  %v569 = vrcp.pop %v568
  %v570 = vmul.f32 1.0, %v569
  %v571 = vtanh.pop %v564
  %v572 = vmul.f32 %v570, %v494
  %574 = vrot.lane.b32.xlu0 %v571, 64
  %v575 = vpop.permute.xlu0 %574
  %v577 = vmul.f32 %v570, %v575
  %579 = vrot.lane.b32.xlu0 %v577, 32
  %v580 = vpop.permute.xlu0 %579
  %v582 = vadd.f32 %v572, %v580
  %v583 = vtanh.pop %v582
  %585 = vrot.lane.b32.xlu0 %v583, 64
  %v586 = vpop.permute.xlu0 %585
  %v588 = vmul.f32 %v570, %v586
  %v589 = vld [vmem:[%s3 + $0x2] sm:$0x1]
  %v590 = vlaneseq
  %v591 = vshrl.u32 %v590, 7
  %v592 = vsub.s32 0, %v591
  %v593 = vrot.slane %v589, %v592
  %595 = vrot.lane.b32.xlu0 %v593, 96
  %v596 = vpop.permute.xlu0 %595
  %v598 = vadd.f32 %v588, %v596
  %600 = vrot.lane.b32.xlu0 %v598, 32
  %v601 = vpop.permute.xlu0 %600
  %603 = vst.msk [vmem:[#allocation3 + $0x4] sm:$0x3] %vm426, %v601
  %v604 = vld [vmem:[#allocation2 + $0x6] sm:$0x3]
  %v605 = vpack.c.bf16 %v588, %v588
  %607 = vrot.lane.b32.xlu0 %v605, 32
  %v608 = vpop.permute.xlu0 %607
  %v610 = vsel %vm280, %v608, 0
  %612 = vmatprep.subr.bf16.mxu0 0
  %613 = vmatpush1.bf16.msra.mxu0 0
  %614 = vmatprep.subr.bf16.mxu0 0
  %615 = vmatpush1.bf16.msra.mxu0 0
  %616 = vmatprep.subr.bf16.mxu0 0
  %617 = vmatpush1.bf16.msra.mxu0 0
  %618 = vmatprep.subr.bf16.mxu0 0
  %619 = vmatpush1.bf16.msra.mxu0 0
  %620 = vmatprep.subr.bf16.mxu0 0
  %621 = vmatpush1.bf16.msra.mxu0 0
  %622 = vmatprep.subr.bf16.mxu0 0
  %623 = vmatpush1.bf16.msra.mxu0 0
  %624 = vmatprep.subr.bf16.mxu0 0
  %625 = vmatpush1.bf16.msra.mxu0 %v341
  %626 = vmatprep.subr.bf16.mxu0 0
  %627 = vmatpush1.bf16.msra.mxu0 %v340
  %628 = vmatprep.subr.bf16.mxu0 0
  %629 = vmatpush2.bf16.msra.mxu0 0
  %630 = vmatprep.subr.bf16.mxu0 0
  %631 = vmatpush2.bf16.msra.mxu0 0
  %632 = vmatprep.subr.bf16.mxu0 0
  %633 = vmatpush2.bf16.msra.mxu0 0
  %634 = vmatprep.subr.bf16.mxu0 0
  %635 = vmatpush2.bf16.msra.mxu0 0
  %636 = vmatprep.subr.bf16.mxu0 0
  %637 = vmatpush2.bf16.msra.mxu0 0
  %638 = vmatprep.subr.bf16.mxu0 0
  %639 = vmatpush2.bf16.msra.mxu0 0
  %640 = vmatprep.subr.bf16.mxu0 0
  %641 = vmatpush2.bf16.msra.mxu0 0
  %642 = vmatprep.subr.bf16.mxu0 0
  %643 = vmatpush2.bf16.msra.mxu0 0
  %644 = vmatprep.mubr.bf16.mxu0 0
  %645 = vmatmul.mubr.bf16.gmra.mxu0 %v610
  %v646 = vpop.f32.mrf.mxu0
  %v647 = vadd.f32 0.0, %v646
  %v648 = vpop.f32.mrf.mxu0
  %v649 = vpop.f32.mrf.mxu0
  %v650 = vpop.f32.mrf.mxu0
  %651 = vdwg.mxu0
  %v652 = vadd.f32 %v604, %v647
  %v653 = vxor.u32 %v652, 2147483648
  %v654 = vmul.f32 %v653, 1.442695
  %v655 = vpow.pop %v654
  %v656 = vadd.f32 %v655, 1.0
  %v657 = vrcp.pop %v656
  %v658 = vmul.f32 1.0, %v657
  %v659 = vtanh.pop %v652
  %v660 = vmul.f32 %v658, %v582
  %662 = vrot.lane.b32.xlu0 %v659, 64
  %v663 = vpop.permute.xlu0 %662
  %v665 = vmul.f32 %v658, %v663
  %667 = vrot.lane.b32.xlu0 %v665, 32
  %v668 = vpop.permute.xlu0 %667
  %v670 = vadd.f32 %v660, %v668
  %v671 = vtanh.pop %v670
  %673 = vrot.lane.b32.xlu0 %v671, 64
  %v674 = vpop.permute.xlu0 %673
  %v676 = vmul.f32 %v658, %v674
  %v677 = vld [vmem:[%s3 + $0x3] sm:$0x1]
  %v678 = vlaneseq
  %v679 = vshrl.u32 %v678, 7
  %v680 = vsub.s32 0, %v679
  %v681 = vrot.slane %v677, %v680
  %683 = vrot.lane.b32.xlu0 %v681, 96
  %v684 = vpop.permute.xlu0 %683
  %v686 = vadd.f32 %v676, %v684
  %688 = vrot.lane.b32.xlu0 %v686, 32
  %v689 = vpop.permute.xlu0 %688
  %691 = vst.msk [vmem:[#allocation3 + $0x6] sm:$0x3] %vm426, %v689
  %v692 = vld [vmem:[#allocation2 + $0x8] sm:$0x3]
  %v693 = vpack.c.bf16 %v676, %v676
  %695 = vrot.lane.b32.xlu0 %v693, 32
  %v696 = vpop.permute.xlu0 %695
  %v698 = vsel %vm280, %v696, 0
  %700 = vmatprep.subr.bf16.mxu0 0
  %701 = vmatpush1.bf16.msra.mxu0 0
  %702 = vmatprep.subr.bf16.mxu0 0
  %703 = vmatpush1.bf16.msra.mxu0 0
  %704 = vmatprep.subr.bf16.mxu0 0
  %705 = vmatpush1.bf16.msra.mxu0 0
  %706 = vmatprep.subr.bf16.mxu0 0
  %707 = vmatpush1.bf16.msra.mxu0 0
  %708 = vmatprep.subr.bf16.mxu0 0
  %709 = vmatpush1.bf16.msra.mxu0 0
  %710 = vmatprep.subr.bf16.mxu0 0
  %711 = vmatpush1.bf16.msra.mxu0 0
  %712 = vmatprep.subr.bf16.mxu0 0
  %713 = vmatpush1.bf16.msra.mxu0 %v341
  %714 = vmatprep.subr.bf16.mxu0 0
  %715 = vmatpush1.bf16.msra.mxu0 %v340
  %716 = vmatprep.subr.bf16.mxu0 0
  %717 = vmatpush2.bf16.msra.mxu0 0
  %718 = vmatprep.subr.bf16.mxu0 0
  %719 = vmatpush2.bf16.msra.mxu0 0
  %720 = vmatprep.subr.bf16.mxu0 0
  %721 = vmatpush2.bf16.msra.mxu0 0
  %722 = vmatprep.subr.bf16.mxu0 0
  %723 = vmatpush2.bf16.msra.mxu0 0
  %724 = vmatprep.subr.bf16.mxu0 0
  %725 = vmatpush2.bf16.msra.mxu0 0
  %726 = vmatprep.subr.bf16.mxu0 0
  %727 = vmatpush2.bf16.msra.mxu0 0
  %728 = vmatprep.subr.bf16.mxu0 0
  %729 = vmatpush2.bf16.msra.mxu0 0
  %730 = vmatprep.subr.bf16.mxu0 0
  %731 = vmatpush2.bf16.msra.mxu0 0
  %732 = vmatprep.mubr.bf16.mxu0 0
  %733 = vmatmul.mubr.bf16.gmra.mxu0 %v698
  %v734 = vpop.f32.mrf.mxu0
  %v735 = vadd.f32 0.0, %v734
  %v736 = vpop.f32.mrf.mxu0
  %v737 = vpop.f32.mrf.mxu0
  %v738 = vpop.f32.mrf.mxu0
  %739 = vdwg.mxu0
  %v740 = vadd.f32 %v692, %v735
  %v741 = vxor.u32 %v740, 2147483648
  %v742 = vmul.f32 %v741, 1.442695
  %v743 = vpow.pop %v742
  %v744 = vadd.f32 %v743, 1.0
  %v745 = vrcp.pop %v744
  %v746 = vmul.f32 1.0, %v745
  %v747 = vtanh.pop %v740
  %v748 = vmul.f32 %v746, %v670
  %750 = vrot.lane.b32.xlu0 %v747, 64
  %v751 = vpop.permute.xlu0 %750
  %v753 = vmul.f32 %v746, %v751
  %755 = vrot.lane.b32.xlu0 %v753, 32
  %v756 = vpop.permute.xlu0 %755
  %v758 = vadd.f32 %v748, %v756
  %v759 = vtanh.pop %v758
  %761 = vrot.lane.b32.xlu0 %v759, 64
  %v762 = vpop.permute.xlu0 %761
  %v764 = vmul.f32 %v746, %v762
  %v765 = vld [vmem:[%s3 + $0x4] sm:$0x1]
  %v766 = vlaneseq
  %v767 = vshrl.u32 %v766, 7
  %v768 = vsub.s32 0, %v767
  %v769 = vrot.slane %v765, %v768
  %771 = vrot.lane.b32.xlu0 %v769, 96
  %v772 = vpop.permute.xlu0 %771
  %v774 = vadd.f32 %v764, %v772
  %776 = vrot.lane.b32.xlu0 %v774, 32
  %v777 = vpop.permute.xlu0 %776
  %779 = vst.msk [vmem:[#allocation3 + $0x8] sm:$0x3] %vm426, %v777
  %v780 = vld [vmem:[#allocation2 + $0xa] sm:$0x3]
  %v781 = vpack.c.bf16 %v764, %v764
  %783 = vrot.lane.b32.xlu0 %v781, 32
  %v784 = vpop.permute.xlu0 %783
  %v786 = vsel %vm280, %v784, 0
  %788 = vmatprep.subr.bf16.mxu0 0
  %789 = vmatpush1.bf16.msra.mxu0 0
  %790 = vmatprep.subr.bf16.mxu0 0
  %791 = vmatpush1.bf16.msra.mxu0 0
  %792 = vmatprep.subr.bf16.mxu0 0
  %793 = vmatpush1.bf16.msra.mxu0 0
  %794 = vmatprep.subr.bf16.mxu0 0
  %795 = vmatpush1.bf16.msra.mxu0 0
  %796 = vmatprep.subr.bf16.mxu0 0
  %797 = vmatpush1.bf16.msra.mxu0 0
  %798 = vmatprep.subr.bf16.mxu0 0
  %799 = vmatpush1.bf16.msra.mxu0 0
  %800 = vmatprep.subr.bf16.mxu0 0
  %801 = vmatpush1.bf16.msra.mxu0 %v341
  %802 = vmatprep.subr.bf16.mxu0 0
  %803 = vmatpush1.bf16.msra.mxu0 %v340
  %804 = vmatprep.subr.bf16.mxu0 0
  %805 = vmatpush2.bf16.msra.mxu0 0
  %806 = vmatprep.subr.bf16.mxu0 0
  %807 = vmatpush2.bf16.msra.mxu0 0
  %808 = vmatprep.subr.bf16.mxu0 0
  %809 = vmatpush2.bf16.msra.mxu0 0
  %810 = vmatprep.subr.bf16.mxu0 0
  %811 = vmatpush2.bf16.msra.mxu0 0
  %812 = vmatprep.subr.bf16.mxu0 0
  %813 = vmatpush2.bf16.msra.mxu0 0
  %814 = vmatprep.subr.bf16.mxu0 0
  %815 = vmatpush2.bf16.msra.mxu0 0
  %816 = vmatprep.subr.bf16.mxu0 0
  %817 = vmatpush2.bf16.msra.mxu0 0
  %818 = vmatprep.subr.bf16.mxu0 0
  %819 = vmatpush2.bf16.msra.mxu0 0
  %820 = vmatprep.mubr.bf16.mxu0 0
  %821 = vmatmul.mubr.bf16.gmra.mxu0 %v786
  %v822 = vpop.f32.mrf.mxu0
  %v823 = vadd.f32 0.0, %v822
  %v824 = vpop.f32.mrf.mxu0
  %v825 = vpop.f32.mrf.mxu0
  %v826 = vpop.f32.mrf.mxu0
  %827 = vdwg.mxu0
  %v828 = vadd.f32 %v780, %v823
  %v829 = vxor.u32 %v828, 2147483648
  %v830 = vmul.f32 %v829, 1.442695
  %v831 = vpow.pop %v830
  %v832 = vadd.f32 %v831, 1.0
  %v833 = vrcp.pop %v832
  %v834 = vmul.f32 1.0, %v833
  %v835 = vtanh.pop %v828
  %v836 = vmul.f32 %v834, %v758
  %838 = vrot.lane.b32.xlu0 %v835, 64
  %v839 = vpop.permute.xlu0 %838
  %v841 = vmul.f32 %v834, %v839
  %843 = vrot.lane.b32.xlu0 %v841, 32
  %v844 = vpop.permute.xlu0 %843
  %v846 = vadd.f32 %v836, %v844
  %v847 = vtanh.pop %v846
  %849 = vrot.lane.b32.xlu0 %v847, 64
  %v850 = vpop.permute.xlu0 %849
  %v852 = vmul.f32 %v834, %v850
  %v853 = vld [vmem:[%s3 + $0x5] sm:$0x1]
  %v854 = vlaneseq
  %v855 = vshrl.u32 %v854, 7
  %v856 = vsub.s32 0, %v855
  %v857 = vrot.slane %v853, %v856
  %859 = vrot.lane.b32.xlu0 %v857, 96
  %v860 = vpop.permute.xlu0 %859
  %v862 = vadd.f32 %v852, %v860
  %864 = vrot.lane.b32.xlu0 %v862, 32
  %v865 = vpop.permute.xlu0 %864
  %867 = vst.msk [vmem:[#allocation3 + $0xa] sm:$0x3] %vm426, %v865
  %v868 = vld [vmem:[#allocation2 + $0xc] sm:$0x3]
  %v869 = vpack.c.bf16 %v852, %v852
  %871 = vrot.lane.b32.xlu0 %v869, 32
  %v872 = vpop.permute.xlu0 %871
  %v874 = vsel %vm280, %v872, 0
  %876 = vmatprep.subr.bf16.mxu0 0
  %877 = vmatpush1.bf16.msra.mxu0 0
  %878 = vmatprep.subr.bf16.mxu0 0
  %879 = vmatpush1.bf16.msra.mxu0 0
  %880 = vmatprep.subr.bf16.mxu0 0
  %881 = vmatpush1.bf16.msra.mxu0 0
  %882 = vmatprep.subr.bf16.mxu0 0
  %883 = vmatpush1.bf16.msra.mxu0 0
  %884 = vmatprep.subr.bf16.mxu0 0
  %885 = vmatpush1.bf16.msra.mxu0 0
  %886 = vmatprep.subr.bf16.mxu0 0
  %887 = vmatpush1.bf16.msra.mxu0 0
  %888 = vmatprep.subr.bf16.mxu0 0
  %889 = vmatpush1.bf16.msra.mxu0 %v341
  %890 = vmatprep.subr.bf16.mxu0 0
  %891 = vmatpush1.bf16.msra.mxu0 %v340
  %892 = vmatprep.subr.bf16.mxu0 0
  %893 = vmatpush2.bf16.msra.mxu0 0
  %894 = vmatprep.subr.bf16.mxu0 0
  %895 = vmatpush2.bf16.msra.mxu0 0
  %896 = vmatprep.subr.bf16.mxu0 0
  %897 = vmatpush2.bf16.msra.mxu0 0
  %898 = vmatprep.subr.bf16.mxu0 0
  %899 = vmatpush2.bf16.msra.mxu0 0
  %900 = vmatprep.subr.bf16.mxu0 0
  %901 = vmatpush2.bf16.msra.mxu0 0
  %902 = vmatprep.subr.bf16.mxu0 0
  %903 = vmatpush2.bf16.msra.mxu0 0
  %904 = vmatprep.subr.bf16.mxu0 0
  %905 = vmatpush2.bf16.msra.mxu0 0
  %906 = vmatprep.subr.bf16.mxu0 0
  %907 = vmatpush2.bf16.msra.mxu0 0
  %908 = vmatprep.mubr.bf16.mxu0 0
  %909 = vmatmul.mubr.bf16.gmra.mxu0 %v874
  %v910 = vpop.f32.mrf.mxu0
  %v911 = vadd.f32 0.0, %v910
  %v912 = vpop.f32.mrf.mxu0
  %v913 = vpop.f32.mrf.mxu0
  %v914 = vpop.f32.mrf.mxu0
  %915 = vdwg.mxu0
  %v916 = vadd.f32 %v868, %v911
  %v917 = vxor.u32 %v916, 2147483648
  %v918 = vmul.f32 %v917, 1.442695
  %v919 = vpow.pop %v918
  %v920 = vadd.f32 %v919, 1.0
  %v921 = vrcp.pop %v920
  %v922 = vmul.f32 1.0, %v921
  %v923 = vtanh.pop %v916
  %v924 = vmul.f32 %v922, %v846
  %926 = vrot.lane.b32.xlu0 %v923, 64
  %v927 = vpop.permute.xlu0 %926
  %v929 = vmul.f32 %v922, %v927
  %931 = vrot.lane.b32.xlu0 %v929, 32
  %v932 = vpop.permute.xlu0 %931
  %v934 = vadd.f32 %v924, %v932
  %v935 = vtanh.pop %v934
  %937 = vrot.lane.b32.xlu0 %v935, 64
  %v938 = vpop.permute.xlu0 %937
  %v940 = vmul.f32 %v922, %v938
  %v941 = vld [vmem:[%s3 + $0x6] sm:$0x1]
  %v942 = vlaneseq
  %v943 = vshrl.u32 %v942, 7
  %v944 = vsub.s32 0, %v943
  %v945 = vrot.slane %v941, %v944
  %947 = vrot.lane.b32.xlu0 %v945, 96
  %v948 = vpop.permute.xlu0 %947
  %v950 = vadd.f32 %v940, %v948
  %952 = vrot.lane.b32.xlu0 %v950, 32
  %v953 = vpop.permute.xlu0 %952
  %955 = vst.msk [vmem:[#allocation3 + $0xc] sm:$0x3] %vm426, %v953
  %v956 = vld [vmem:[#allocation2 + $0xe] sm:$0x3]
  %v957 = vpack.c.bf16 %v940, %v940
  %959 = vrot.lane.b32.xlu0 %v957, 32
  %v960 = vpop.permute.xlu0 %959
  %v962 = vsel %vm280, %v960, 0
  %964 = vmatprep.subr.bf16.mxu0 0
  %965 = vmatpush1.bf16.msra.mxu0 0
  %966 = vmatprep.subr.bf16.mxu0 0
  %967 = vmatpush1.bf16.msra.mxu0 0
  %968 = vmatprep.subr.bf16.mxu0 0
  %969 = vmatpush1.bf16.msra.mxu0 0
  %970 = vmatprep.subr.bf16.mxu0 0
  %971 = vmatpush1.bf16.msra.mxu0 0
  %972 = vmatprep.subr.bf16.mxu0 0
  %973 = vmatpush1.bf16.msra.mxu0 0
  %974 = vmatprep.subr.bf16.mxu0 0
  %975 = vmatpush1.bf16.msra.mxu0 0
  %976 = vmatprep.subr.bf16.mxu0 0
  %977 = vmatpush1.bf16.msra.mxu0 %v341
  %978 = vmatprep.subr.bf16.mxu0 0
  %979 = vmatpush1.bf16.msra.mxu0 %v340
  %980 = vmatprep.subr.bf16.mxu0 0
  %981 = vmatpush2.bf16.msra.mxu0 0
  %982 = vmatprep.subr.bf16.mxu0 0
  %983 = vmatpush2.bf16.msra.mxu0 0
  %984 = vmatprep.subr.bf16.mxu0 0
  %985 = vmatpush2.bf16.msra.mxu0 0
  %986 = vmatprep.subr.bf16.mxu0 0
  %987 = vmatpush2.bf16.msra.mxu0 0
  %988 = vmatprep.subr.bf16.mxu0 0
  %989 = vmatpush2.bf16.msra.mxu0 0
  %990 = vmatprep.subr.bf16.mxu0 0
  %991 = vmatpush2.bf16.msra.mxu0 0
  %992 = vmatprep.subr.bf16.mxu0 0
  %993 = vmatpush2.bf16.msra.mxu0 0
  %994 = vmatprep.subr.bf16.mxu0 0
  %995 = vmatpush2.bf16.msra.mxu0 0
  %996 = vmatprep.mubr.bf16.mxu0 0
  %997 = vmatmul.mubr.bf16.gmra.mxu0 %v962
  %v998 = vpop.f32.mrf.mxu0
  %v999 = vadd.f32 0.0, %v998
  %v1000 = vpop.f32.mrf.mxu0
  %v1001 = vpop.f32.mrf.mxu0
  %v1002 = vpop.f32.mrf.mxu0
  %1003 = vdwg.mxu0
  %v1004 = vadd.f32 %v956, %v999
  %v1005 = vxor.u32 %v1004, 2147483648
  %v1006 = vmul.f32 %v1005, 1.442695
  %v1007 = vpow.pop %v1006
  %v1008 = vadd.f32 %v1007, 1.0
  %v1009 = vrcp.pop %v1008
  %v1010 = vmul.f32 1.0, %v1009
  %v1011 = vtanh.pop %v1004
  %v1012 = vmul.f32 %v1010, %v934
  %1014 = vrot.lane.b32.xlu0 %v1011, 64
  %v1015 = vpop.permute.xlu0 %1014
  %v1017 = vmul.f32 %v1010, %v1015
  %1019 = vrot.lane.b32.xlu0 %v1017, 32
  %v1020 = vpop.permute.xlu0 %1019
  %v1022 = vadd.f32 %v1012, %v1020
  %v1023 = vtanh.pop %v1022
  %1025 = vrot.lane.b32.xlu0 %v1023, 64
  %v1026 = vpop.permute.xlu0 %1025
  %v1028 = vmul.f32 %v1010, %v1026
  %v1029 = vld [vmem:[%s3 + $0x7] sm:$0x1]
  %v1030 = vlaneseq
  %v1031 = vshrl.u32 %v1030, 7
  %v1032 = vsub.s32 0, %v1031
  %v1033 = vrot.slane %v1029, %v1032
  %1035 = vrot.lane.b32.xlu0 %v1033, 96
  %v1036 = vpop.permute.xlu0 %1035
  %v1038 = vadd.f32 %v1028, %v1036
  %1040 = vrot.lane.b32.xlu0 %v1038, 32
  %v1041 = vpop.permute.xlu0 %1040
  %1043 = vst.msk [vmem:[#allocation3 + $0xe] sm:$0x3] %vm426, %v1041
  %v1044 = vld [vmem:[%s5] sm:$0xff]
  %v1045 = vld [vmem:[%s5 + $0x8] sm:$0xff]
  %v1046 = vld [vmem:[#allocation3] sm:$0xff]
  %v1047 = vld [vmem:[#allocation3 + $0x8] sm:$0xff]
  %v1048 = vpack.c.bf16 %v1047, %v1046
  %v1049 = vld [vmem:[%s17] sm:$0xf]
  %v1050 = vld [vmem:[%s17 + $0x4] sm:$0xf]
  %v1051 = vld [vmem:[%s17 + $0x8] sm:$0xf]
  %v1052 = vld [vmem:[%s17 + $0xc] sm:$0xf]
  %v1053 = vld [vmem:[%s19] sm:$0x1]
  %v1055 = vlaneseq
  %v1056 = vshrl.u32 %v1055, 7
  %v1057 = vsub.s32 0, %v1056
  %v1058 = vrot.slane %v1053, %v1057
  %v1064 = vunpack.c.l.b16 %v1049
  %v1065 = vunpack.c.l.b16 %v1050
  %v1066 = vunpack.c.l.b16 %v1051
  %v1067 = vunpack.c.l.b16 %v1052
  %v1068 = vpack.c.b16 %v1065, %v1064
  %v1069 = vpack.c.b16 %v1067, %v1066
  %v1073 = vsel %vm280, %v1048, 0
  %1075 = vmatprep.subr.bf16.mxu0 0
  %1076 = vmatpush1.bf16.msra.mxu0 0
  %1077 = vmatprep.subr.bf16.mxu0 0
  %1078 = vmatpush1.bf16.msra.mxu0 0
  %1079 = vmatprep.subr.bf16.mxu0 0
  %1080 = vmatpush1.bf16.msra.mxu0 0
  %1081 = vmatprep.subr.bf16.mxu0 0
  %1082 = vmatpush1.bf16.msra.mxu0 0
  %1083 = vmatprep.subr.bf16.mxu0 0
  %1084 = vmatpush1.bf16.msra.mxu0 0
  %1085 = vmatprep.subr.bf16.mxu0 0
  %1086 = vmatpush1.bf16.msra.mxu0 0
  %1087 = vmatprep.subr.bf16.mxu0 0
  %1088 = vmatpush1.bf16.msra.mxu0 %v1069
  %1089 = vmatprep.subr.bf16.mxu0 0
  %1090 = vmatpush1.bf16.msra.mxu0 %v1068
  %1091 = vmatprep.subr.bf16.mxu0 0
  %1092 = vmatpush2.bf16.msra.mxu0 0
  %1093 = vmatprep.subr.bf16.mxu0 0
  %1094 = vmatpush2.bf16.msra.mxu0 0
  %1095 = vmatprep.subr.bf16.mxu0 0
  %1096 = vmatpush2.bf16.msra.mxu0 0
  %1097 = vmatprep.subr.bf16.mxu0 0
  %1098 = vmatpush2.bf16.msra.mxu0 0
  %1099 = vmatprep.subr.bf16.mxu0 0
  %1100 = vmatpush2.bf16.msra.mxu0 0
  %1101 = vmatprep.subr.bf16.mxu0 0
  %1102 = vmatpush2.bf16.msra.mxu0 0
  %1103 = vmatprep.subr.bf16.mxu0 0
  %1104 = vmatpush2.bf16.msra.mxu0 0
  %1105 = vmatprep.subr.bf16.mxu0 0
  %1106 = vmatpush2.bf16.msra.mxu0 0
  %1107 = vmatprep.mubr.bf16.mxu0 0
  %1108 = vmatmul.mubr.bf16.gmra.mxu0 %v1073
  %v1109 = vpop.f32.mrf.mxu0
  %v1110 = vadd.f32 %v1058, %v1109
  %v1111 = vpop.f32.mrf.mxu0
  %v1112 = vpop.f32.mrf.mxu0
  %v1113 = vadd.f32 %v1058, %v1112
  %v1114 = vpop.f32.mrf.mxu0
  %1115 = vdwg.mxu0
  %v1116 = vmul.f32 %v1110, 0.35355338
  %v1117 = vmul.f32 %v1113, 0.35355338
  %v1118 = vpack.c.bf16 %v1117, %v1116
  %v1119 = vpack.c.bf16 %v1113, %v1110
  %1121 = vrot.lane.b32.xlu0 %v1119, 96
  %v1122 = vpop.permute.xlu0 %1121
  %vm1123 = vcmask 64512
  %v1125 = vsel %vm1123, %v1118, 0
  %v1128 = vsel %vm1123, %v1122, 0
  %1130 = vmatprep.subr.bf16.mxu0 0
  %1131 = vmatpush1.bf16.xpose.msra.mxu0 0
  %1132 = vmatprep.subr.bf16.mxu0 0
  %1133 = vmatpush1.bf16.xpose.msra.mxu0 0
  %1134 = vmatprep.subr.bf16.mxu0 0
  %1135 = vmatpush1.bf16.xpose.msra.mxu0 0
  %1136 = vmatprep.subr.bf16.mxu0 0
  %1137 = vmatpush1.bf16.xpose.msra.mxu0 0
  %1138 = vmatprep.subr.bf16.mxu0 0
  %1139 = vmatpush1.bf16.xpose.msra.mxu0 0
  %1140 = vmatprep.subr.bf16.mxu0 0
  %1141 = vmatpush1.bf16.xpose.msra.mxu0 0
  %1142 = vmatprep.subr.bf16.mxu0 0
  %1143 = vmatpush1.bf16.xpose.msra.mxu0 0
  %1144 = vmatprep.subr.bf16.mxu0 0
  %1145 = vmatpush1.bf16.xpose.msra.mxu0 %v1128
  %1146 = vmatprep.subr.bf16.mxu0 0
  %1147 = vmatpush2.bf16.xpose.msra.mxu0 0
  %1148 = vmatprep.subr.bf16.mxu0 0
  %1149 = vmatpush2.bf16.xpose.msra.mxu0 0
  %1150 = vmatprep.subr.bf16.mxu0 0
  %1151 = vmatpush2.bf16.xpose.msra.mxu0 0
  %1152 = vmatprep.subr.bf16.mxu0 0
  %1153 = vmatpush2.bf16.xpose.msra.mxu0 0
  %1154 = vmatprep.subr.bf16.mxu0 0
  %1155 = vmatpush2.bf16.xpose.msra.mxu0 0
  %1156 = vmatprep.subr.bf16.mxu0 0
  %1157 = vmatpush2.bf16.xpose.msra.mxu0 0
  %1158 = vmatprep.subr.bf16.mxu0 0
  %1159 = vmatpush2.bf16.xpose.msra.mxu0 0
  %1160 = vmatprep.subr.bf16.mxu0 0
  %1161 = vmatpush2.bf16.xpose.msra.mxu0 0
  %1162 = vmatprep.mubr.bf16.mxu0 0
  %1163 = vmatmul.mubr.bf16.gmra.mxu0 %v1125
  %v1164 = vpop.f32.mrf.mxu0
  %v1165 = vadd.f32 %v1044, %v1164
  %v1166 = vpop.f32.mrf.mxu0
  %v1167 = vpop.f32.mrf.mxu0
  %v1168 = vadd.f32 %v1045, %v1167
  %v1169 = vpop.f32.mrf.mxu0
  %1170 = vdwg.mxu0
  %v1171 = vsel %vm211, %v1165, -inf
  %1172 = vmax.xlane.f32.xlu0 %v1171
  %v1173 = vpop.xlane.xlu0 %1172
  %v1174 = vsel %vm211, %v1168, -inf
  %1175 = vmax.xlane.f32.xlu0 %v1174
  %v1176 = vpop.xlane.xlu0 %1175
  %v1177 = vsub.f32 %v1165, %v1173
  %v1178 = vsub.f32 %v1168, %v1176
  %v1179 = vmul.f32 %v1177, 1.442695
  %v1180 = vpow.pop %v1179
  %v1181 = vmul.f32 %v1178, 1.442695
  %v1182 = vpow.pop %v1181
  %v1183 = vsel %vm211, %v1180, 0.0
  %1184 = vadd.xlane.f32.xlu0 %v1183
  %v1185 = vpop.xlane.xlu0 %1184
  %v1186 = vsel %vm211, %v1182, 0.0
  %1187 = vadd.xlane.f32.xlu0 %v1186
  %v1188 = vpop.xlane.xlu0 %1187
  %v1189 = vrcp.pop %v1185
  %v1190 = vrcp.pop %v1188
  %v1191 = vmul.f32 %v1180, %v1189
  %v1192 = vmul.f32 %v1182, %v1190
  %v1193 = vpack.c.bf16 %v1192, %v1191
  %1194 = vrot.lane.b32.xlu0 %v1119, 64
  %v1195 = vpop.permute.xlu0 %1194
  %v1198 = vsel %vm211, %v1193, 0
  %1200 = vmatprep.subr.bf16.mxu0 0
  %1201 = vmatpush1.bf16.msra.mxu0 0
  %1202 = vmatprep.subr.bf16.mxu0 0
  %1203 = vmatpush1.bf16.msra.mxu0 0
  %1204 = vmatprep.subr.bf16.mxu0 0
  %1205 = vmatpush1.bf16.msra.mxu0 0
  %1206 = vmatprep.subr.bf16.mxu0 0
  %1207 = vmatpush1.bf16.msra.mxu0 0
  %1208 = vmatprep.subr.bf16.mxu0 0
  %1209 = vmatpush1.bf16.msra.mxu0 0
  %1210 = vmatprep.subr.bf16.mxu0 0
  %1211 = vmatpush1.bf16.msra.mxu0 0
  %1212 = vmatprep.subr.bf16.mxu0 0
  %1213 = vmatpush1.bf16.msra.mxu0 0
  %1214 = vmatprep.subr.bf16.mxu0 0
  %1215 = vmatpush1.bf16.msra.mxu0 %v1195
  %1216 = vmatprep.subr.bf16.mxu0 0
  %1217 = vmatpush2.bf16.msra.mxu0 0
  %1218 = vmatprep.subr.bf16.mxu0 0
  %1219 = vmatpush2.bf16.msra.mxu0 0
  %1220 = vmatprep.subr.bf16.mxu0 0
  %1221 = vmatpush2.bf16.msra.mxu0 0
  %1222 = vmatprep.subr.bf16.mxu0 0
  %1223 = vmatpush2.bf16.msra.mxu0 0
  %1224 = vmatprep.subr.bf16.mxu0 0
  %1225 = vmatpush2.bf16.msra.mxu0 0
  %1226 = vmatprep.subr.bf16.mxu0 0
  %1227 = vmatpush2.bf16.msra.mxu0 0
  %1228 = vmatprep.subr.bf16.mxu0 0
  %1229 = vmatpush2.bf16.msra.mxu0 0
  %1230 = vmatprep.subr.bf16.mxu0 0
  %1231 = vmatpush2.bf16.msra.mxu0 0
  %1232 = vmatprep.mubr.bf16.mxu0 0
  %1233 = vmatmul.mubr.bf16.gmra.mxu0 %v1198
  %v1234 = vpop.f32.mrf.mxu0
  %v1235 = vadd.f32 0.0, %v1234
  %v1236 = vpop.f32.mrf.mxu0
  %v1237 = vpop.f32.mrf.mxu0
  %v1238 = vadd.f32 0.0, %v1237
  %v1239 = vpop.f32.mrf.mxu0
  %1240 = vdwg.mxu0
  %v1241 = vpack.c.bf16 %v1238, %v1235
  %v1242 = vld [vmem:[%s21] sm:$0xf]
  %1244 = vrot.lane.b32.xlu0 %v1118, 120
  %v1245 = vpop.permute.xlu0 %1244
  %1246 = vrot.lane.b32.xlu0 %v1119, 88
  %v1247 = vpop.permute.xlu0 %1246
  %v1249 = vsel %vm1123, %v1245, 0
  %v1252 = vsel %vm1123, %v1247, 0
  %1254 = vmatprep.subr.bf16.mxu0 0
  %1255 = vmatpush1.bf16.xpose.msra.mxu0 0
  %1256 = vmatprep.subr.bf16.mxu0 0
  %1257 = vmatpush1.bf16.xpose.msra.mxu0 0
  %1258 = vmatprep.subr.bf16.mxu0 0
  %1259 = vmatpush1.bf16.xpose.msra.mxu0 0
  %1260 = vmatprep.subr.bf16.mxu0 0
  %1261 = vmatpush1.bf16.xpose.msra.mxu0 0
  %1262 = vmatprep.subr.bf16.mxu0 0
  %1263 = vmatpush1.bf16.xpose.msra.mxu0 0
  %1264 = vmatprep.subr.bf16.mxu0 0
  %1265 = vmatpush1.bf16.xpose.msra.mxu0 0
  %1266 = vmatprep.subr.bf16.mxu0 0
  %1267 = vmatpush1.bf16.xpose.msra.mxu0 0
  %1268 = vmatprep.subr.bf16.mxu0 0
  %1269 = vmatpush1.bf16.xpose.msra.mxu0 %v1252
  %1270 = vmatprep.subr.bf16.mxu0 0
  %1271 = vmatpush2.bf16.xpose.msra.mxu0 0
  %1272 = vmatprep.subr.bf16.mxu0 0
  %1273 = vmatpush2.bf16.xpose.msra.mxu0 0
  %1274 = vmatprep.subr.bf16.mxu0 0
  %1275 = vmatpush2.bf16.xpose.msra.mxu0 0
  %1276 = vmatprep.subr.bf16.mxu0 0
  %1277 = vmatpush2.bf16.xpose.msra.mxu0 0
  %1278 = vmatprep.subr.bf16.mxu0 0
  %1279 = vmatpush2.bf16.xpose.msra.mxu0 0
  %1280 = vmatprep.subr.bf16.mxu0 0
  %1281 = vmatpush2.bf16.xpose.msra.mxu0 0
  %1282 = vmatprep.subr.bf16.mxu0 0
  %1283 = vmatpush2.bf16.xpose.msra.mxu0 0
  %1284 = vmatprep.subr.bf16.mxu0 0
  %1285 = vmatpush2.bf16.xpose.msra.mxu0 0
  %1286 = vmatprep.mubr.bf16.mxu0 0
  %1287 = vmatmul.mubr.bf16.gmra.mxu0 %v1249
  %v1288 = vpop.f32.mrf.mxu0
  %v1289 = vadd.f32 %v1044, %v1288
  %v1290 = vpop.f32.mrf.mxu0
  %v1291 = vpop.f32.mrf.mxu0
  %v1292 = vadd.f32 %v1045, %v1291
  %v1293 = vpop.f32.mrf.mxu0
  %1294 = vdwg.mxu0
  %v1295 = vsel %vm211, %v1289, -inf
  %1296 = vmax.xlane.f32.xlu0 %v1295
  %v1297 = vpop.xlane.xlu0 %1296
  %v1298 = vsel %vm211, %v1292, -inf
  %1299 = vmax.xlane.f32.xlu0 %v1298
  %v1300 = vpop.xlane.xlu0 %1299
  %v1301 = vsub.f32 %v1289, %v1297
  %v1302 = vsub.f32 %v1292, %v1300
  %v1303 = vmul.f32 %v1301, 1.442695
  %v1304 = vpow.pop %v1303
  %v1305 = vmul.f32 %v1302, 1.442695
  %v1306 = vpow.pop %v1305
  %v1307 = vsel %vm211, %v1304, 0.0
  %1308 = vadd.xlane.f32.xlu0 %v1307
  %v1309 = vpop.xlane.xlu0 %1308
  %v1310 = vsel %vm211, %v1306, 0.0
  %1311 = vadd.xlane.f32.xlu0 %v1310
  %v1312 = vpop.xlane.xlu0 %1311
  %v1313 = vrcp.pop %v1309
  %v1314 = vrcp.pop %v1312
  %v1315 = vmul.f32 %v1304, %v1313
  %v1316 = vmul.f32 %v1306, %v1314
  %v1317 = vpack.c.bf16 %v1316, %v1315
  %1318 = vrot.lane.b32.xlu0 %v1119, 56
  %v1319 = vpop.permute.xlu0 %1318
  %v1322 = vsel %vm211, %v1317, 0
  %1324 = vmatprep.subr.bf16.mxu0 0
  %1325 = vmatpush1.bf16.msra.mxu0 0
  %1326 = vmatprep.subr.bf16.mxu0 0
  %1327 = vmatpush1.bf16.msra.mxu0 0
  %1328 = vmatprep.subr.bf16.mxu0 0
  %1329 = vmatpush1.bf16.msra.mxu0 0
  %1330 = vmatprep.subr.bf16.mxu0 0
  %1331 = vmatpush1.bf16.msra.mxu0 0
  %1332 = vmatprep.subr.bf16.mxu0 0
  %1333 = vmatpush1.bf16.msra.mxu0 0
  %1334 = vmatprep.subr.bf16.mxu0 0
  %1335 = vmatpush1.bf16.msra.mxu0 0
  %1336 = vmatprep.subr.bf16.mxu0 0
  %1337 = vmatpush1.bf16.msra.mxu0 0
  %1338 = vmatprep.subr.bf16.mxu0 0
  %1339 = vmatpush1.bf16.msra.mxu0 %v1319
  %1340 = vmatprep.subr.bf16.mxu0 0
  %1341 = vmatpush2.bf16.msra.mxu0 0
  %1342 = vmatprep.subr.bf16.mxu0 0
  %1343 = vmatpush2.bf16.msra.mxu0 0
  %1344 = vmatprep.subr.bf16.mxu0 0
  %1345 = vmatpush2.bf16.msra.mxu0 0
  %1346 = vmatprep.subr.bf16.mxu0 0
  %1347 = vmatpush2.bf16.msra.mxu0 0
  %1348 = vmatprep.subr.bf16.mxu0 0
  %1349 = vmatpush2.bf16.msra.mxu0 0
  %1350 = vmatprep.subr.bf16.mxu0 0
  %1351 = vmatpush2.bf16.msra.mxu0 0
  %1352 = vmatprep.subr.bf16.mxu0 0
  %1353 = vmatpush2.bf16.msra.mxu0 0
  %1354 = vmatprep.subr.bf16.mxu0 0
  %1355 = vmatpush2.bf16.msra.mxu0 0
  %1356 = vmatprep.mubr.bf16.mxu0 0
  %1357 = vmatmul.mubr.bf16.gmra.mxu0 %v1322
  %v1358 = vpop.f32.mrf.mxu0
  %v1359 = vadd.f32 0.0, %v1358
  %v1360 = vpop.f32.mrf.mxu0
  %v1361 = vpop.f32.mrf.mxu0
  %v1362 = vadd.f32 0.0, %v1361
  %v1363 = vpop.f32.mrf.mxu0
  %1364 = vdwg.mxu0
  %v1365 = vpack.c.bf16 %v1362, %v1359
  %v1366 = vld [vmem:[%s21 + $0x4] sm:$0xf]
  %v1368 = vsel %vm1123, %v1365, 0
  %vm1370 = vcmask 1043456
  %v1372 = vsel %vm1370, %v1366, 0
  %1374 = vmatprep.subr.bf16.mxu0 0
  %1375 = vmatpush1.bf16.msra.mxu0 0
  %1376 = vmatprep.subr.bf16.mxu0 0
  %1377 = vmatpush1.bf16.msra.mxu0 0
  %1378 = vmatprep.subr.bf16.mxu0 0
  %1379 = vmatpush1.bf16.msra.mxu0 0
  %1380 = vmatprep.subr.bf16.mxu0 0
  %1381 = vmatpush1.bf16.msra.mxu0 0
  %1382 = vmatprep.subr.bf16.mxu0 0
  %1383 = vmatpush1.bf16.msra.mxu0 0
  %1384 = vmatprep.subr.bf16.mxu0 0
  %1385 = vmatpush1.bf16.msra.mxu0 0
  %1386 = vmatprep.subr.bf16.mxu0 0
  %1387 = vmatpush1.bf16.msra.mxu0 0
  %1388 = vmatprep.subr.bf16.mxu0 0
  %1389 = vmatpush1.bf16.msra.mxu0 %v1372
  %1390 = vmatprep.subr.bf16.mxu0 0
  %1391 = vmatpush2.bf16.msra.mxu0 0
  %1392 = vmatprep.subr.bf16.mxu0 0
  %1393 = vmatpush2.bf16.msra.mxu0 0
  %1394 = vmatprep.subr.bf16.mxu0 0
  %1395 = vmatpush2.bf16.msra.mxu0 0
  %1396 = vmatprep.subr.bf16.mxu0 0
  %1397 = vmatpush2.bf16.msra.mxu0 0
  %1398 = vmatprep.subr.bf16.mxu0 0
  %1399 = vmatpush2.bf16.msra.mxu0 0
  %1400 = vmatprep.subr.bf16.mxu0 0
  %1401 = vmatpush2.bf16.msra.mxu0 0
  %1402 = vmatprep.subr.bf16.mxu0 0
  %1403 = vmatpush2.bf16.msra.mxu0 0
  %1404 = vmatprep.subr.bf16.mxu0 0
  %1405 = vmatpush2.bf16.msra.mxu0 0
  %1406 = vmatprep.mubr.bf16.mxu0 0
  %1407 = vmatmul.mubr.bf16.gmra.mxu0 %v1368
  %v1408 = vpop.f32.mrf.mxu0
  %v1409 = vadd.f32 0.0, %v1408
  %v1410 = vpop.f32.mrf.mxu0
  %v1411 = vpop.f32.mrf.mxu0
  %v1412 = vadd.f32 0.0, %v1411
  %v1413 = vpop.f32.mrf.mxu0
  %1414 = vdwg.mxu0
  %v1416 = vsel %vm1123, %v1241, 0
  %v1419 = vsel %vm1370, %v1242, 0
  %1421 = vmatprep.subr.bf16.mxu0 0
  %1422 = vmatpush1.bf16.msra.mxu0 0
  %1423 = vmatprep.subr.bf16.mxu0 0
  %1424 = vmatpush1.bf16.msra.mxu0 0
  %1425 = vmatprep.subr.bf16.mxu0 0
  %1426 = vmatpush1.bf16.msra.mxu0 0
  %1427 = vmatprep.subr.bf16.mxu0 0
  %1428 = vmatpush1.bf16.msra.mxu0 0
  %1429 = vmatprep.subr.bf16.mxu0 0
  %1430 = vmatpush1.bf16.msra.mxu0 0
  %1431 = vmatprep.subr.bf16.mxu0 0
  %1432 = vmatpush1.bf16.msra.mxu0 0
  %1433 = vmatprep.subr.bf16.mxu0 0
  %1434 = vmatpush1.bf16.msra.mxu0 0
  %1435 = vmatprep.subr.bf16.mxu0 0
  %1436 = vmatpush1.bf16.msra.mxu0 %v1419
  %1437 = vmatprep.subr.bf16.mxu0 0
  %1438 = vmatpush2.bf16.msra.mxu0 0
  %1439 = vmatprep.subr.bf16.mxu0 0
  %1440 = vmatpush2.bf16.msra.mxu0 0
  %1441 = vmatprep.subr.bf16.mxu0 0
  %1442 = vmatpush2.bf16.msra.mxu0 0
  %1443 = vmatprep.subr.bf16.mxu0 0
  %1444 = vmatpush2.bf16.msra.mxu0 0
  %1445 = vmatprep.subr.bf16.mxu0 0
  %1446 = vmatpush2.bf16.msra.mxu0 0
  %1447 = vmatprep.subr.bf16.mxu0 0
  %1448 = vmatpush2.bf16.msra.mxu0 0
  %1449 = vmatprep.subr.bf16.mxu0 0
  %1450 = vmatpush2.bf16.msra.mxu0 0
  %1451 = vmatprep.subr.bf16.mxu0 0
  %1452 = vmatpush2.bf16.msra.mxu0 0
  %1453 = vmatprep.mubr.bf16.mxu0 0
  %1454 = vmatmul.mubr.bf16.gmra.mxu0 %v1416
  %v1455 = vpop.f32.mrf.mxu0
  %v1456 = vadd.f32 %v1409, %v1455
  %v1457 = vpop.f32.mrf.mxu0
  %v1458 = vpop.f32.mrf.mxu0
  %v1459 = vadd.f32 %v1412, %v1458
  %v1460 = vpop.f32.mrf.mxu0
  %1461 = vdwg.mxu0
  %1462 = vrot.lane.b32.xlu0 %v1118, 112
  %v1463 = vpop.permute.xlu0 %1462
  %1464 = vrot.lane.b32.xlu0 %v1119, 80
  %v1465 = vpop.permute.xlu0 %1464
  %v1467 = vsel %vm1123, %v1463, 0
  %v1470 = vsel %vm1123, %v1465, 0
  %1472 = vmatprep.subr.bf16.mxu0 0
  %1473 = vmatpush1.bf16.xpose.msra.mxu0 0
  %1474 = vmatprep.subr.bf16.mxu0 0
  %1475 = vmatpush1.bf16.xpose.msra.mxu0 0
  %1476 = vmatprep.subr.bf16.mxu0 0
  %1477 = vmatpush1.bf16.xpose.msra.mxu0 0
  %1478 = vmatprep.subr.bf16.mxu0 0
  %1479 = vmatpush1.bf16.xpose.msra.mxu0 0
  %1480 = vmatprep.subr.bf16.mxu0 0
  %1481 = vmatpush1.bf16.xpose.msra.mxu0 0
  %1482 = vmatprep.subr.bf16.mxu0 0
  %1483 = vmatpush1.bf16.xpose.msra.mxu0 0
  %1484 = vmatprep.subr.bf16.mxu0 0
  %1485 = vmatpush1.bf16.xpose.msra.mxu0 0
  %1486 = vmatprep.subr.bf16.mxu0 0
  %1487 = vmatpush1.bf16.xpose.msra.mxu0 %v1470
  %1488 = vmatprep.subr.bf16.mxu0 0
  %1489 = vmatpush2.bf16.xpose.msra.mxu0 0
  %1490 = vmatprep.subr.bf16.mxu0 0
  %1491 = vmatpush2.bf16.xpose.msra.mxu0 0
  %1492 = vmatprep.subr.bf16.mxu0 0
  %1493 = vmatpush2.bf16.xpose.msra.mxu0 0
  %1494 = vmatprep.subr.bf16.mxu0 0
  %1495 = vmatpush2.bf16.xpose.msra.mxu0 0
  %1496 = vmatprep.subr.bf16.mxu0 0
  %1497 = vmatpush2.bf16.xpose.msra.mxu0 0
  %1498 = vmatprep.subr.bf16.mxu0 0
  %1499 = vmatpush2.bf16.xpose.msra.mxu0 0
  %1500 = vmatprep.subr.bf16.mxu0 0
  %1501 = vmatpush2.bf16.xpose.msra.mxu0 0
  %1502 = vmatprep.subr.bf16.mxu0 0
  %1503 = vmatpush2.bf16.xpose.msra.mxu0 0
  %1504 = vmatprep.mubr.bf16.mxu0 0
  %1505 = vmatmul.mubr.bf16.gmra.mxu0 %v1467
  %v1506 = vpop.f32.mrf.mxu0
  %v1507 = vadd.f32 %v1044, %v1506
  %v1508 = vpop.f32.mrf.mxu0
  %v1509 = vpop.f32.mrf.mxu0
  %v1510 = vadd.f32 %v1045, %v1509
  %v1511 = vpop.f32.mrf.mxu0
  %1512 = vdwg.mxu0
  %v1513 = vsel %vm211, %v1507, -inf
  %1514 = vmax.xlane.f32.xlu0 %v1513
  %v1515 = vpop.xlane.xlu0 %1514
  %v1516 = vsel %vm211, %v1510, -inf
  %1517 = vmax.xlane.f32.xlu0 %v1516
  %v1518 = vpop.xlane.xlu0 %1517
  %v1519 = vsub.f32 %v1507, %v1515
  %v1520 = vsub.f32 %v1510, %v1518
  %v1521 = vmul.f32 %v1519, 1.442695
  %v1522 = vpow.pop %v1521
  %v1523 = vmul.f32 %v1520, 1.442695
  %v1524 = vpow.pop %v1523
  %v1525 = vsel %vm211, %v1522, 0.0
  %1526 = vadd.xlane.f32.xlu0 %v1525
  %v1527 = vpop.xlane.xlu0 %1526
  %v1528 = vsel %vm211, %v1524, 0.0
  %1529 = vadd.xlane.f32.xlu0 %v1528
  %v1530 = vpop.xlane.xlu0 %1529
  %v1531 = vrcp.pop %v1527
  %v1532 = vrcp.pop %v1530
  %v1533 = vmul.f32 %v1522, %v1531
  %v1534 = vmul.f32 %v1524, %v1532
  %v1535 = vpack.c.bf16 %v1534, %v1533
  %1536 = vrot.lane.b32.xlu0 %v1119, 48
  %v1537 = vpop.permute.xlu0 %1536
  %v1540 = vsel %vm211, %v1535, 0
  %1542 = vmatprep.subr.bf16.mxu0 0
  %1543 = vmatpush1.bf16.msra.mxu0 0
  %1544 = vmatprep.subr.bf16.mxu0 0
  %1545 = vmatpush1.bf16.msra.mxu0 0
  %1546 = vmatprep.subr.bf16.mxu0 0
  %1547 = vmatpush1.bf16.msra.mxu0 0
  %1548 = vmatprep.subr.bf16.mxu0 0
  %1549 = vmatpush1.bf16.msra.mxu0 0
  %1550 = vmatprep.subr.bf16.mxu0 0
  %1551 = vmatpush1.bf16.msra.mxu0 0
  %1552 = vmatprep.subr.bf16.mxu0 0
  %1553 = vmatpush1.bf16.msra.mxu0 0
  %1554 = vmatprep.subr.bf16.mxu0 0
  %1555 = vmatpush1.bf16.msra.mxu0 0
  %1556 = vmatprep.subr.bf16.mxu0 0
  %1557 = vmatpush1.bf16.msra.mxu0 %v1537
  %1558 = vmatprep.subr.bf16.mxu0 0
  %1559 = vmatpush2.bf16.msra.mxu0 0
  %1560 = vmatprep.subr.bf16.mxu0 0
  %1561 = vmatpush2.bf16.msra.mxu0 0
  %1562 = vmatprep.subr.bf16.mxu0 0
  %1563 = vmatpush2.bf16.msra.mxu0 0
  %1564 = vmatprep.subr.bf16.mxu0 0
  %1565 = vmatpush2.bf16.msra.mxu0 0
  %1566 = vmatprep.subr.bf16.mxu0 0
  %1567 = vmatpush2.bf16.msra.mxu0 0
  %1568 = vmatprep.subr.bf16.mxu0 0
  %1569 = vmatpush2.bf16.msra.mxu0 0
  %1570 = vmatprep.subr.bf16.mxu0 0
  %1571 = vmatpush2.bf16.msra.mxu0 0
  %1572 = vmatprep.subr.bf16.mxu0 0
  %1573 = vmatpush2.bf16.msra.mxu0 0
  %1574 = vmatprep.mubr.bf16.mxu0 0
  %1575 = vmatmul.mubr.bf16.gmra.mxu0 %v1540
  %v1576 = vpop.f32.mrf.mxu0
  %v1577 = vadd.f32 0.0, %v1576
  %v1578 = vpop.f32.mrf.mxu0
  %v1579 = vpop.f32.mrf.mxu0
  %v1580 = vadd.f32 0.0, %v1579
  %v1581 = vpop.f32.mrf.mxu0
  %1582 = vdwg.mxu0
  %v1583 = vpack.c.bf16 %v1580, %v1577
  %v1584 = vld [vmem:[%s21 + $0x8] sm:$0xf]
  %v1586 = vsel %vm1123, %v1583, 0
  %v1589 = vsel %vm1370, %v1584, 0
  %1591 = vmatprep.subr.bf16.mxu0 0
  %1592 = vmatpush1.bf16.msra.mxu0 0
  %1593 = vmatprep.subr.bf16.mxu0 0
  %1594 = vmatpush1.bf16.msra.mxu0 0
  %1595 = vmatprep.subr.bf16.mxu0 0
  %1596 = vmatpush1.bf16.msra.mxu0 0
  %1597 = vmatprep.subr.bf16.mxu0 0
  %1598 = vmatpush1.bf16.msra.mxu0 0
  %1599 = vmatprep.subr.bf16.mxu0 0
  %1600 = vmatpush1.bf16.msra.mxu0 0
  %1601 = vmatprep.subr.bf16.mxu0 0
  %1602 = vmatpush1.bf16.msra.mxu0 0
  %1603 = vmatprep.subr.bf16.mxu0 0
  %1604 = vmatpush1.bf16.msra.mxu0 0
  %1605 = vmatprep.subr.bf16.mxu0 0
  %1606 = vmatpush1.bf16.msra.mxu0 %v1589
  %1607 = vmatprep.subr.bf16.mxu0 0
  %1608 = vmatpush2.bf16.msra.mxu0 0
  %1609 = vmatprep.subr.bf16.mxu0 0
  %1610 = vmatpush2.bf16.msra.mxu0 0
  %1611 = vmatprep.subr.bf16.mxu0 0
  %1612 = vmatpush2.bf16.msra.mxu0 0
  %1613 = vmatprep.subr.bf16.mxu0 0
  %1614 = vmatpush2.bf16.msra.mxu0 0
  %1615 = vmatprep.subr.bf16.mxu0 0
  %1616 = vmatpush2.bf16.msra.mxu0 0
  %1617 = vmatprep.subr.bf16.mxu0 0
  %1618 = vmatpush2.bf16.msra.mxu0 0
  %1619 = vmatprep.subr.bf16.mxu0 0
  %1620 = vmatpush2.bf16.msra.mxu0 0
  %1621 = vmatprep.subr.bf16.mxu0 0
  %1622 = vmatpush2.bf16.msra.mxu0 0
  %1623 = vmatprep.mubr.bf16.mxu0 0
  %1624 = vmatmul.mubr.bf16.gmra.mxu0 %v1586
  %v1625 = vpop.f32.mrf.mxu0
  %v1626 = vadd.f32 0.0, %v1625
  %v1627 = vpop.f32.mrf.mxu0
  %v1628 = vpop.f32.mrf.mxu0
  %v1629 = vadd.f32 0.0, %v1628
  %v1630 = vpop.f32.mrf.mxu0
  %1631 = vdwg.mxu0
  %v1632 = vadd.f32 %v1456, %v1626
  %v1633 = vadd.f32 %v1459, %v1629
  %1634 = vrot.lane.b32.xlu0 %v1118, 104
  %v1635 = vpop.permute.xlu0 %1634
  %1636 = vrot.lane.b32.xlu0 %v1119, 72
  %v1637 = vpop.permute.xlu0 %1636
  %v1639 = vsel %vm1123, %v1635, 0
  %v1642 = vsel %vm1123, %v1637, 0
  %1644 = vmatprep.subr.bf16.mxu0 0
  %1645 = vmatpush1.bf16.xpose.msra.mxu0 0
  %1646 = vmatprep.subr.bf16.mxu0 0
  %1647 = vmatpush1.bf16.xpose.msra.mxu0 0
  %1648 = vmatprep.subr.bf16.mxu0 0
  %1649 = vmatpush1.bf16.xpose.msra.mxu0 0
  %1650 = vmatprep.subr.bf16.mxu0 0
  %1651 = vmatpush1.bf16.xpose.msra.mxu0 0
  %1652 = vmatprep.subr.bf16.mxu0 0
  %1653 = vmatpush1.bf16.xpose.msra.mxu0 0
  %1654 = vmatprep.subr.bf16.mxu0 0
  %1655 = vmatpush1.bf16.xpose.msra.mxu0 0
  %1656 = vmatprep.subr.bf16.mxu0 0
  %1657 = vmatpush1.bf16.xpose.msra.mxu0 0
  %1658 = vmatprep.subr.bf16.mxu0 0
  %1659 = vmatpush1.bf16.xpose.msra.mxu0 %v1642
  %1660 = vmatprep.subr.bf16.mxu0 0
  %1661 = vmatpush2.bf16.xpose.msra.mxu0 0
  %1662 = vmatprep.subr.bf16.mxu0 0
  %1663 = vmatpush2.bf16.xpose.msra.mxu0 0
  %1664 = vmatprep.subr.bf16.mxu0 0
  %1665 = vmatpush2.bf16.xpose.msra.mxu0 0
  %1666 = vmatprep.subr.bf16.mxu0 0
  %1667 = vmatpush2.bf16.xpose.msra.mxu0 0
  %1668 = vmatprep.subr.bf16.mxu0 0
  %1669 = vmatpush2.bf16.xpose.msra.mxu0 0
  %1670 = vmatprep.subr.bf16.mxu0 0
  %1671 = vmatpush2.bf16.xpose.msra.mxu0 0
  %1672 = vmatprep.subr.bf16.mxu0 0
  %1673 = vmatpush2.bf16.xpose.msra.mxu0 0
  %1674 = vmatprep.subr.bf16.mxu0 0
  %1675 = vmatpush2.bf16.xpose.msra.mxu0 0
  %1676 = vmatprep.mubr.bf16.mxu0 0
  %1677 = vmatmul.mubr.bf16.gmra.mxu0 %v1639
  %v1678 = vpop.f32.mrf.mxu0
  %v1679 = vadd.f32 %v1044, %v1678
  %v1680 = vpop.f32.mrf.mxu0
  %v1681 = vpop.f32.mrf.mxu0
  %v1682 = vadd.f32 %v1045, %v1681
  %v1683 = vpop.f32.mrf.mxu0
  %1684 = vdwg.mxu0
  %v1685 = vsel %vm211, %v1679, -inf
  %1686 = vmax.xlane.f32.xlu0 %v1685
  %v1687 = vpop.xlane.xlu0 %1686
  %v1688 = vsel %vm211, %v1682, -inf
  %1689 = vmax.xlane.f32.xlu0 %v1688
  %v1690 = vpop.xlane.xlu0 %1689
  %v1691 = vsub.f32 %v1679, %v1687
  %v1692 = vsub.f32 %v1682, %v1690
  %v1693 = vmul.f32 %v1691, 1.442695
  %v1694 = vpow.pop %v1693
  %v1695 = vmul.f32 %v1692, 1.442695
  %v1696 = vpow.pop %v1695
  %v1697 = vsel %vm211, %v1694, 0.0
  %1698 = vadd.xlane.f32.xlu0 %v1697
  %v1699 = vpop.xlane.xlu0 %1698
  %v1700 = vsel %vm211, %v1696, 0.0
  %1701 = vadd.xlane.f32.xlu0 %v1700
  %v1702 = vpop.xlane.xlu0 %1701
  %v1703 = vrcp.pop %v1699
  %v1704 = vrcp.pop %v1702
  %v1705 = vmul.f32 %v1694, %v1703
  %v1706 = vmul.f32 %v1696, %v1704
  %v1707 = vpack.c.bf16 %v1706, %v1705
  %1708 = vrot.lane.b32.xlu0 %v1119, 40
  %v1709 = vpop.permute.xlu0 %1708
  %v1712 = vsel %vm211, %v1707, 0
  %1714 = vmatprep.subr.bf16.mxu0 0
  %1715 = vmatpush1.bf16.msra.mxu0 0
  %1716 = vmatprep.subr.bf16.mxu0 0
  %1717 = vmatpush1.bf16.msra.mxu0 0
  %1718 = vmatprep.subr.bf16.mxu0 0
  %1719 = vmatpush1.bf16.msra.mxu0 0
  %1720 = vmatprep.subr.bf16.mxu0 0
  %1721 = vmatpush1.bf16.msra.mxu0 0
  %1722 = vmatprep.subr.bf16.mxu0 0
  %1723 = vmatpush1.bf16.msra.mxu0 0
  %1724 = vmatprep.subr.bf16.mxu0 0
  %1725 = vmatpush1.bf16.msra.mxu0 0
  %1726 = vmatprep.subr.bf16.mxu0 0
  %1727 = vmatpush1.bf16.msra.mxu0 0
  %1728 = vmatprep.subr.bf16.mxu0 0
  %1729 = vmatpush1.bf16.msra.mxu0 %v1709
  %1730 = vmatprep.subr.bf16.mxu0 0
  %1731 = vmatpush2.bf16.msra.mxu0 0
  %1732 = vmatprep.subr.bf16.mxu0 0
  %1733 = vmatpush2.bf16.msra.mxu0 0
  %1734 = vmatprep.subr.bf16.mxu0 0
  %1735 = vmatpush2.bf16.msra.mxu0 0
  %1736 = vmatprep.subr.bf16.mxu0 0
  %1737 = vmatpush2.bf16.msra.mxu0 0
  %1738 = vmatprep.subr.bf16.mxu0 0
  %1739 = vmatpush2.bf16.msra.mxu0 0
  %1740 = vmatprep.subr.bf16.mxu0 0
  %1741 = vmatpush2.bf16.msra.mxu0 0
  %1742 = vmatprep.subr.bf16.mxu0 0
  %1743 = vmatpush2.bf16.msra.mxu0 0
  %1744 = vmatprep.subr.bf16.mxu0 0
  %1745 = vmatpush2.bf16.msra.mxu0 0
  %1746 = vmatprep.mubr.bf16.mxu0 0
  %1747 = vmatmul.mubr.bf16.gmra.mxu0 %v1712
  %v1748 = vpop.f32.mrf.mxu0
  %v1749 = vadd.f32 0.0, %v1748
  %v1750 = vpop.f32.mrf.mxu0
  %v1751 = vpop.f32.mrf.mxu0
  %v1752 = vadd.f32 0.0, %v1751
  %v1753 = vpop.f32.mrf.mxu0
  %1754 = vdwg.mxu0
  %v1755 = vpack.c.bf16 %v1752, %v1749
  %v1756 = vld [vmem:[%s21 + $0xc] sm:$0xf]
  %v1758 = vsel %vm1123, %v1755, 0
  %v1761 = vsel %vm1370, %v1756, 0
  %1763 = vmatprep.subr.bf16.mxu0 0
  %1764 = vmatpush1.bf16.msra.mxu0 0
  %1765 = vmatprep.subr.bf16.mxu0 0
  %1766 = vmatpush1.bf16.msra.mxu0 0
  %1767 = vmatprep.subr.bf16.mxu0 0
  %1768 = vmatpush1.bf16.msra.mxu0 0
  %1769 = vmatprep.subr.bf16.mxu0 0
  %1770 = vmatpush1.bf16.msra.mxu0 0
  %1771 = vmatprep.subr.bf16.mxu0 0
  %1772 = vmatpush1.bf16.msra.mxu0 0
  %1773 = vmatprep.subr.bf16.mxu0 0
  %1774 = vmatpush1.bf16.msra.mxu0 0
  %1775 = vmatprep.subr.bf16.mxu0 0
  %1776 = vmatpush1.bf16.msra.mxu0 0
  %1777 = vmatprep.subr.bf16.mxu0 0
  %1778 = vmatpush1.bf16.msra.mxu0 %v1761
  %1779 = vmatprep.subr.bf16.mxu0 0
  %1780 = vmatpush2.bf16.msra.mxu0 0
  %1781 = vmatprep.subr.bf16.mxu0 0
  %1782 = vmatpush2.bf16.msra.mxu0 0
  %1783 = vmatprep.subr.bf16.mxu0 0
  %1784 = vmatpush2.bf16.msra.mxu0 0
  %1785 = vmatprep.subr.bf16.mxu0 0
  %1786 = vmatpush2.bf16.msra.mxu0 0
  %1787 = vmatprep.subr.bf16.mxu0 0
  %1788 = vmatpush2.bf16.msra.mxu0 0
  %1789 = vmatprep.subr.bf16.mxu0 0
  %1790 = vmatpush2.bf16.msra.mxu0 0
  %1791 = vmatprep.subr.bf16.mxu0 0
  %1792 = vmatpush2.bf16.msra.mxu0 0
  %1793 = vmatprep.subr.bf16.mxu0 0
  %1794 = vmatpush2.bf16.msra.mxu0 0
  %1795 = vmatprep.mubr.bf16.mxu0 0
  %1796 = vmatmul.mubr.bf16.gmra.mxu0 %v1758
  %v1797 = vpop.f32.mrf.mxu0
  %v1798 = vadd.f32 0.0, %v1797
  %v1799 = vpop.f32.mrf.mxu0
  %v1800 = vpop.f32.mrf.mxu0
  %v1801 = vadd.f32 0.0, %v1800
  %v1802 = vpop.f32.mrf.mxu0
  %1803 = vdwg.mxu0
  %v1804 = vadd.f32 %v1632, %v1798
  %v1805 = vadd.f32 %v1633, %v1801
  %v1806 = vld [vmem:[%s23] sm:$0x1]
  %v1808 = vlaneseq
  %v1809 = vshrl.u32 %v1808, 7
  %v1810 = vsub.s32 0, %v1809
  %v1811 = vrot.slane %v1806, %v1810
  %v1813 = vadd.f32 %v1804, %v1811
  %v1814 = vadd.f32 %v1805, %v1811
  %v1815 = vadd.f32 %v1046, %v1813
  %v1816 = vadd.f32 %v1047, %v1814
  %v1817 = vld [vmem:[%s25] sm:$0x1]
  %v1818 = vld [vmem:[%s27] sm:$0x1]
  %v1819 = vsel %vm280, %v1815, 0.0
  %1820 = vadd.xlane.f32.xlu0 %v1819
  %v1821 = vpop.xlane.xlu0 %1820
  %v1822 = vsel %vm280, %v1816, 0.0
  %1823 = vadd.xlane.f32.xlu0 %v1822
  %v1824 = vpop.xlane.xlu0 %1823
  %v1825 = vrcp.pop 32.0
  %v1826 = vmul.f32 %v1821, %v1825
  %v1827 = vmul.f32 %v1824, %v1825
  %v1828 = vsub.f32 %v1815, %v1826
  %v1829 = vsub.f32 %v1816, %v1827
  %v1830 = vmul.f32 %v1828, %v1828
  %v1831 = vmul.f32 %v1829, %v1829
  %v1832 = vsel %vm280, %v1830, 0.0
  %1833 = vadd.xlane.f32.xlu0 %v1832
  %v1834 = vpop.xlane.xlu0 %1833
  %v1835 = vsel %vm280, %v1831, 0.0
  %1836 = vadd.xlane.f32.xlu0 %v1835
  %v1837 = vpop.xlane.xlu0 %1836
  %v1838 = vmul.f32 %v1834, %v1825
  %v1839 = vmul.f32 %v1837, %v1825
  %v1840 = vadd.f32 %v1838, 1e-05
  %v1841 = vadd.f32 %v1839, 1e-05
  %v1842 = vrsqrt.pop %v1840
  %v1843 = vrsqrt.pop %v1841
  %v1844 = vmul.f32 %v1828, %v1842
  %v1845 = vmul.f32 %v1829, %v1843
  %v1847 = vlaneseq
  %v1848 = vshrl.u32 %v1847, 7
  %v1849 = vsub.s32 0, %v1848
  %v1850 = vrot.slane %v1817, %v1849
  %v1852 = vmul.f32 %v1844, %v1850
  %v1853 = vmul.f32 %v1845, %v1850
  %v1855 = vlaneseq
  %v1856 = vshrl.u32 %v1855, 7
  %v1857 = vsub.s32 0, %v1856
  %v1858 = vrot.slane %v1818, %v1857
  %v1860 = vadd.f32 %v1852, %v1858
  %v1861 = vadd.f32 %v1853, %v1858
  %v1862 = vpack.c.bf16 %v1861, %v1860
  %v1863 = vld [vmem:[%s29] sm:$0xf]
  %v1864 = vld [vmem:[%s29 + $0x4] sm:$0xf]
  %v1865 = vld [vmem:[%s29 + $0x8] sm:$0xf]
  %v1866 = vld [vmem:[%s29 + $0xc] sm:$0xf]
  %v1867 = vld [vmem:[%s31] sm:$0x1]
  %v1869 = vlaneseq
  %v1870 = vshrl.u32 %v1869, 7
  %v1871 = vsub.s32 0, %v1870
  %v1872 = vrot.slane %v1867, %v1871
  %v1878 = vunpack.c.l.b16 %v1863
  %v1879 = vunpack.c.l.b16 %v1864
  %v1880 = vunpack.c.l.b16 %v1865
  %v1881 = vunpack.c.l.b16 %v1866
  %v1882 = vpack.c.b16 %v1879, %v1878
  %v1883 = vpack.c.b16 %v1881, %v1880
  %v1887 = vsel %vm280, %v1862, 0
  %1889 = vmatprep.subr.bf16.mxu0 0
  %1890 = vmatpush1.bf16.msra.mxu0 0
  %1891 = vmatprep.subr.bf16.mxu0 0
  %1892 = vmatpush1.bf16.msra.mxu0 0
  %1893 = vmatprep.subr.bf16.mxu0 0
  %1894 = vmatpush1.bf16.msra.mxu0 0
  %1895 = vmatprep.subr.bf16.mxu0 0
  %1896 = vmatpush1.bf16.msra.mxu0 0
  %1897 = vmatprep.subr.bf16.mxu0 0
  %1898 = vmatpush1.bf16.msra.mxu0 0
  %1899 = vmatprep.subr.bf16.mxu0 0
  %1900 = vmatpush1.bf16.msra.mxu0 0
  %1901 = vmatprep.subr.bf16.mxu0 0
  %1902 = vmatpush1.bf16.msra.mxu0 %v1883
  %1903 = vmatprep.subr.bf16.mxu0 0
  %1904 = vmatpush1.bf16.msra.mxu0 %v1882
  %1905 = vmatprep.subr.bf16.mxu0 0
  %1906 = vmatpush2.bf16.msra.mxu0 0
  %1907 = vmatprep.subr.bf16.mxu0 0
  %1908 = vmatpush2.bf16.msra.mxu0 0
  %1909 = vmatprep.subr.bf16.mxu0 0
  %1910 = vmatpush2.bf16.msra.mxu0 0
  %1911 = vmatprep.subr.bf16.mxu0 0
  %1912 = vmatpush2.bf16.msra.mxu0 0
  %1913 = vmatprep.subr.bf16.mxu0 0
  %1914 = vmatpush2.bf16.msra.mxu0 0
  %1915 = vmatprep.subr.bf16.mxu0 0
  %1916 = vmatpush2.bf16.msra.mxu0 0
  %1917 = vmatprep.subr.bf16.mxu0 0
  %1918 = vmatpush2.bf16.msra.mxu0 0
  %1919 = vmatprep.subr.bf16.mxu0 0
  %1920 = vmatpush2.bf16.msra.mxu0 0
  %1921 = vmatprep.mubr.bf16.mxu0 0
  %1922 = vmatmul.mubr.bf16.gmra.mxu0 %v1887
  %v1923 = vpop.f32.mrf.mxu0
  %v1924 = vadd.f32 %v1872, %v1923
  %v1925 = vpop.f32.mrf.mxu0
  %v1926 = vpop.f32.mrf.mxu0
  %v1927 = vadd.f32 %v1872, %v1926
  %v1928 = vpop.f32.mrf.mxu0
  %1929 = vdwg.mxu0
  %v1930 = vmax.f32 %v1924, 0.0
  %v1931 = vmax.f32 %v1927, 0.0
  %v1932 = vpack.c.bf16 %v1931, %v1930
  %v1933 = vld [vmem:[%s33] sm:$0xf]
  %v1934 = vld [vmem:[%s33 + $0x4] sm:$0xf]
  %v1935 = vld [vmem:[%s33 + $0x8] sm:$0xf]
  %v1936 = vld [vmem:[%s33 + $0xc] sm:$0xf]
  %v1937 = vld [vmem:[%s33 + $0x10] sm:$0xf]
  %v1938 = vld [vmem:[%s33 + $0x14] sm:$0xf]
  %v1939 = vld [vmem:[%s33 + $0x18] sm:$0xf]
  %v1940 = vld [vmem:[%s33 + $0x1c] sm:$0xf]
  %v1941 = vld [vmem:[%s33 + $0x20] sm:$0xf]
  %v1942 = vld [vmem:[%s33 + $0x24] sm:$0xf]
  %v1943 = vld [vmem:[%s33 + $0x28] sm:$0xf]
  %v1944 = vld [vmem:[%s33 + $0x2c] sm:$0xf]
  %v1945 = vld [vmem:[%s33 + $0x30] sm:$0xf]
  %v1946 = vld [vmem:[%s33 + $0x34] sm:$0xf]
  %v1947 = vld [vmem:[%s33 + $0x38] sm:$0xf]
  %v1948 = vld [vmem:[%s33 + $0x3c] sm:$0xf]
  %v1949 = vld [vmem:[%s35] sm:$0x1]
  %v1951 = vlaneseq
  %v1952 = vshrl.u32 %v1951, 7
  %v1953 = vsub.s32 0, %v1952
  %v1954 = vrot.slane %v1949, %v1953
  %v1972 = vunpack.c.l.b16 %v1933
  %v1973 = vunpack.c.l.b16 %v1934
  %v1974 = vunpack.c.l.b16 %v1935
  %v1975 = vunpack.c.l.b16 %v1936
  %v1976 = vunpack.c.l.b16 %v1937
  %v1977 = vunpack.c.l.b16 %v1938
  %v1978 = vunpack.c.l.b16 %v1939
  %v1979 = vunpack.c.l.b16 %v1940
  %v1980 = vunpack.c.l.b16 %v1941
  %v1981 = vunpack.c.l.b16 %v1942
  %v1982 = vunpack.c.l.b16 %v1943
  %v1983 = vunpack.c.l.b16 %v1944
  %v1984 = vunpack.c.l.b16 %v1945
  %v1985 = vunpack.c.l.b16 %v1946
  %v1986 = vunpack.c.l.b16 %v1947
  %v1987 = vunpack.c.l.b16 %v1948
  %v1988 = vpack.c.b16 %v1973, %v1972
  %v1989 = vpack.c.b16 %v1975, %v1974
  %v1990 = vpack.c.b16 %v1977, %v1976
  %v1991 = vpack.c.b16 %v1979, %v1978
  %v1992 = vpack.c.b16 %v1981, %v1980
  %v1993 = vpack.c.b16 %v1983, %v1982
  %v1994 = vpack.c.b16 %v1985, %v1984
  %v1995 = vpack.c.b16 %v1987, %v1986
  %2004 = vmatprep.subr.bf16.mxu0 0
  %2005 = vmatpush1.bf16.msra.mxu0 %v1995
  %2006 = vmatprep.subr.bf16.mxu0 0
  %2007 = vmatpush1.bf16.msra.mxu0 %v1994
  %2008 = vmatprep.subr.bf16.mxu0 0
  %2009 = vmatpush1.bf16.msra.mxu0 %v1993
  %2010 = vmatprep.subr.bf16.mxu0 0
  %2011 = vmatpush1.bf16.msra.mxu0 %v1992
  %2012 = vmatprep.subr.bf16.mxu0 0
  %2013 = vmatpush1.bf16.msra.mxu0 %v1991
  %2014 = vmatprep.subr.bf16.mxu0 0
  %2015 = vmatpush1.bf16.msra.mxu0 %v1990
  %2016 = vmatprep.subr.bf16.mxu0 0
  %2017 = vmatpush1.bf16.msra.mxu0 %v1989
  %2018 = vmatprep.subr.bf16.mxu0 0
  %2019 = vmatpush1.bf16.msra.mxu0 %v1988
  %2020 = vmatprep.subr.bf16.mxu0 0
  %2021 = vmatpush2.bf16.msra.mxu0 0
  %2022 = vmatprep.subr.bf16.mxu0 0
  %2023 = vmatpush2.bf16.msra.mxu0 0
  %2024 = vmatprep.subr.bf16.mxu0 0
  %2025 = vmatpush2.bf16.msra.mxu0 0
  %2026 = vmatprep.subr.bf16.mxu0 0
  %2027 = vmatpush2.bf16.msra.mxu0 0
  %2028 = vmatprep.subr.bf16.mxu0 0
  %2029 = vmatpush2.bf16.msra.mxu0 0
  %2030 = vmatprep.subr.bf16.mxu0 0
  %2031 = vmatpush2.bf16.msra.mxu0 0
  %2032 = vmatprep.subr.bf16.mxu0 0
  %2033 = vmatpush2.bf16.msra.mxu0 0
  %2034 = vmatprep.subr.bf16.mxu0 0
  %2035 = vmatpush2.bf16.msra.mxu0 0
  %2036 = vmatprep.mubr.bf16.mxu0 0
  %2037 = vmatmul.mubr.bf16.gmra.mxu0 %v1932
  %v2038 = vpop.f32.mrf.mxu0
  %v2039 = vadd.f32 %v1954, %v2038
  %v2040 = vpop.f32.mrf.mxu0
  %v2041 = vpop.f32.mrf.mxu0
  %v2042 = vadd.f32 %v1954, %v2041
  %v2043 = vpop.f32.mrf.mxu0
  %2044 = vdwg.mxu0
  %v2045 = vadd.f32 %v1860, %v2039
  %v2046 = vadd.f32 %v1861, %v2042
  %v2047 = vld [vmem:[%s37] sm:$0x1]
  %v2048 = vld [vmem:[%s39] sm:$0x1]
  %v2049 = vsel %vm280, %v2045, 0.0
  %2050 = vadd.xlane.f32.xlu0 %v2049
  %v2051 = vpop.xlane.xlu0 %2050
  %v2052 = vsel %vm280, %v2046, 0.0
  %2053 = vadd.xlane.f32.xlu0 %v2052
  %v2054 = vpop.xlane.xlu0 %2053
  %v2055 = vmul.f32 %v2051, %v1825
  %v2056 = vmul.f32 %v2054, %v1825
  %v2057 = vsub.f32 %v2045, %v2055
  %v2058 = vsub.f32 %v2046, %v2056
  %v2059 = vmul.f32 %v2057, %v2057
  %v2060 = vmul.f32 %v2058, %v2058
  %v2061 = vsel %vm280, %v2059, 0.0
  %2062 = vadd.xlane.f32.xlu0 %v2061
  %v2063 = vpop.xlane.xlu0 %2062
  %v2064 = vsel %vm280, %v2060, 0.0
  %2065 = vadd.xlane.f32.xlu0 %v2064
  %v2066 = vpop.xlane.xlu0 %2065
  %v2067 = vmul.f32 %v2063, %v1825
  %v2068 = vmul.f32 %v2066, %v1825
  %v2069 = vadd.f32 %v2067, 1e-05
  %v2070 = vadd.f32 %v2068, 1e-05
  %v2071 = vrsqrt.pop %v2069
  %v2072 = vrsqrt.pop %v2070
  %v2073 = vmul.f32 %v2057, %v2071
  %v2074 = vmul.f32 %v2058, %v2072
  %v2076 = vlaneseq
  %v2077 = vshrl.u32 %v2076, 7
  %v2078 = vsub.s32 0, %v2077
  %v2079 = vrot.slane %v2047, %v2078
  %v2081 = vmul.f32 %v2073, %v2079
  %v2082 = vmul.f32 %v2074, %v2079
  %v2084 = vlaneseq
  %v2085 = vshrl.u32 %v2084, 7
  %v2086 = vsub.s32 0, %v2085
  %v2087 = vrot.slane %v2048, %v2086
  %v2089 = vadd.f32 %v2081, %v2087
  %v2090 = vadd.f32 %v2082, %v2087
  %v2091 = vpack.c.bf16 %v2090, %v2089
  %v2092 = vld [vmem:[%s41] sm:$0xf]
  %v2093 = vld [vmem:[%s41 + $0x4] sm:$0xf]
  %v2094 = vld [vmem:[%s41 + $0x8] sm:$0xf]
  %v2095 = vld [vmem:[%s41 + $0xc] sm:$0xf]
  %v2096 = vld [vmem:[%s43] sm:$0x1]
  %v2098 = vlaneseq
  %v2099 = vshrl.u32 %v2098, 7
  %v2100 = vsub.s32 0, %v2099
  %v2101 = vrot.slane %v2096, %v2100
  %v2107 = vunpack.c.l.b16 %v2092
  %v2108 = vunpack.c.l.b16 %v2093
  %v2109 = vunpack.c.l.b16 %v2094
  %v2110 = vunpack.c.l.b16 %v2095
  %v2111 = vpack.c.b16 %v2108, %v2107
  %v2112 = vpack.c.b16 %v2110, %v2109
  %v2116 = vsel %vm280, %v2091, 0
  %2118 = vmatprep.subr.bf16.mxu0 0
  %2119 = vmatpush1.bf16.msra.mxu0 0
  %2120 = vmatprep.subr.bf16.mxu0 0
  %2121 = vmatpush1.bf16.msra.mxu0 0
  %2122 = vmatprep.subr.bf16.mxu0 0
  %2123 = vmatpush1.bf16.msra.mxu0 0
  %2124 = vmatprep.subr.bf16.mxu0 0
  %2125 = vmatpush1.bf16.msra.mxu0 0
  %2126 = vmatprep.subr.bf16.mxu0 0
  %2127 = vmatpush1.bf16.msra.mxu0 0
  %2128 = vmatprep.subr.bf16.mxu0 0
  %2129 = vmatpush1.bf16.msra.mxu0 0
  %2130 = vmatprep.subr.bf16.mxu0 0
  %2131 = vmatpush1.bf16.msra.mxu0 %v2112
  %2132 = vmatprep.subr.bf16.mxu0 0
  %2133 = vmatpush1.bf16.msra.mxu0 %v2111
  %2134 = vmatprep.subr.bf16.mxu0 0
  %2135 = vmatpush2.bf16.msra.mxu0 0
  %2136 = vmatprep.subr.bf16.mxu0 0
  %2137 = vmatpush2.bf16.msra.mxu0 0
  %2138 = vmatprep.subr.bf16.mxu0 0
  %2139 = vmatpush2.bf16.msra.mxu0 0
  %2140 = vmatprep.subr.bf16.mxu0 0
  %2141 = vmatpush2.bf16.msra.mxu0 0
  %2142 = vmatprep.subr.bf16.mxu0 0
  %2143 = vmatpush2.bf16.msra.mxu0 0
  %2144 = vmatprep.subr.bf16.mxu0 0
  %2145 = vmatpush2.bf16.msra.mxu0 0
  %2146 = vmatprep.subr.bf16.mxu0 0
  %2147 = vmatpush2.bf16.msra.mxu0 0
  %2148 = vmatprep.subr.bf16.mxu0 0
  %2149 = vmatpush2.bf16.msra.mxu0 0
  %2150 = vmatprep.mubr.bf16.mxu0 0
  %2151 = vmatmul.mubr.bf16.gmra.mxu0 %v2116
  %v2152 = vpop.f32.mrf.mxu0
  %v2153 = vadd.f32 %v2101, %v2152
  %v2154 = vpop.f32.mrf.mxu0
  %v2155 = vpop.f32.mrf.mxu0
  %v2156 = vadd.f32 %v2101, %v2155
  %v2157 = vpop.f32.mrf.mxu0
  %2158 = vdwg.mxu0
  %v2159 = vmul.f32 %v2153, 0.35355338
  %v2160 = vmul.f32 %v2156, 0.35355338
  %v2161 = vpack.c.bf16 %v2160, %v2159
  %v2162 = vpack.c.bf16 %v2156, %v2153
  %2164 = vrot.lane.b32.xlu0 %v2162, 96
  %v2165 = vpop.permute.xlu0 %2164
  %v2167 = vsel %vm1123, %v2161, 0
  %v2170 = vsel %vm1123, %v2165, 0
  %2172 = vmatprep.subr.bf16.mxu0 0
  %2173 = vmatpush1.bf16.xpose.msra.mxu0 0
  %2174 = vmatprep.subr.bf16.mxu0 0
  %2175 = vmatpush1.bf16.xpose.msra.mxu0 0
  %2176 = vmatprep.subr.bf16.mxu0 0
  %2177 = vmatpush1.bf16.xpose.msra.mxu0 0
  %2178 = vmatprep.subr.bf16.mxu0 0
  %2179 = vmatpush1.bf16.xpose.msra.mxu0 0
  %2180 = vmatprep.subr.bf16.mxu0 0
  %2181 = vmatpush1.bf16.xpose.msra.mxu0 0
  %2182 = vmatprep.subr.bf16.mxu0 0
  %2183 = vmatpush1.bf16.xpose.msra.mxu0 0
  %2184 = vmatprep.subr.bf16.mxu0 0
  %2185 = vmatpush1.bf16.xpose.msra.mxu0 0
  %2186 = vmatprep.subr.bf16.mxu0 0
  %2187 = vmatpush1.bf16.xpose.msra.mxu0 %v2170
  %2188 = vmatprep.subr.bf16.mxu0 0
  %2189 = vmatpush2.bf16.xpose.msra.mxu0 0
  %2190 = vmatprep.subr.bf16.mxu0 0
  %2191 = vmatpush2.bf16.xpose.msra.mxu0 0
  %2192 = vmatprep.subr.bf16.mxu0 0
  %2193 = vmatpush2.bf16.xpose.msra.mxu0 0
  %2194 = vmatprep.subr.bf16.mxu0 0
  %2195 = vmatpush2.bf16.xpose.msra.mxu0 0
  %2196 = vmatprep.subr.bf16.mxu0 0
  %2197 = vmatpush2.bf16.xpose.msra.mxu0 0
  %2198 = vmatprep.subr.bf16.mxu0 0
  %2199 = vmatpush2.bf16.xpose.msra.mxu0 0
  %2200 = vmatprep.subr.bf16.mxu0 0
  %2201 = vmatpush2.bf16.xpose.msra.mxu0 0
  %2202 = vmatprep.subr.bf16.mxu0 0
  %2203 = vmatpush2.bf16.xpose.msra.mxu0 0
  %2204 = vmatprep.mubr.bf16.mxu0 0
  %2205 = vmatmul.mubr.bf16.gmra.mxu0 %v2167
  %v2206 = vpop.f32.mrf.mxu0
  %v2207 = vadd.f32 %v1044, %v2206
  %v2208 = vpop.f32.mrf.mxu0
  %v2209 = vpop.f32.mrf.mxu0
  %v2210 = vadd.f32 %v1045, %v2209
  %v2211 = vpop.f32.mrf.mxu0
  %2212 = vdwg.mxu0
  %v2213 = vsel %vm211, %v2207, -inf
  %2214 = vmax.xlane.f32.xlu0 %v2213
  %v2215 = vpop.xlane.xlu0 %2214
  %v2216 = vsel %vm211, %v2210, -inf
  %2217 = vmax.xlane.f32.xlu0 %v2216
  %v2218 = vpop.xlane.xlu0 %2217
  %v2219 = vsub.f32 %v2207, %v2215
  %v2220 = vsub.f32 %v2210, %v2218
  %v2221 = vmul.f32 %v2219, 1.442695
  %v2222 = vpow.pop %v2221
  %v2223 = vmul.f32 %v2220, 1.442695
  %v2224 = vpow.pop %v2223
  %v2225 = vsel %vm211, %v2222, 0.0
  %2226 = vadd.xlane.f32.xlu0 %v2225
  %v2227 = vpop.xlane.xlu0 %2226
  %v2228 = vsel %vm211, %v2224, 0.0
  %2229 = vadd.xlane.f32.xlu0 %v2228
  %v2230 = vpop.xlane.xlu0 %2229
  %v2231 = vrcp.pop %v2227
  %v2232 = vrcp.pop %v2230
  %v2233 = vmul.f32 %v2222, %v2231
  %v2234 = vmul.f32 %v2224, %v2232
  %v2235 = vpack.c.bf16 %v2234, %v2233
  %2236 = vrot.lane.b32.xlu0 %v2162, 64
  %v2237 = vpop.permute.xlu0 %2236
  %v2240 = vsel %vm211, %v2235, 0
  %2242 = vmatprep.subr.bf16.mxu0 0
  %2243 = vmatpush1.bf16.msra.mxu0 0
  %2244 = vmatprep.subr.bf16.mxu0 0
  %2245 = vmatpush1.bf16.msra.mxu0 0
  %2246 = vmatprep.subr.bf16.mxu0 0
  %2247 = vmatpush1.bf16.msra.mxu0 0
  %2248 = vmatprep.subr.bf16.mxu0 0
  %2249 = vmatpush1.bf16.msra.mxu0 0
  %2250 = vmatprep.subr.bf16.mxu0 0
  %2251 = vmatpush1.bf16.msra.mxu0 0
  %2252 = vmatprep.subr.bf16.mxu0 0
  %2253 = vmatpush1.bf16.msra.mxu0 0
  %2254 = vmatprep.subr.bf16.mxu0 0
  %2255 = vmatpush1.bf16.msra.mxu0 0
  %2256 = vmatprep.subr.bf16.mxu0 0
  %2257 = vmatpush1.bf16.msra.mxu0 %v2237
  %2258 = vmatprep.subr.bf16.mxu0 0
  %2259 = vmatpush2.bf16.msra.mxu0 0
  %2260 = vmatprep.subr.bf16.mxu0 0
  %2261 = vmatpush2.bf16.msra.mxu0 0
  %2262 = vmatprep.subr.bf16.mxu0 0
  %2263 = vmatpush2.bf16.msra.mxu0 0
  %2264 = vmatprep.subr.bf16.mxu0 0
  %2265 = vmatpush2.bf16.msra.mxu0 0
  %2266 = vmatprep.subr.bf16.mxu0 0
  %2267 = vmatpush2.bf16.msra.mxu0 0
  %2268 = vmatprep.subr.bf16.mxu0 0
  %2269 = vmatpush2.bf16.msra.mxu0 0
  %2270 = vmatprep.subr.bf16.mxu0 0
  %2271 = vmatpush2.bf16.msra.mxu0 0
  %2272 = vmatprep.subr.bf16.mxu0 0
  %2273 = vmatpush2.bf16.msra.mxu0 0
  %2274 = vmatprep.mubr.bf16.mxu0 0
  %2275 = vmatmul.mubr.bf16.gmra.mxu0 %v2240
  %v2276 = vpop.f32.mrf.mxu0
  %v2277 = vadd.f32 0.0, %v2276
  %v2278 = vpop.f32.mrf.mxu0
  %v2279 = vpop.f32.mrf.mxu0
  %v2280 = vadd.f32 0.0, %v2279
  %v2281 = vpop.f32.mrf.mxu0
  %2282 = vdwg.mxu0
  %v2283 = vpack.c.bf16 %v2280, %v2277
  %v2284 = vld [vmem:[%s45] sm:$0xf]
  %2286 = vrot.lane.b32.xlu0 %v2161, 120
  %v2287 = vpop.permute.xlu0 %2286
  %2288 = vrot.lane.b32.xlu0 %v2162, 88
  %v2289 = vpop.permute.xlu0 %2288
  %v2291 = vsel %vm1123, %v2287, 0
  %v2294 = vsel %vm1123, %v2289, 0
  %2296 = vmatprep.subr.bf16.mxu0 0
  %2297 = vmatpush1.bf16.xpose.msra.mxu0 0
  %2298 = vmatprep.subr.bf16.mxu0 0
  %2299 = vmatpush1.bf16.xpose.msra.mxu0 0
  %2300 = vmatprep.subr.bf16.mxu0 0
  %2301 = vmatpush1.bf16.xpose.msra.mxu0 0
  %2302 = vmatprep.subr.bf16.mxu0 0
  %2303 = vmatpush1.bf16.xpose.msra.mxu0 0
  %2304 = vmatprep.subr.bf16.mxu0 0
  %2305 = vmatpush1.bf16.xpose.msra.mxu0 0
  %2306 = vmatprep.subr.bf16.mxu0 0
  %2307 = vmatpush1.bf16.xpose.msra.mxu0 0
  %2308 = vmatprep.subr.bf16.mxu0 0
  %2309 = vmatpush1.bf16.xpose.msra.mxu0 0
  %2310 = vmatprep.subr.bf16.mxu0 0
  %2311 = vmatpush1.bf16.xpose.msra.mxu0 %v2294
  %2312 = vmatprep.subr.bf16.mxu0 0
  %2313 = vmatpush2.bf16.xpose.msra.mxu0 0
  %2314 = vmatprep.subr.bf16.mxu0 0
  %2315 = vmatpush2.bf16.xpose.msra.mxu0 0
  %2316 = vmatprep.subr.bf16.mxu0 0
  %2317 = vmatpush2.bf16.xpose.msra.mxu0 0
  %2318 = vmatprep.subr.bf16.mxu0 0
  %2319 = vmatpush2.bf16.xpose.msra.mxu0 0
  %2320 = vmatprep.subr.bf16.mxu0 0
  %2321 = vmatpush2.bf16.xpose.msra.mxu0 0
  %2322 = vmatprep.subr.bf16.mxu0 0
  %2323 = vmatpush2.bf16.xpose.msra.mxu0 0
  %2324 = vmatprep.subr.bf16.mxu0 0
  %2325 = vmatpush2.bf16.xpose.msra.mxu0 0
  %2326 = vmatprep.subr.bf16.mxu0 0
  %2327 = vmatpush2.bf16.xpose.msra.mxu0 0
  %2328 = vmatprep.mubr.bf16.mxu0 0
  %2329 = vmatmul.mubr.bf16.gmra.mxu0 %v2291
  %v2330 = vpop.f32.mrf.mxu0
  %v2331 = vadd.f32 %v1044, %v2330
  %v2332 = vpop.f32.mrf.mxu0
  %v2333 = vpop.f32.mrf.mxu0
  %v2334 = vadd.f32 %v1045, %v2333
  %v2335 = vpop.f32.mrf.mxu0
  %2336 = vdwg.mxu0
  %v2337 = vsel %vm211, %v2331, -inf
  %2338 = vmax.xlane.f32.xlu0 %v2337
  %v2339 = vpop.xlane.xlu0 %2338
  %v2340 = vsel %vm211, %v2334, -inf
  %2341 = vmax.xlane.f32.xlu0 %v2340
  %v2342 = vpop.xlane.xlu0 %2341
  %v2343 = vsub.f32 %v2331, %v2339
  %v2344 = vsub.f32 %v2334, %v2342
  %v2345 = vmul.f32 %v2343, 1.442695
  %v2346 = vpow.pop %v2345
  %v2347 = vmul.f32 %v2344, 1.442695
  %v2348 = vpow.pop %v2347
  %v2349 = vsel %vm211, %v2346, 0.0
  %2350 = vadd.xlane.f32.xlu0 %v2349
  %v2351 = vpop.xlane.xlu0 %2350
  %v2352 = vsel %vm211, %v2348, 0.0
  %2353 = vadd.xlane.f32.xlu0 %v2352
  %v2354 = vpop.xlane.xlu0 %2353
  %v2355 = vrcp.pop %v2351
  %v2356 = vrcp.pop %v2354
  %v2357 = vmul.f32 %v2346, %v2355
  %v2358 = vmul.f32 %v2348, %v2356
  %v2359 = vpack.c.bf16 %v2358, %v2357
  %2360 = vrot.lane.b32.xlu0 %v2162, 56
  %v2361 = vpop.permute.xlu0 %2360
  %v2364 = vsel %vm211, %v2359, 0
  %2366 = vmatprep.subr.bf16.mxu0 0
  %2367 = vmatpush1.bf16.msra.mxu0 0
  %2368 = vmatprep.subr.bf16.mxu0 0
  %2369 = vmatpush1.bf16.msra.mxu0 0
  %2370 = vmatprep.subr.bf16.mxu0 0
  %2371 = vmatpush1.bf16.msra.mxu0 0
  %2372 = vmatprep.subr.bf16.mxu0 0
  %2373 = vmatpush1.bf16.msra.mxu0 0
  %2374 = vmatprep.subr.bf16.mxu0 0
  %2375 = vmatpush1.bf16.msra.mxu0 0
  %2376 = vmatprep.subr.bf16.mxu0 0
  %2377 = vmatpush1.bf16.msra.mxu0 0
  %2378 = vmatprep.subr.bf16.mxu0 0
  %2379 = vmatpush1.bf16.msra.mxu0 0
  %2380 = vmatprep.subr.bf16.mxu0 0
  %2381 = vmatpush1.bf16.msra.mxu0 %v2361
  %2382 = vmatprep.subr.bf16.mxu0 0
  %2383 = vmatpush2.bf16.msra.mxu0 0
  %2384 = vmatprep.subr.bf16.mxu0 0
  %2385 = vmatpush2.bf16.msra.mxu0 0
  %2386 = vmatprep.subr.bf16.mxu0 0
  %2387 = vmatpush2.bf16.msra.mxu0 0
  %2388 = vmatprep.subr.bf16.mxu0 0
  %2389 = vmatpush2.bf16.msra.mxu0 0
  %2390 = vmatprep.subr.bf16.mxu0 0
  %2391 = vmatpush2.bf16.msra.mxu0 0
  %2392 = vmatprep.subr.bf16.mxu0 0
  %2393 = vmatpush2.bf16.msra.mxu0 0
  %2394 = vmatprep.subr.bf16.mxu0 0
  %2395 = vmatpush2.bf16.msra.mxu0 0
  %2396 = vmatprep.subr.bf16.mxu0 0
  %2397 = vmatpush2.bf16.msra.mxu0 0
  %2398 = vmatprep.mubr.bf16.mxu0 0
  %2399 = vmatmul.mubr.bf16.gmra.mxu0 %v2364
  %v2400 = vpop.f32.mrf.mxu0
  %v2401 = vadd.f32 0.0, %v2400
  %v2402 = vpop.f32.mrf.mxu0
  %v2403 = vpop.f32.mrf.mxu0
  %v2404 = vadd.f32 0.0, %v2403
  %v2405 = vpop.f32.mrf.mxu0
  %2406 = vdwg.mxu0
  %v2407 = vpack.c.bf16 %v2404, %v2401
  %v2408 = vld [vmem:[%s45 + $0x4] sm:$0xf]
  %v2410 = vsel %vm1123, %v2407, 0
  %v2413 = vsel %vm1370, %v2408, 0
  %2415 = vmatprep.subr.bf16.mxu0 0
  %2416 = vmatpush1.bf16.msra.mxu0 0
  %2417 = vmatprep.subr.bf16.mxu0 0
  %2418 = vmatpush1.bf16.msra.mxu0 0
  %2419 = vmatprep.subr.bf16.mxu0 0
  %2420 = vmatpush1.bf16.msra.mxu0 0
  %2421 = vmatprep.subr.bf16.mxu0 0
  %2422 = vmatpush1.bf16.msra.mxu0 0
  %2423 = vmatprep.subr.bf16.mxu0 0
  %2424 = vmatpush1.bf16.msra.mxu0 0
  %2425 = vmatprep.subr.bf16.mxu0 0
  %2426 = vmatpush1.bf16.msra.mxu0 0
  %2427 = vmatprep.subr.bf16.mxu0 0
  %2428 = vmatpush1.bf16.msra.mxu0 0
  %2429 = vmatprep.subr.bf16.mxu0 0
  %2430 = vmatpush1.bf16.msra.mxu0 %v2413
  %2431 = vmatprep.subr.bf16.mxu0 0
  %2432 = vmatpush2.bf16.msra.mxu0 0
  %2433 = vmatprep.subr.bf16.mxu0 0
  %2434 = vmatpush2.bf16.msra.mxu0 0
  %2435 = vmatprep.subr.bf16.mxu0 0
  %2436 = vmatpush2.bf16.msra.mxu0 0
  %2437 = vmatprep.subr.bf16.mxu0 0
  %2438 = vmatpush2.bf16.msra.mxu0 0
  %2439 = vmatprep.subr.bf16.mxu0 0
  %2440 = vmatpush2.bf16.msra.mxu0 0
  %2441 = vmatprep.subr.bf16.mxu0 0
  %2442 = vmatpush2.bf16.msra.mxu0 0
  %2443 = vmatprep.subr.bf16.mxu0 0
  %2444 = vmatpush2.bf16.msra.mxu0 0
  %2445 = vmatprep.subr.bf16.mxu0 0
  %2446 = vmatpush2.bf16.msra.mxu0 0
  %2447 = vmatprep.mubr.bf16.mxu0 0
  %2448 = vmatmul.mubr.bf16.gmra.mxu0 %v2410
  %v2449 = vpop.f32.mrf.mxu0
  %v2450 = vadd.f32 0.0, %v2449
  %v2451 = vpop.f32.mrf.mxu0
  %v2452 = vpop.f32.mrf.mxu0
  %v2453 = vadd.f32 0.0, %v2452
  %v2454 = vpop.f32.mrf.mxu0
  %2455 = vdwg.mxu0
  %v2457 = vsel %vm1123, %v2283, 0
  %v2460 = vsel %vm1370, %v2284, 0
  %2462 = vmatprep.subr.bf16.mxu0 0
  %2463 = vmatpush1.bf16.msra.mxu0 0
  %2464 = vmatprep.subr.bf16.mxu0 0
  %2465 = vmatpush1.bf16.msra.mxu0 0
  %2466 = vmatprep.subr.bf16.mxu0 0
  %2467 = vmatpush1.bf16.msra.mxu0 0
  %2468 = vmatprep.subr.bf16.mxu0 0
  %2469 = vmatpush1.bf16.msra.mxu0 0
  %2470 = vmatprep.subr.bf16.mxu0 0
  %2471 = vmatpush1.bf16.msra.mxu0 0
  %2472 = vmatprep.subr.bf16.mxu0 0
  %2473 = vmatpush1.bf16.msra.mxu0 0
  %2474 = vmatprep.subr.bf16.mxu0 0
  %2475 = vmatpush1.bf16.msra.mxu0 0
  %2476 = vmatprep.subr.bf16.mxu0 0
  %2477 = vmatpush1.bf16.msra.mxu0 %v2460
  %2478 = vmatprep.subr.bf16.mxu0 0
  %2479 = vmatpush2.bf16.msra.mxu0 0
  %2480 = vmatprep.subr.bf16.mxu0 0
  %2481 = vmatpush2.bf16.msra.mxu0 0
  %2482 = vmatprep.subr.bf16.mxu0 0
  %2483 = vmatpush2.bf16.msra.mxu0 0
  %2484 = vmatprep.subr.bf16.mxu0 0
  %2485 = vmatpush2.bf16.msra.mxu0 0
  %2486 = vmatprep.subr.bf16.mxu0 0
  %2487 = vmatpush2.bf16.msra.mxu0 0
  %2488 = vmatprep.subr.bf16.mxu0 0
  %2489 = vmatpush2.bf16.msra.mxu0 0
  %2490 = vmatprep.subr.bf16.mxu0 0
  %2491 = vmatpush2.bf16.msra.mxu0 0
  %2492 = vmatprep.subr.bf16.mxu0 0
  %2493 = vmatpush2.bf16.msra.mxu0 0
  %2494 = vmatprep.mubr.bf16.mxu0 0
  %2495 = vmatmul.mubr.bf16.gmra.mxu0 %v2457
  %v2496 = vpop.f32.mrf.mxu0
  %v2497 = vadd.f32 %v2450, %v2496
  %v2498 = vpop.f32.mrf.mxu0
  %v2499 = vpop.f32.mrf.mxu0
  %v2500 = vadd.f32 %v2453, %v2499
  %v2501 = vpop.f32.mrf.mxu0
  %2502 = vdwg.mxu0
  %2503 = vrot.lane.b32.xlu0 %v2161, 112
  %v2504 = vpop.permute.xlu0 %2503
  %2505 = vrot.lane.b32.xlu0 %v2162, 80
  %v2506 = vpop.permute.xlu0 %2505
  %v2508 = vsel %vm1123, %v2504, 0
  %v2511 = vsel %vm1123, %v2506, 0
  %2513 = vmatprep.subr.bf16.mxu0 0
  %2514 = vmatpush1.bf16.xpose.msra.mxu0 0
  %2515 = vmatprep.subr.bf16.mxu0 0
  %2516 = vmatpush1.bf16.xpose.msra.mxu0 0
  %2517 = vmatprep.subr.bf16.mxu0 0
  %2518 = vmatpush1.bf16.xpose.msra.mxu0 0
  %2519 = vmatprep.subr.bf16.mxu0 0
  %2520 = vmatpush1.bf16.xpose.msra.mxu0 0
  %2521 = vmatprep.subr.bf16.mxu0 0
  %2522 = vmatpush1.bf16.xpose.msra.mxu0 0
  %2523 = vmatprep.subr.bf16.mxu0 0
  %2524 = vmatpush1.bf16.xpose.msra.mxu0 0
  %2525 = vmatprep.subr.bf16.mxu0 0
  %2526 = vmatpush1.bf16.xpose.msra.mxu0 0
  %2527 = vmatprep.subr.bf16.mxu0 0
  %2528 = vmatpush1.bf16.xpose.msra.mxu0 %v2511
  %2529 = vmatprep.subr.bf16.mxu0 0
  %2530 = vmatpush2.bf16.xpose.msra.mxu0 0
  %2531 = vmatprep.subr.bf16.mxu0 0
  %2532 = vmatpush2.bf16.xpose.msra.mxu0 0
  %2533 = vmatprep.subr.bf16.mxu0 0
  %2534 = vmatpush2.bf16.xpose.msra.mxu0 0
  %2535 = vmatprep.subr.bf16.mxu0 0
  %2536 = vmatpush2.bf16.xpose.msra.mxu0 0
  %2537 = vmatprep.subr.bf16.mxu0 0
  %2538 = vmatpush2.bf16.xpose.msra.mxu0 0
  %2539 = vmatprep.subr.bf16.mxu0 0
  %2540 = vmatpush2.bf16.xpose.msra.mxu0 0
  %2541 = vmatprep.subr.bf16.mxu0 0
  %2542 = vmatpush2.bf16.xpose.msra.mxu0 0
  %2543 = vmatprep.subr.bf16.mxu0 0
  %2544 = vmatpush2.bf16.xpose.msra.mxu0 0
  %2545 = vmatprep.mubr.bf16.mxu0 0
  %2546 = vmatmul.mubr.bf16.gmra.mxu0 %v2508
  %v2547 = vpop.f32.mrf.mxu0
  %v2548 = vadd.f32 %v1044, %v2547
  %v2549 = vpop.f32.mrf.mxu0
  %v2550 = vpop.f32.mrf.mxu0
  %v2551 = vadd.f32 %v1045, %v2550
  %v2552 = vpop.f32.mrf.mxu0
  %2553 = vdwg.mxu0
  %v2554 = vsel %vm211, %v2548, -inf
  %2555 = vmax.xlane.f32.xlu0 %v2554
  %v2556 = vpop.xlane.xlu0 %2555
  %v2557 = vsel %vm211, %v2551, -inf
  %2558 = vmax.xlane.f32.xlu0 %v2557
  %v2559 = vpop.xlane.xlu0 %2558
  %v2560 = vsub.f32 %v2548, %v2556
  %v2561 = vsub.f32 %v2551, %v2559
  %v2562 = vmul.f32 %v2560, 1.442695
  %v2563 = vpow.pop %v2562
  %v2564 = vmul.f32 %v2561, 1.442695
  %v2565 = vpow.pop %v2564
  %v2566 = vsel %vm211, %v2563, 0.0
  %2567 = vadd.xlane.f32.xlu0 %v2566
  %v2568 = vpop.xlane.xlu0 %2567
  %v2569 = vsel %vm211, %v2565, 0.0
  %2570 = vadd.xlane.f32.xlu0 %v2569
  %v2571 = vpop.xlane.xlu0 %2570
  %v2572 = vrcp.pop %v2568
  %v2573 = vrcp.pop %v2571
  %v2574 = vmul.f32 %v2563, %v2572
  %v2575 = vmul.f32 %v2565, %v2573
  %v2576 = vpack.c.bf16 %v2575, %v2574
  %2577 = vrot.lane.b32.xlu0 %v2162, 48
  %v2578 = vpop.permute.xlu0 %2577
  %v2581 = vsel %vm211, %v2576, 0
  %2583 = vmatprep.subr.bf16.mxu0 0
  %2584 = vmatpush1.bf16.msra.mxu0 0
  %2585 = vmatprep.subr.bf16.mxu0 0
  %2586 = vmatpush1.bf16.msra.mxu0 0
  %2587 = vmatprep.subr.bf16.mxu0 0
  %2588 = vmatpush1.bf16.msra.mxu0 0
  %2589 = vmatprep.subr.bf16.mxu0 0
  %2590 = vmatpush1.bf16.msra.mxu0 0
  %2591 = vmatprep.subr.bf16.mxu0 0
  %2592 = vmatpush1.bf16.msra.mxu0 0
  %2593 = vmatprep.subr.bf16.mxu0 0
  %2594 = vmatpush1.bf16.msra.mxu0 0
  %2595 = vmatprep.subr.bf16.mxu0 0
  %2596 = vmatpush1.bf16.msra.mxu0 0
  %2597 = vmatprep.subr.bf16.mxu0 0
  %2598 = vmatpush1.bf16.msra.mxu0 %v2578
  %2599 = vmatprep.subr.bf16.mxu0 0
  %2600 = vmatpush2.bf16.msra.mxu0 0
  %2601 = vmatprep.subr.bf16.mxu0 0
  %2602 = vmatpush2.bf16.msra.mxu0 0
  %2603 = vmatprep.subr.bf16.mxu0 0
  %2604 = vmatpush2.bf16.msra.mxu0 0
  %2605 = vmatprep.subr.bf16.mxu0 0
  %2606 = vmatpush2.bf16.msra.mxu0 0
  %2607 = vmatprep.subr.bf16.mxu0 0
  %2608 = vmatpush2.bf16.msra.mxu0 0
  %2609 = vmatprep.subr.bf16.mxu0 0
  %2610 = vmatpush2.bf16.msra.mxu0 0
  %2611 = vmatprep.subr.bf16.mxu0 0
  %2612 = vmatpush2.bf16.msra.mxu0 0
  %2613 = vmatprep.subr.bf16.mxu0 0
  %2614 = vmatpush2.bf16.msra.mxu0 0
  %2615 = vmatprep.mubr.bf16.mxu0 0
  %2616 = vmatmul.mubr.bf16.gmra.mxu0 %v2581
  %v2617 = vpop.f32.mrf.mxu0
  %v2618 = vadd.f32 0.0, %v2617
  %v2619 = vpop.f32.mrf.mxu0
  %v2620 = vpop.f32.mrf.mxu0
  %v2621 = vadd.f32 0.0, %v2620
  %v2622 = vpop.f32.mrf.mxu0
  %2623 = vdwg.mxu0
  %v2624 = vpack.c.bf16 %v2621, %v2618
  %v2625 = vld [vmem:[%s45 + $0x8] sm:$0xf]
  %v2627 = vsel %vm1123, %v2624, 0
  %v2630 = vsel %vm1370, %v2625, 0
  %2632 = vmatprep.subr.bf16.mxu0 0
  %2633 = vmatpush1.bf16.msra.mxu0 0
  %2634 = vmatprep.subr.bf16.mxu0 0
  %2635 = vmatpush1.bf16.msra.mxu0 0
  %2636 = vmatprep.subr.bf16.mxu0 0
  %2637 = vmatpush1.bf16.msra.mxu0 0
  %2638 = vmatprep.subr.bf16.mxu0 0
  %2639 = vmatpush1.bf16.msra.mxu0 0
  %2640 = vmatprep.subr.bf16.mxu0 0
  %2641 = vmatpush1.bf16.msra.mxu0 0
  %2642 = vmatprep.subr.bf16.mxu0 0
  %2643 = vmatpush1.bf16.msra.mxu0 0
  %2644 = vmatprep.subr.bf16.mxu0 0
  %2645 = vmatpush1.bf16.msra.mxu0 0
  %2646 = vmatprep.subr.bf16.mxu0 0
  %2647 = vmatpush1.bf16.msra.mxu0 %v2630
  %2648 = vmatprep.subr.bf16.mxu0 0
  %2649 = vmatpush2.bf16.msra.mxu0 0
  %2650 = vmatprep.subr.bf16.mxu0 0
  %2651 = vmatpush2.bf16.msra.mxu0 0
  %2652 = vmatprep.subr.bf16.mxu0 0
  %2653 = vmatpush2.bf16.msra.mxu0 0
  %2654 = vmatprep.subr.bf16.mxu0 0
  %2655 = vmatpush2.bf16.msra.mxu0 0
  %2656 = vmatprep.subr.bf16.mxu0 0
  %2657 = vmatpush2.bf16.msra.mxu0 0
  %2658 = vmatprep.subr.bf16.mxu0 0
  %2659 = vmatpush2.bf16.msra.mxu0 0
  %2660 = vmatprep.subr.bf16.mxu0 0
  %2661 = vmatpush2.bf16.msra.mxu0 0
  %2662 = vmatprep.subr.bf16.mxu0 0
  %2663 = vmatpush2.bf16.msra.mxu0 0
  %2664 = vmatprep.mubr.bf16.mxu0 0
  %2665 = vmatmul.mubr.bf16.gmra.mxu0 %v2627
  %v2666 = vpop.f32.mrf.mxu0
  %v2667 = vadd.f32 0.0, %v2666
  %v2668 = vpop.f32.mrf.mxu0
  %v2669 = vpop.f32.mrf.mxu0
  %v2670 = vadd.f32 0.0, %v2669
  %v2671 = vpop.f32.mrf.mxu0
  %2672 = vdwg.mxu0
  %v2673 = vadd.f32 %v2497, %v2667
  %v2674 = vadd.f32 %v2500, %v2670
  %2675 = vrot.lane.b32.xlu0 %v2161, 104
  %v2676 = vpop.permute.xlu0 %2675
  %2677 = vrot.lane.b32.xlu0 %v2162, 72
  %v2678 = vpop.permute.xlu0 %2677
  %v2680 = vsel %vm1123, %v2676, 0
  %v2683 = vsel %vm1123, %v2678, 0
  %2685 = vmatprep.subr.bf16.mxu0 0
  %2686 = vmatpush1.bf16.xpose.msra.mxu0 0
  %2687 = vmatprep.subr.bf16.mxu0 0
  %2688 = vmatpush1.bf16.xpose.msra.mxu0 0
  %2689 = vmatprep.subr.bf16.mxu0 0
  %2690 = vmatpush1.bf16.xpose.msra.mxu0 0
  %2691 = vmatprep.subr.bf16.mxu0 0
  %2692 = vmatpush1.bf16.xpose.msra.mxu0 0
  %2693 = vmatprep.subr.bf16.mxu0 0
  %2694 = vmatpush1.bf16.xpose.msra.mxu0 0
  %2695 = vmatprep.subr.bf16.mxu0 0
  %2696 = vmatpush1.bf16.xpose.msra.mxu0 0
  %2697 = vmatprep.subr.bf16.mxu0 0
  %2698 = vmatpush1.bf16.xpose.msra.mxu0 0
  %2699 = vmatprep.subr.bf16.mxu0 0
  %2700 = vmatpush1.bf16.xpose.msra.mxu0 %v2683
  %2701 = vmatprep.subr.bf16.mxu0 0
  %2702 = vmatpush2.bf16.xpose.msra.mxu0 0
  %2703 = vmatprep.subr.bf16.mxu0 0
  %2704 = vmatpush2.bf16.xpose.msra.mxu0 0
  %2705 = vmatprep.subr.bf16.mxu0 0
  %2706 = vmatpush2.bf16.xpose.msra.mxu0 0
  %2707 = vmatprep.subr.bf16.mxu0 0
  %2708 = vmatpush2.bf16.xpose.msra.mxu0 0
  %2709 = vmatprep.subr.bf16.mxu0 0
  %2710 = vmatpush2.bf16.xpose.msra.mxu0 0
  %2711 = vmatprep.subr.bf16.mxu0 0
  %2712 = vmatpush2.bf16.xpose.msra.mxu0 0
  %2713 = vmatprep.subr.bf16.mxu0 0
  %2714 = vmatpush2.bf16.xpose.msra.mxu0 0
  %2715 = vmatprep.subr.bf16.mxu0 0
  %2716 = vmatpush2.bf16.xpose.msra.mxu0 0
  %2717 = vmatprep.mubr.bf16.mxu0 0
  %2718 = vmatmul.mubr.bf16.gmra.mxu0 %v2680
  %v2719 = vpop.f32.mrf.mxu0
  %v2720 = vadd.f32 %v1044, %v2719
  %v2721 = vpop.f32.mrf.mxu0
  %v2722 = vpop.f32.mrf.mxu0
  %v2723 = vadd.f32 %v1045, %v2722
  %v2724 = vpop.f32.mrf.mxu0
  %2725 = vdwg.mxu0
  %v2726 = vsel %vm211, %v2720, -inf
  %2727 = vmax.xlane.f32.xlu0 %v2726
  %v2728 = vpop.xlane.xlu0 %2727
  %v2729 = vsel %vm211, %v2723, -inf
  %2730 = vmax.xlane.f32.xlu0 %v2729
  %v2731 = vpop.xlane.xlu0 %2730
  %v2732 = vsub.f32 %v2720, %v2728
  %v2733 = vsub.f32 %v2723, %v2731
  %v2734 = vmul.f32 %v2732, 1.442695
  %v2735 = vpow.pop %v2734
  %v2736 = vmul.f32 %v2733, 1.442695
  %v2737 = vpow.pop %v2736
  %v2738 = vsel %vm211, %v2735, 0.0
  %2739 = vadd.xlane.f32.xlu0 %v2738
  %v2740 = vpop.xlane.xlu0 %2739
  %v2741 = vsel %vm211, %v2737, 0.0
  %2742 = vadd.xlane.f32.xlu0 %v2741
  %v2743 = vpop.xlane.xlu0 %2742
  %v2744 = vrcp.pop %v2740
  %v2745 = vrcp.pop %v2743
  %v2746 = vmul.f32 %v2735, %v2744
  %v2747 = vmul.f32 %v2737, %v2745
  %v2748 = vpack.c.bf16 %v2747, %v2746
  %2749 = vrot.lane.b32.xlu0 %v2162, 40
  %v2750 = vpop.permute.xlu0 %2749
  %v2753 = vsel %vm211, %v2748, 0
  %2755 = vmatprep.subr.bf16.mxu0 0
  %2756 = vmatpush1.bf16.msra.mxu0 0
  %2757 = vmatprep.subr.bf16.mxu0 0
  %2758 = vmatpush1.bf16.msra.mxu0 0
  %2759 = vmatprep.subr.bf16.mxu0 0
  %2760 = vmatpush1.bf16.msra.mxu0 0
  %2761 = vmatprep.subr.bf16.mxu0 0
  %2762 = vmatpush1.bf16.msra.mxu0 0
  %2763 = vmatprep.subr.bf16.mxu0 0
  %2764 = vmatpush1.bf16.msra.mxu0 0
  %2765 = vmatprep.subr.bf16.mxu0 0
  %2766 = vmatpush1.bf16.msra.mxu0 0
  %2767 = vmatprep.subr.bf16.mxu0 0
  %2768 = vmatpush1.bf16.msra.mxu0 0
  %2769 = vmatprep.subr.bf16.mxu0 0
  %2770 = vmatpush1.bf16.msra.mxu0 %v2750
  %2771 = vmatprep.subr.bf16.mxu0 0
  %2772 = vmatpush2.bf16.msra.mxu0 0
  %2773 = vmatprep.subr.bf16.mxu0 0
  %2774 = vmatpush2.bf16.msra.mxu0 0
  %2775 = vmatprep.subr.bf16.mxu0 0
  %2776 = vmatpush2.bf16.msra.mxu0 0
  %2777 = vmatprep.subr.bf16.mxu0 0
  %2778 = vmatpush2.bf16.msra.mxu0 0
  %2779 = vmatprep.subr.bf16.mxu0 0
  %2780 = vmatpush2.bf16.msra.mxu0 0
  %2781 = vmatprep.subr.bf16.mxu0 0
  %2782 = vmatpush2.bf16.msra.mxu0 0
  %2783 = vmatprep.subr.bf16.mxu0 0
  %2784 = vmatpush2.bf16.msra.mxu0 0
  %2785 = vmatprep.subr.bf16.mxu0 0
  %2786 = vmatpush2.bf16.msra.mxu0 0
  %2787 = vmatprep.mubr.bf16.mxu0 0
  %2788 = vmatmul.mubr.bf16.gmra.mxu0 %v2753
  %v2789 = vpop.f32.mrf.mxu0
  %v2790 = vadd.f32 0.0, %v2789
  %v2791 = vpop.f32.mrf.mxu0
  %v2792 = vpop.f32.mrf.mxu0
  %v2793 = vadd.f32 0.0, %v2792
  %v2794 = vpop.f32.mrf.mxu0
  %2795 = vdwg.mxu0
  %v2796 = vpack.c.bf16 %v2793, %v2790
  %v2797 = vld [vmem:[%s45 + $0xc] sm:$0xf]
  %v2799 = vsel %vm1123, %v2796, 0
  %v2802 = vsel %vm1370, %v2797, 0
  %2804 = vmatprep.subr.bf16.mxu0 0
  %2805 = vmatpush1.bf16.msra.mxu0 0
  %2806 = vmatprep.subr.bf16.mxu0 0
  %2807 = vmatpush1.bf16.msra.mxu0 0
  %2808 = vmatprep.subr.bf16.mxu0 0
  %2809 = vmatpush1.bf16.msra.mxu0 0
  %2810 = vmatprep.subr.bf16.mxu0 0
  %2811 = vmatpush1.bf16.msra.mxu0 0
  %2812 = vmatprep.subr.bf16.mxu0 0
  %2813 = vmatpush1.bf16.msra.mxu0 0
  %2814 = vmatprep.subr.bf16.mxu0 0
  %2815 = vmatpush1.bf16.msra.mxu0 0
  %2816 = vmatprep.subr.bf16.mxu0 0
  %2817 = vmatpush1.bf16.msra.mxu0 0
  %2818 = vmatprep.subr.bf16.mxu0 0
  %2819 = vmatpush1.bf16.msra.mxu0 %v2802
  %2820 = vmatprep.subr.bf16.mxu0 0
  %2821 = vmatpush2.bf16.msra.mxu0 0
  %2822 = vmatprep.subr.bf16.mxu0 0
  %2823 = vmatpush2.bf16.msra.mxu0 0
  %2824 = vmatprep.subr.bf16.mxu0 0
  %2825 = vmatpush2.bf16.msra.mxu0 0
  %2826 = vmatprep.subr.bf16.mxu0 0
  %2827 = vmatpush2.bf16.msra.mxu0 0
  %2828 = vmatprep.subr.bf16.mxu0 0
  %2829 = vmatpush2.bf16.msra.mxu0 0
  %2830 = vmatprep.subr.bf16.mxu0 0
  %2831 = vmatpush2.bf16.msra.mxu0 0
  %2832 = vmatprep.subr.bf16.mxu0 0
  %2833 = vmatpush2.bf16.msra.mxu0 0
  %2834 = vmatprep.subr.bf16.mxu0 0
  %2835 = vmatpush2.bf16.msra.mxu0 0
  %2836 = vmatprep.mubr.bf16.mxu0 0
  %2837 = vmatmul.mubr.bf16.gmra.mxu0 %v2799
  %v2838 = vpop.f32.mrf.mxu0
  %v2839 = vadd.f32 0.0, %v2838
  %v2840 = vpop.f32.mrf.mxu0
  %v2841 = vpop.f32.mrf.mxu0
  %v2842 = vadd.f32 0.0, %v2841
  %v2843 = vpop.f32.mrf.mxu0
  %2844 = vdwg.mxu0
  %v2845 = vadd.f32 %v2673, %v2839
  %v2846 = vadd.f32 %v2674, %v2842
  %v2847 = vld [vmem:[%s47] sm:$0x1]
  %v2849 = vlaneseq
  %v2850 = vshrl.u32 %v2849, 7
  %v2851 = vsub.s32 0, %v2850
  %v2852 = vrot.slane %v2847, %v2851
  %v2854 = vadd.f32 %v2845, %v2852
  %v2855 = vadd.f32 %v2846, %v2852
  %v2856 = vadd.f32 %v2089, %v2854
  %v2857 = vadd.f32 %v2090, %v2855
  %v2858 = vld [vmem:[%s49] sm:$0x1]
  %v2859 = vld [vmem:[%s51] sm:$0x1]
  %v2860 = vsel %vm280, %v2856, 0.0
  %2861 = vadd.xlane.f32.xlu0 %v2860
  %v2862 = vpop.xlane.xlu0 %2861
  %v2863 = vsel %vm280, %v2857, 0.0
  %2864 = vadd.xlane.f32.xlu0 %v2863
  %v2865 = vpop.xlane.xlu0 %2864
  %v2866 = vmul.f32 %v2862, %v1825
  %v2867 = vmul.f32 %v2865, %v1825
  %v2868 = vsub.f32 %v2856, %v2866
  %v2869 = vsub.f32 %v2857, %v2867
  %v2870 = vmul.f32 %v2868, %v2868
  %v2871 = vmul.f32 %v2869, %v2869
  %v2872 = vsel %vm280, %v2870, 0.0
  %2873 = vadd.xlane.f32.xlu0 %v2872
  %v2874 = vpop.xlane.xlu0 %2873
  %v2875 = vsel %vm280, %v2871, 0.0
  %2876 = vadd.xlane.f32.xlu0 %v2875
  %v2877 = vpop.xlane.xlu0 %2876
  %v2878 = vmul.f32 %v2874, %v1825
  %v2879 = vmul.f32 %v2877, %v1825
  %v2880 = vadd.f32 %v2878, 1e-05
  %v2881 = vadd.f32 %v2879, 1e-05
  %v2882 = vrsqrt.pop %v2880
  %v2883 = vrsqrt.pop %v2881
  %v2884 = vmul.f32 %v2868, %v2882
  %v2885 = vmul.f32 %v2869, %v2883
  %v2887 = vlaneseq
  %v2888 = vshrl.u32 %v2887, 7
  %v2889 = vsub.s32 0, %v2888
  %v2890 = vrot.slane %v2858, %v2889
  %v2892 = vmul.f32 %v2884, %v2890
  %v2893 = vmul.f32 %v2885, %v2890
  %v2895 = vlaneseq
  %v2896 = vshrl.u32 %v2895, 7
  %v2897 = vsub.s32 0, %v2896
  %v2898 = vrot.slane %v2859, %v2897
  %v2900 = vadd.f32 %v2892, %v2898
  %v2901 = vadd.f32 %v2893, %v2898
  %v2902 = vpack.c.bf16 %v2901, %v2900
  %v2903 = vld [vmem:[%s53] sm:$0xf]
  %v2904 = vld [vmem:[%s53 + $0x4] sm:$0xf]
  %v2905 = vld [vmem:[%s53 + $0x8] sm:$0xf]
  %v2906 = vld [vmem:[%s53 + $0xc] sm:$0xf]
  %v2907 = vld [vmem:[%s55] sm:$0x1]
  %v2909 = vlaneseq
  %v2910 = vshrl.u32 %v2909, 7
  %v2911 = vsub.s32 0, %v2910
  %v2912 = vrot.slane %v2907, %v2911
  %v2918 = vunpack.c.l.b16 %v2903
  %v2919 = vunpack.c.l.b16 %v2904
  %v2920 = vunpack.c.l.b16 %v2905
  %v2921 = vunpack.c.l.b16 %v2906
  %v2922 = vpack.c.b16 %v2919, %v2918
  %v2923 = vpack.c.b16 %v2921, %v2920
  %v2927 = vsel %vm280, %v2902, 0
  %2929 = vmatprep.subr.bf16.mxu0 0
  %2930 = vmatpush1.bf16.msra.mxu0 0
  %2931 = vmatprep.subr.bf16.mxu0 0
  %2932 = vmatpush1.bf16.msra.mxu0 0
  %2933 = vmatprep.subr.bf16.mxu0 0
  %2934 = vmatpush1.bf16.msra.mxu0 0
  %2935 = vmatprep.subr.bf16.mxu0 0
  %2936 = vmatpush1.bf16.msra.mxu0 0
  %2937 = vmatprep.subr.bf16.mxu0 0
  %2938 = vmatpush1.bf16.msra.mxu0 0
  %2939 = vmatprep.subr.bf16.mxu0 0
  %2940 = vmatpush1.bf16.msra.mxu0 0
  %2941 = vmatprep.subr.bf16.mxu0 0
  %2942 = vmatpush1.bf16.msra.mxu0 %v2923
  %2943 = vmatprep.subr.bf16.mxu0 0
  %2944 = vmatpush1.bf16.msra.mxu0 %v2922
  %2945 = vmatprep.subr.bf16.mxu0 0
  %2946 = vmatpush2.bf16.msra.mxu0 0
  %2947 = vmatprep.subr.bf16.mxu0 0
  %2948 = vmatpush2.bf16.msra.mxu0 0
  %2949 = vmatprep.subr.bf16.mxu0 0
  %2950 = vmatpush2.bf16.msra.mxu0 0
  %2951 = vmatprep.subr.bf16.mxu0 0
  %2952 = vmatpush2.bf16.msra.mxu0 0
  %2953 = vmatprep.subr.bf16.mxu0 0
  %2954 = vmatpush2.bf16.msra.mxu0 0
  %2955 = vmatprep.subr.bf16.mxu0 0
  %2956 = vmatpush2.bf16.msra.mxu0 0
  %2957 = vmatprep.subr.bf16.mxu0 0
  %2958 = vmatpush2.bf16.msra.mxu0 0
  %2959 = vmatprep.subr.bf16.mxu0 0
  %2960 = vmatpush2.bf16.msra.mxu0 0
  %2961 = vmatprep.mubr.bf16.mxu0 0
  %2962 = vmatmul.mubr.bf16.gmra.mxu0 %v2927
  %v2963 = vpop.f32.mrf.mxu0
  %v2964 = vadd.f32 %v2912, %v2963
  %v2965 = vpop.f32.mrf.mxu0
  %v2966 = vpop.f32.mrf.mxu0
  %v2967 = vadd.f32 %v2912, %v2966
  %v2968 = vpop.f32.mrf.mxu0
  %2969 = vdwg.mxu0
  %v2970 = vmax.f32 %v2964, 0.0
  %v2971 = vmax.f32 %v2967, 0.0
  %v2972 = vpack.c.bf16 %v2971, %v2970
  %v2973 = vld [vmem:[%s57] sm:$0xf]
  %v2974 = vld [vmem:[%s57 + $0x4] sm:$0xf]
  %v2975 = vld [vmem:[%s57 + $0x8] sm:$0xf]
  %v2976 = vld [vmem:[%s57 + $0xc] sm:$0xf]
  %v2977 = vld [vmem:[%s57 + $0x10] sm:$0xf]
  %v2978 = vld [vmem:[%s57 + $0x14] sm:$0xf]
  %v2979 = vld [vmem:[%s57 + $0x18] sm:$0xf]
  %v2980 = vld [vmem:[%s57 + $0x1c] sm:$0xf]
  %v2981 = vld [vmem:[%s57 + $0x20] sm:$0xf]
  %v2982 = vld [vmem:[%s57 + $0x24] sm:$0xf]
  %v2983 = vld [vmem:[%s57 + $0x28] sm:$0xf]
  %v2984 = vld [vmem:[%s57 + $0x2c] sm:$0xf]
  %v2985 = vld [vmem:[%s57 + $0x30] sm:$0xf]
  %v2986 = vld [vmem:[%s57 + $0x34] sm:$0xf]
  %v2987 = vld [vmem:[%s57 + $0x38] sm:$0xf]
  %v2988 = vld [vmem:[%s57 + $0x3c] sm:$0xf]
  %v2989 = vld [vmem:[%s59] sm:$0x1]
  %v2991 = vlaneseq
  %v2992 = vshrl.u32 %v2991, 7
  %v2993 = vsub.s32 0, %v2992
  %v2994 = vrot.slane %v2989, %v2993
  %v3012 = vunpack.c.l.b16 %v2973
  %v3013 = vunpack.c.l.b16 %v2974
  %v3014 = vunpack.c.l.b16 %v2975
  %v3015 = vunpack.c.l.b16 %v2976
  %v3016 = vunpack.c.l.b16 %v2977
  %v3017 = vunpack.c.l.b16 %v2978
  %v3018 = vunpack.c.l.b16 %v2979
  %v3019 = vunpack.c.l.b16 %v2980
  %v3020 = vunpack.c.l.b16 %v2981
  %v3021 = vunpack.c.l.b16 %v2982
  %v3022 = vunpack.c.l.b16 %v2983
  %v3023 = vunpack.c.l.b16 %v2984
  %v3024 = vunpack.c.l.b16 %v2985
  %v3025 = vunpack.c.l.b16 %v2986
  %v3026 = vunpack.c.l.b16 %v2987
  %v3027 = vunpack.c.l.b16 %v2988
  %v3028 = vpack.c.b16 %v3013, %v3012
  %v3029 = vpack.c.b16 %v3015, %v3014
  %v3030 = vpack.c.b16 %v3017, %v3016
  %v3031 = vpack.c.b16 %v3019, %v3018
  %v3032 = vpack.c.b16 %v3021, %v3020
  %v3033 = vpack.c.b16 %v3023, %v3022
  %v3034 = vpack.c.b16 %v3025, %v3024
  %v3035 = vpack.c.b16 %v3027, %v3026
  %3044 = vmatprep.subr.bf16.mxu0 0
  %3045 = vmatpush1.bf16.msra.mxu0 %v3035
  %3046 = vmatprep.subr.bf16.mxu0 0
  %3047 = vmatpush1.bf16.msra.mxu0 %v3034
  %3048 = vmatprep.subr.bf16.mxu0 0
  %3049 = vmatpush1.bf16.msra.mxu0 %v3033
  %3050 = vmatprep.subr.bf16.mxu0 0
  %3051 = vmatpush1.bf16.msra.mxu0 %v3032
  %3052 = vmatprep.subr.bf16.mxu0 0
  %3053 = vmatpush1.bf16.msra.mxu0 %v3031
  %3054 = vmatprep.subr.bf16.mxu0 0
  %3055 = vmatpush1.bf16.msra.mxu0 %v3030
  %3056 = vmatprep.subr.bf16.mxu0 0
  %3057 = vmatpush1.bf16.msra.mxu0 %v3029
  %3058 = vmatprep.subr.bf16.mxu0 0
  %3059 = vmatpush1.bf16.msra.mxu0 %v3028
  %3060 = vmatprep.subr.bf16.mxu0 0
  %3061 = vmatpush2.bf16.msra.mxu0 0
  %3062 = vmatprep.subr.bf16.mxu0 0
  %3063 = vmatpush2.bf16.msra.mxu0 0
  %3064 = vmatprep.subr.bf16.mxu0 0
  %3065 = vmatpush2.bf16.msra.mxu0 0
  %3066 = vmatprep.subr.bf16.mxu0 0
  %3067 = vmatpush2.bf16.msra.mxu0 0
  %3068 = vmatprep.subr.bf16.mxu0 0
  %3069 = vmatpush2.bf16.msra.mxu0 0
  %3070 = vmatprep.subr.bf16.mxu0 0
  %3071 = vmatpush2.bf16.msra.mxu0 0
  %3072 = vmatprep.subr.bf16.mxu0 0
  %3073 = vmatpush2.bf16.msra.mxu0 0
  %3074 = vmatprep.subr.bf16.mxu0 0
  %3075 = vmatpush2.bf16.msra.mxu0 0
  %3076 = vmatprep.mubr.bf16.mxu0 0
  %3077 = vmatmul.mubr.bf16.gmra.mxu0 %v2972
  %v3078 = vpop.f32.mrf.mxu0
  %v3079 = vpop.f32.mrf.mxu0
  %v3080 = vpop.f32.mrf.mxu0
  %v3081 = vadd.f32 %v2994, %v3080
  %v3082 = vpop.f32.mrf.mxu0
  %3083 = vdwg.mxu0
  %v3084 = vadd.f32 %v2901, %v3081
  %v3085 = vld [vmem:[%s61] sm:$0x1]
  %v3086 = vld [vmem:[%s63] sm:$0x1]
  %v3087 = vsel %vm280, %v3084, 0.0
  %3088 = vadd.xlane.f32.xlu0 %v3087
  %v3089 = vpop.xlane.xlu0 %3088
  %v3090 = vmul.f32 %v3089, %v1825
  %v3091 = vsub.f32 %v3084, %v3090
  %v3092 = vmul.f32 %v3091, %v3091
  %v3093 = vsel %vm280, %v3092, 0.0
  %3094 = vadd.xlane.f32.xlu0 %v3093
  %v3095 = vpop.xlane.xlu0 %3094
  %v3096 = vmul.f32 %v3095, %v1825
  %v3097 = vadd.f32 %v3096, 1e-05
  %v3098 = vrsqrt.pop %v3097
  %v3099 = vmul.f32 %v3091, %v3098
  %v3101 = vlaneseq
  %v3102 = vshrl.u32 %v3101, 7
  %v3103 = vsub.s32 0, %v3102
  %v3104 = vrot.slane %v3085, %v3103
  %v3106 = vmul.f32 %v3099, %v3104
  %v3108 = vlaneseq
  %v3109 = vshrl.u32 %v3108, 7
  %v3110 = vsub.s32 0, %v3109
  %v3111 = vrot.slane %v3086, %v3110
  %v3113 = vadd.f32 %v3106, %v3111
  %v3114 = vpack.c.bf16 %v3113, %v3113
  %v3115 = vld [vmem:[%s65] sm:$0xf]
  %v3116 = vld [vmem:[%s65 + $0x4] sm:$0xf]
  %v3117 = vld [vmem:[%s65 + $0x8] sm:$0xf]
  %v3118 = vld [vmem:[%s65 + $0xc] sm:$0xf]
  %v3119 = vld [vmem:[%s67] sm:$0x1]
  %v3121 = vlaneseq
  %v3122 = vshrl.u32 %v3121, 7
  %v3123 = vsub.s32 0, %v3122
  %v3124 = vrot.slane %v3119, %v3123
  %v3127 = vrot.slane %v3114, 3
  %v3132 = vunpack.c.l.b16 %v3115
  %v3133 = vunpack.c.l.b16 %v3116
  %v3134 = vunpack.c.l.b16 %v3117
  %v3135 = vunpack.c.l.b16 %v3118
  %v3136 = vpack.c.b16 %v3133, %v3132
  %v3137 = vpack.c.b16 %v3135, %v3134
  %v3141 = vsel %vm280, %v3127, 0
  %3143 = vmatprep.subr.bf16.mxu0 0
  %3144 = vmatpush1.bf16.msra.mxu0 0
  %3145 = vmatprep.subr.bf16.mxu0 0
  %3146 = vmatpush1.bf16.msra.mxu0 0
  %3147 = vmatprep.subr.bf16.mxu0 0
  %3148 = vmatpush1.bf16.msra.mxu0 0
  %3149 = vmatprep.subr.bf16.mxu0 0
  %3150 = vmatpush1.bf16.msra.mxu0 0
  %3151 = vmatprep.subr.bf16.mxu0 0
  %3152 = vmatpush1.bf16.msra.mxu0 0
  %3153 = vmatprep.subr.bf16.mxu0 0
  %3154 = vmatpush1.bf16.msra.mxu0 0
  %3155 = vmatprep.subr.bf16.mxu0 0
  %3156 = vmatpush1.bf16.msra.mxu0 %v3137
  %3157 = vmatprep.subr.bf16.mxu0 0
  %3158 = vmatpush1.bf16.msra.mxu0 %v3136
  %3159 = vmatprep.subr.bf16.mxu0 0
  %3160 = vmatpush2.bf16.msra.mxu0 0
  %3161 = vmatprep.subr.bf16.mxu0 0
  %3162 = vmatpush2.bf16.msra.mxu0 0
  %3163 = vmatprep.subr.bf16.mxu0 0
  %3164 = vmatpush2.bf16.msra.mxu0 0
  %3165 = vmatprep.subr.bf16.mxu0 0
  %3166 = vmatpush2.bf16.msra.mxu0 0
  %3167 = vmatprep.subr.bf16.mxu0 0
  %3168 = vmatpush2.bf16.msra.mxu0 0
  %3169 = vmatprep.subr.bf16.mxu0 0
  %3170 = vmatpush2.bf16.msra.mxu0 0
  %3171 = vmatprep.subr.bf16.mxu0 0
  %3172 = vmatpush2.bf16.msra.mxu0 0
  %3173 = vmatprep.subr.bf16.mxu0 0
  %3174 = vmatpush2.bf16.msra.mxu0 0
  %3175 = vmatprep.mubr.bf16.mxu0 0
  %3176 = vmatmul.mubr.bf16.gmra.mxu0 %v3141
  %v3177 = vpop.f32.mrf.mxu0
  %v3178 = vadd.f32 %v3124, %v3177
  %v3179 = vpop.f32.mrf.mxu0
  %v3180 = vpop.f32.mrf.mxu0
  %v3181 = vpop.f32.mrf.mxu0
  %3182 = vdwg.mxu0
  %3184 = vrot.lane.b32.xlu0 %v1028, 36
  %v3185 = vpop.permute.xlu0 %3184
  %3188 = vrot.lane.b32.xlu0 %v1022, 4
  %v3189 = vpop.permute.xlu0 %3188
  %vm3191 = vcmask 31744
  %v3192 = vsel %vm3191, %v3178, %v3185
  %vm3193 = vcmask 293888
  %v3194 = vsel %vm3193, %v3192, %v3189
  %vm3195 = vcmask 556032
  %v3196 = vsel %vm3195, %v3194, 0.0
  %3197 = vst [vmem:[%s69] sm:$0x3] %v3196
  // Predicated region
  $region138: #{forward.1} parent=0 // pred_check
    _
  $region139: #{forward.1} parent=0 // pred_check_branch
    %3199 = sbr.rel (0) target = $region141
  $region140: #{forward.1} parent=0 // pred_region
    _
  $region141: #{forward.1} parent=0 // pred_fallthru
    _
  // Predicated region
  $region142: #{forward.1} parent=0 // pred_check
    _
  $region143: #{forward.1} parent=0 // pred_check_branch
    %3201 = sbr.rel (0) target = $region145
  $region144: #{forward.1} parent=0 // pred_region
    _
  $region145: #{forward.1} parent=0 // pred_fallthru
    _

</llo_original>
